<compile_context>
chip_gen: v6e
topology: v6e:2x2x1
jax: 0.10.0
libtpu: 0.0.40
codegen_flags: <defaults>
</compile_context>

<pallas_src>
import jax
import jax.numpy as jnp
from jax.experimental import pallas as pl
from jax.experimental.pallas import tpu as pltpu

# ----------------------------- model config (scaled-down DistilBERT) --------
VOCAB = 100        # real: 30522
MAX_POS = 16       # real: 512
BERT_HIDDEN = 128  # real: 768
N_HEADS = 4        # real: 12
HEAD_DIM = BERT_HIDDEN // N_HEADS
FFN_DIM = 256      # real: 3072
N_LAYERS = 2       # real: 6
CLS_HIDDEN = 64    # real: 384  (module arg `hidden_size`)
OUT_DIM = 1        # module arg `output_dim`

BATCH = 2
SEQ = 8


# ----------------------------- fused whole-model kernel ----------------------
def _model_kernel(ids_ref, mask_ref, wemb_ref, pemb_ref, elng_ref, elnb_ref,
                  wqkv_ref, bqkv_ref, wo_ref, bo_ref, ln1g_ref, ln1b_ref,
                  w1_ref, b1_ref, w2_ref, b2_ref, ln2g_ref, ln2b_ref,
                  wh_ref, bh_ref, wc_ref, bc_ref, out_ref):
    f32 = jnp.float32
    bf16 = jnp.bfloat16

    S = ids_ref.shape[1]
    vocab, H = wemb_ref.shape
    DH = H // N_HEADS

    def layer_norm(x, g, b):
        mu = jnp.mean(x, axis=-1, keepdims=True)
        var = jnp.mean((x - mu) * (x - mu), axis=-1, keepdims=True)
        return (x - mu) * jax.lax.rsqrt(var + 1e-12) * g + b

    def matmul(x, w, b):
        # bf16 MXU inputs, f32 accumulate, f32 bias add.
        return jnp.dot(x.astype(bf16), w, preferred_element_type=f32) + b

    # ---- embeddings: one-hot gather on the MXU (stays in VMEM) ----
    ids = ids_ref[0]                                              # (S, 1) int32
    lane_iota = jax.lax.broadcasted_iota(jnp.int32, (S, vocab), 1)
    onehot = jnp.where(lane_iota == ids, 1.0, 0.0).astype(bf16)   # (S, VOCAB)
    x = jnp.dot(onehot, wemb_ref[...], preferred_element_type=f32)  # (S, H)
    x = x + pemb_ref[0:S, :]
    x = layer_norm(x, elng_ref[...], elnb_ref[...])

    # additive attention-mask bias for this batch element: (1, S)
    bias = (1.0 - mask_ref[0]) * -1e9
    scale = 1.0 / (float(DH) ** 0.5)

    # ---- transformer layers (statically unrolled) ----
    for l in range(N_LAYERS):
        # fused QKV projection: (S, 3H)
        qkv = matmul(x, wqkv_ref[l], bqkv_ref[l])

        ctx_heads = []
        for h in range(N_HEADS):                      # static lane slices, no HBM
            q = qkv[:, h * DH:(h + 1) * DH]
            k = qkv[:, H + h * DH:H + (h + 1) * DH]
            v = qkv[:, 2 * H + h * DH:2 * H + (h + 1) * DH]
            s = jnp.dot(q, k.T, preferred_element_type=f32) * scale + bias
            m = jnp.max(s, axis=-1, keepdims=True)
            p = jnp.exp(s - m)
            p = p * pl.reciprocal(jnp.sum(p, axis=-1, keepdims=True), approx=True)
            ctx_heads.append(jnp.dot(p, v, preferred_element_type=f32))
        ctx = jnp.concatenate(ctx_heads, axis=-1)     # (S, H), lane-dense

        attn_out = matmul(ctx, wo_ref[l], bo_ref[l])
        x = layer_norm(x + attn_out, ln1g_ref[l], ln1b_ref[l])

        hdn = matmul(x, w1_ref[l], b1_ref[l])
        # TODO(synk): HF DistilBERT uses exact (erf) GELU; tanh approximation used here.
        c = 0.7978845608028654
        hdn = 0.5 * hdn * (1.0 + jnp.tanh(c * (hdn + 0.044715 * hdn * hdn * hdn)))
        ff = matmul(hdn, w2_ref[l], b2_ref[l])
        x = layer_norm(x + ff, ln2g_ref[l], ln2b_ref[l])

    # ---- classification head on the CLS token (seq position 0) ----
    cls = x[0:1, :]                                               # (1, H)
    hid = jnp.maximum(matmul(cls, wh_ref[...], bh_ref[...]), 0.0)
    # TODO(synk): nn.Dropout(0.2) omitted -- inference-mode identity.
    logit = matmul(hid, wc_ref[...], bc_ref[...])                 # (1, OUT_DIM)
    out_ref[0] = 1.0 / (1.0 + jnp.exp(-logit))


# ----------------------------- parameters ------------------------------------
def init_params(key):
    keys = iter(jax.random.split(key, 16))

    def dense(shape, dtype=jnp.bfloat16):
        return (jax.random.normal(next(keys), shape, jnp.float32) * 0.02).astype(dtype)

    H, F, L = BERT_HIDDEN, FFN_DIM, N_LAYERS
    return {
        "word_emb": dense((VOCAB, H)),                         # bf16 MXU input
        "pos_emb": dense((MAX_POS, H), jnp.float32),
        "emb_ln_g": jnp.ones((1, H), jnp.float32),
        "emb_ln_b": jnp.zeros((1, H), jnp.float32),
        # per-layer weights stacked on a leading layer axis
        "wqkv": dense((L, H, 3 * H)),
        "bqkv": jnp.zeros((L, 1, 3 * H), jnp.float32),
        "wo": dense((L, H, H)),
        "bo": jnp.zeros((L, 1, H), jnp.float32),
        "ln1_g": jnp.ones((L, 1, H), jnp.float32),
        "ln1_b": jnp.zeros((L, 1, H), jnp.float32),
        "w1": dense((L, H, F)),
        "b1": jnp.zeros((L, 1, F), jnp.float32),
        "w2": dense((L, F, H)),
        "b2": jnp.zeros((L, 1, H), jnp.float32),
        "ln2_g": jnp.ones((L, 1, H), jnp.float32),
        "ln2_b": jnp.zeros((L, 1, H), jnp.float32),
        # classification head (Linear(768,384) -> Linear(384,1) in the real model)
        "w_hidden": dense((H, CLS_HIDDEN)),
        "b_hidden": jnp.zeros((1, CLS_HIDDEN), jnp.float32),
        "w_cls": dense((CLS_HIDDEN, OUT_DIM)),
        "b_cls": jnp.zeros((1, OUT_DIM), jnp.float32),
    }


# ----------------------------- forward ----------------------------------------
@jax.jit
def bert_classification_forward(params, input_ids, attention_mask):
    B, S = input_ids.shape

    ids3 = input_ids.reshape(B, S, 1).astype(jnp.int32)
    mask3 = attention_mask.reshape(B, 1, S).astype(jnp.float32)

    ordered = [
        ids3, mask3,
        params["word_emb"], params["pos_emb"],
        params["emb_ln_g"], params["emb_ln_b"],
        params["wqkv"], params["bqkv"], params["wo"], params["bo"],
        params["ln1_g"], params["ln1_b"],
        params["w1"], params["b1"], params["w2"], params["b2"],
        params["ln2_g"], params["ln2_b"],
        params["w_hidden"], params["b_hidden"],
        params["w_cls"], params["b_cls"],
    ]

    def _bcast(a):
        nd = a.ndim
        # constant block index -> the pipeline fetches each weight exactly once
        return pl.BlockSpec(a.shape, lambda b, _n=nd: (0,) * _n)

    in_specs = [
        pl.BlockSpec((1, S, 1), lambda b: (b, 0, 0)),   # ids: per-batch block
        pl.BlockSpec((1, 1, S), lambda b: (b, 0, 0)),   # mask: per-batch block
    ] + [_bcast(a) for a in ordered[2:]]

    out = pl.pallas_call(
        _model_kernel,
        out_shape=jax.ShapeDtypeStruct((B, 1, OUT_DIM), jnp.float32),
        grid=(B,),
        in_specs=in_specs,
        out_specs=pl.BlockSpec((1, 1, OUT_DIM), lambda b: (b, 0, 0)),
        compiler_params=pltpu.CompilerParams(
            dimension_semantics=("parallel",),      # v7x: one batch per TensorCore
            vmem_limit_bytes=64 * 1024 * 1024,
        ),
    )(*ordered)
    return out.reshape(-1)  # .flatten()


# ----------------------------- main -------------------------------------------
if __name__ == "__main__":
    root = jax.random.PRNGKey(0)
    k_params, k_ids = jax.random.split(root)

    params = init_params(k_params)
    input_ids = jax.random.randint(k_ids, (BATCH, SEQ), 0, VOCAB, dtype=jnp.int32)
    attention_mask = jnp.ones((BATCH, SEQ), dtype=jnp.int32).at[1, -2:].set(0)

    out = bert_classification_forward(params, input_ids, attention_mask)
    out = jax.block_until_ready(out)

    assert out.shape == (BATCH,), out.shape
    assert bool(jnp.all(jnp.isfinite(out)))
    assert bool(jnp.all((out >= 0.0) & (out <= 1.0)))
    print("KERNEL_OK")
</pallas_src>

<mosaic_0001>
module attributes {stable_mosaic.version = 11 : i64} {
  func.func @_model_kernel(%arg0: i32, %arg1: memref<1x8x1xi32, #tpu.memory_space<vmem>>, %arg2: memref<1x1x8xf32, #tpu.memory_space<vmem>>, %arg3: memref<100x128xbf16, #tpu.memory_space<vmem>>, %arg4: memref<16x128xf32, #tpu.memory_space<vmem>>, %arg5: memref<1x128xf32, #tpu.memory_space<vmem>>, %arg6: memref<1x128xf32, #tpu.memory_space<vmem>>, %arg7: memref<2x128x384xbf16, #tpu.memory_space<vmem>>, %arg8: memref<2x1x384xf32, #tpu.memory_space<vmem>>, %arg9: memref<2x128x128xbf16, #tpu.memory_space<vmem>>, %arg10: memref<2x1x128xf32, #tpu.memory_space<vmem>>, %arg11: memref<2x1x128xf32, #tpu.memory_space<vmem>>, %arg12: memref<2x1x128xf32, #tpu.memory_space<vmem>>, %arg13: memref<2x128x256xbf16, #tpu.memory_space<vmem>>, %arg14: memref<2x1x256xf32, #tpu.memory_space<vmem>>, %arg15: memref<2x256x128xbf16, #tpu.memory_space<vmem>>, %arg16: memref<2x1x128xf32, #tpu.memory_space<vmem>>, %arg17: memref<2x1x128xf32, #tpu.memory_space<vmem>>, %arg18: memref<2x1x128xf32, #tpu.memory_space<vmem>>, %arg19: memref<128x64xbf16, #tpu.memory_space<vmem>>, %arg20: memref<1x64xf32, #tpu.memory_space<vmem>>, %arg21: memref<64x1xbf16, #tpu.memory_space<vmem>>, %arg22: memref<1x1xf32, #tpu.memory_space<vmem>>, %arg23: memref<1x1x1xf32, #tpu.memory_space<vmem>>) attributes {dimension_semantics = [#tpu.dimension_semantics<parallel>], iteration_bounds = array<i64: 2>, scalar_prefetch = 0 : i64, scratch_operands = 0 : i64, tpu.core_type = #tpu.core_type<tc>, window_params = [{transform_indices = @transform_0, window_bounds = array<i64: 1, 8, 1>}, {transform_indices = @transform_1, window_bounds = array<i64: 1, 1, 8>}, {pipeline_mode = #tpu.pipeline_mode<synchronous>, transform_indices = @transform_2, window_bounds = array<i64: 100, 128>}, {pipeline_mode = #tpu.pipeline_mode<synchronous>, transform_indices = @transform_3, window_bounds = array<i64: 16, 128>}, {pipeline_mode = #tpu.pipeline_mode<synchronous>, transform_indices = @transform_4, window_bounds = array<i64: 1, 128>}, {pipeline_mode = #tpu.pipeline_mode<synchronous>, transform_indices = @transform_5, window_bounds = array<i64: 1, 128>}, {pipeline_mode = #tpu.pipeline_mode<synchronous>, transform_indices = @transform_6, window_bounds = array<i64: 2, 128, 384>}, {pipeline_mode = #tpu.pipeline_mode<synchronous>, transform_indices = @transform_7, window_bounds = array<i64: 2, 1, 384>}, {pipeline_mode = #tpu.pipeline_mode<synchronous>, transform_indices = @transform_8, window_bounds = array<i64: 2, 128, 128>}, {pipeline_mode = #tpu.pipeline_mode<synchronous>, transform_indices = @transform_9, window_bounds = array<i64: 2, 1, 128>}, {pipeline_mode = #tpu.pipeline_mode<synchronous>, transform_indices = @transform_10, window_bounds = array<i64: 2, 1, 128>}, {pipeline_mode = #tpu.pipeline_mode<synchronous>, transform_indices = @transform_11, window_bounds = array<i64: 2, 1, 128>}, {pipeline_mode = #tpu.pipeline_mode<synchronous>, transform_indices = @transform_12, window_bounds = array<i64: 2, 128, 256>}, {pipeline_mode = #tpu.pipeline_mode<synchronous>, transform_indices = @transform_13, window_bounds = array<i64: 2, 1, 256>}, {pipeline_mode = #tpu.pipeline_mode<synchronous>, transform_indices = @transform_14, window_bounds = array<i64: 2, 256, 128>}, {pipeline_mode = #tpu.pipeline_mode<synchronous>, transform_indices = @transform_15, window_bounds = array<i64: 2, 1, 128>}, {pipeline_mode = #tpu.pipeline_mode<synchronous>, transform_indices = @transform_16, window_bounds = array<i64: 2, 1, 128>}, {pipeline_mode = #tpu.pipeline_mode<synchronous>, transform_indices = @transform_17, window_bounds = array<i64: 2, 1, 128>}, {pipeline_mode = #tpu.pipeline_mode<synchronous>, transform_indices = @transform_18, window_bounds = array<i64: 128, 64>}, {pipeline_mode = #tpu.pipeline_mode<synchronous>, transform_indices = @transform_19, window_bounds = array<i64: 1, 64>}, {pipeline_mode = #tpu.pipeline_mode<synchronous>, transform_indices = @transform_20, window_bounds = array<i64: 64, 1>}, {pipeline_mode = #tpu.pipeline_mode<synchronous>, transform_indices = @transform_21, window_bounds = array<i64: 1, 1>}, {transform_indices = @transform_22, window_bounds = array<i64: 1, 1, 1>}]} {
    %c0 = arith.constant 0 : index
    %c0_0 = arith.constant 0 : index
    %c0_1 = arith.constant 0 : index
    %0 = vector.load %arg1[%c0, %c0_0, %c0_1] : memref<1x8x1xi32, #tpu.memory_space<vmem>>, vector<1x8x1xi32>
    %1 = vector.shape_cast %0 : vector<1x8x1xi32> to vector<8x1xi32>
    %2 = tpu.iota {dimensions = array<i32: 1>} : vector<8x100xi32>
    %3 = vector.broadcast %1 : vector<8x1xi32> to vector<8x100xi32>
    %4 = arith.cmpi eq, %2, %3 : vector<8x100xi32>
    %cst = arith.constant 1.000000e+00 : f32
    %cst_2 = arith.constant 0.000000e+00 : f32
    %5 = vector.broadcast %cst : f32 to vector<8x100xf32>
    %6 = vector.broadcast %cst_2 : f32 to vector<8x100xf32>
    %7 = arith.select %4, %5, %6 : vector<8x100xi1>, vector<8x100xf32>
    %8 = arith.truncf %7 : vector<8x100xf32> to vector<8x100xbf16>
    %c0_3 = arith.constant 0 : index
    %c0_4 = arith.constant 0 : index
    %9 = vector.load %arg3[%c0_3, %c0_4] : memref<100x128xbf16, #tpu.memory_space<vmem>>, vector<100x128xbf16>
    %cst_5 = arith.constant dense<0.000000e+00> : vector<8x128xf32>
    %10 = tpu.matmul %8, %9, %cst_5 {dimension_numbers = #tpu.dot_dimension_numbers<[1], [0], [0], [1], [0, 0, 1, 1], [], []>} : vector<8x100xbf16>, vector<100x128xbf16>, vector<8x128xf32> -> vector<8x128xf32>
    %c0_6 = arith.constant 0 : index
    %c0_7 = arith.constant 0 : index
    %11 = vector.load %arg4[%c0_6, %c0_7] : memref<16x128xf32, #tpu.memory_space<vmem>>, vector<8x128xf32>
    %12 = arith.addf %10, %11 : vector<8x128xf32>
    %c0_8 = arith.constant 0 : index
    %c0_9 = arith.constant 0 : index
    %13 = vector.load %arg5[%c0_8, %c0_9] : memref<1x128xf32, #tpu.memory_space<vmem>>, vector<1x128xf32>
    %c0_10 = arith.constant 0 : index
    %c0_11 = arith.constant 0 : index
    %14 = vector.load %arg6[%c0_10, %c0_11] : memref<1x128xf32, #tpu.memory_space<vmem>>, vector<1x128xf32>
    %cst_12 = arith.constant dense<0.000000e+00> : vector<8xf32>
    %15 = vector.multi_reduction <add>, %12, %cst_12 [1] : vector<8x128xf32> to vector<8xf32>
    %16 = vector.shape_cast %15 : vector<8xf32> to vector<8x1xf32>
    %cst_13 = arith.constant 1.280000e+02 : f32
    %17 = vector.broadcast %cst_13 : f32 to vector<8x1xf32>
    %18 = arith.divf %16, %17 : vector<8x1xf32>
    %19 = vector.broadcast %18 : vector<8x1xf32> to vector<8x128xf32>
    %20 = arith.subf %12, %19 : vector<8x128xf32>
    %21 = vector.broadcast %18 : vector<8x1xf32> to vector<8x128xf32>
    %22 = arith.subf %12, %21 : vector<8x128xf32>
    %23 = arith.mulf %20, %22 : vector<8x128xf32>
    %cst_14 = arith.constant dense<0.000000e+00> : vector<8xf32>
    %24 = vector.multi_reduction <add>, %23, %cst_14 [1] : vector<8x128xf32> to vector<8xf32>
    %25 = vector.shape_cast %24 : vector<8xf32> to vector<8x1xf32>
    %cst_15 = arith.constant 1.280000e+02 : f32
    %26 = vector.broadcast %cst_15 : f32 to vector<8x1xf32>
    %27 = arith.divf %25, %26 : vector<8x1xf32>
    %28 = vector.broadcast %18 : vector<8x1xf32> to vector<8x128xf32>
    %29 = arith.subf %12, %28 : vector<8x128xf32>
    %cst_16 = arith.constant 9.99999996E-13 : f32
    %30 = vector.broadcast %cst_16 : f32 to vector<8x1xf32>
    %31 = arith.addf %27, %30 : vector<8x1xf32>
    %32 = math.rsqrt %31 : vector<8x1xf32>
    %33 = vector.broadcast %32 : vector<8x1xf32> to vector<8x128xf32>
    %34 = arith.mulf %29, %33 : vector<8x128xf32>
    %35 = vector.broadcast %13 : vector<1x128xf32> to vector<8x128xf32>
    %36 = arith.mulf %34, %35 : vector<8x128xf32>
    %37 = vector.broadcast %14 : vector<1x128xf32> to vector<8x128xf32>
    %38 = arith.addf %36, %37 : vector<8x128xf32>
    %c0_17 = arith.constant 0 : index
    %c0_18 = arith.constant 0 : index
    %c0_19 = arith.constant 0 : index
    %39 = vector.load %arg2[%c0_17, %c0_18, %c0_19] : memref<1x1x8xf32, #tpu.memory_space<vmem>>, vector<1x1x8xf32>
    %40 = vector.shape_cast %39 : vector<1x1x8xf32> to vector<1x8xf32>
    %cst_20 = arith.constant 1.000000e+00 : f32
    %41 = vector.broadcast %cst_20 : f32 to vector<1x8xf32>
    %42 = arith.subf %41, %40 : vector<1x8xf32>
    %cst_21 = arith.constant -1.000000e+09 : f32
    %43 = vector.broadcast %cst_21 : f32 to vector<1x8xf32>
    %44 = arith.mulf %42, %43 : vector<1x8xf32>
    %c0_22 = arith.constant 0 : index
    %c0_23 = arith.constant 0 : index
    %c0_24 = arith.constant 0 : index
    %45 = vector.load %arg7[%c0_22, %c0_23, %c0_24] : memref<2x128x384xbf16, #tpu.memory_space<vmem>>, vector<1x128x384xbf16>
    %46 = vector.shape_cast %45 : vector<1x128x384xbf16> to vector<128x384xbf16>
    %c0_25 = arith.constant 0 : index
    %c0_26 = arith.constant 0 : index
    %c0_27 = arith.constant 0 : index
    %47 = vector.load %arg8[%c0_25, %c0_26, %c0_27] : memref<2x1x384xf32, #tpu.memory_space<vmem>>, vector<1x1x384xf32>
    %48 = vector.shape_cast %47 : vector<1x1x384xf32> to vector<1x384xf32>
    %49 = arith.truncf %38 : vector<8x128xf32> to vector<8x128xbf16>
    %cst_28 = arith.constant dense<0.000000e+00> : vector<8x384xf32>
    %50 = tpu.matmul %49, %46, %cst_28 {dimension_numbers = #tpu.dot_dimension_numbers<[1], [0], [0], [1], [0, 0, 1, 1], [], []>} : vector<8x128xbf16>, vector<128x384xbf16>, vector<8x384xf32> -> vector<8x384xf32>
    %51 = vector.broadcast %48 : vector<1x384xf32> to vector<8x384xf32>
    %52 = arith.addf %50, %51 : vector<8x384xf32>
    %53 = vector.extract_strided_slice %52 {offsets = [0, 0], sizes = [8, 32], strides = [1, 1]} : vector<8x384xf32> to vector<8x32xf32>
    %54 = vector.extract_strided_slice %52 {offsets = [0, 128], sizes = [8, 32], strides = [1, 1]} : vector<8x384xf32> to vector<8x32xf32>
    %55 = vector.extract_strided_slice %52 {offsets = [0, 256], sizes = [8, 32], strides = [1, 1]} : vector<8x384xf32> to vector<8x32xf32>
    %56 = tpu.transpose %54, [1, 0] : vector<8x32xf32> -> vector<32x8xf32>
    %cst_29 = arith.constant dense<0.000000e+00> : vector<8x8xf32>
    %57 = tpu.matmul %53, %56, %cst_29 {dimension_numbers = #tpu.dot_dimension_numbers<[1], [0], [0], [1], [0, 0, 1, 1], [], []>} : vector<8x32xf32>, vector<32x8xf32>, vector<8x8xf32> -> vector<8x8xf32>
    %cst_30 = arith.constant 0.176776692 : f32
    %58 = vector.broadcast %cst_30 : f32 to vector<8x8xf32>
    %59 = arith.mulf %57, %58 : vector<8x8xf32>
    %60 = vector.broadcast %44 : vector<1x8xf32> to vector<8x8xf32>
    %61 = arith.addf %59, %60 : vector<8x8xf32>
    %cst_31 = arith.constant dense<0xFF800000> : vector<8xf32>
    %62 = vector.multi_reduction <maximumf>, %61, %cst_31 [1] : vector<8x8xf32> to vector<8xf32>
    %63 = vector.shape_cast %62 : vector<8xf32> to vector<8x1xf32>
    %64 = vector.broadcast %63 : vector<8x1xf32> to vector<8x8xf32>
    %65 = arith.subf %61, %64 : vector<8x8xf32>
    %66 = math.exp %65 : vector<8x8xf32>
    %cst_32 = arith.constant dense<0.000000e+00> : vector<8xf32>
    %67 = vector.multi_reduction <add>, %66, %cst_32 [1] : vector<8x8xf32> to vector<8xf32>
    %68 = vector.shape_cast %67 : vector<8xf32> to vector<8x1xf32>
    %69 = tpu.reciprocal %68 {approx = true} : vector<8x1xf32> -> vector<8x1xf32>
    %70 = vector.broadcast %69 : vector<8x1xf32> to vector<8x8xf32>
    %71 = arith.mulf %66, %70 : vector<8x8xf32>
    %cst_33 = arith.constant dense<0.000000e+00> : vector<8x32xf32>
    %72 = tpu.matmul %71, %55, %cst_33 {dimension_numbers = #tpu.dot_dimension_numbers<[1], [0], [0], [1], [0, 0, 1, 1], [], []>} : vector<8x8xf32>, vector<8x32xf32>, vector<8x32xf32> -> vector<8x32xf32>
    %73 = vector.extract_strided_slice %52 {offsets = [0, 32], sizes = [8, 32], strides = [1, 1]} : vector<8x384xf32> to vector<8x32xf32>
    %74 = vector.extract_strided_slice %52 {offsets = [0, 160], sizes = [8, 32], strides = [1, 1]} : vector<8x384xf32> to vector<8x32xf32>
    %75 = vector.extract_strided_slice %52 {offsets = [0, 288], sizes = [8, 32], strides = [1, 1]} : vector<8x384xf32> to vector<8x32xf32>
    %76 = tpu.transpose %74, [1, 0] : vector<8x32xf32> -> vector<32x8xf32>
    %cst_34 = arith.constant dense<0.000000e+00> : vector<8x8xf32>
    %77 = tpu.matmul %73, %76, %cst_34 {dimension_numbers = #tpu.dot_dimension_numbers<[1], [0], [0], [1], [0, 0, 1, 1], [], []>} : vector<8x32xf32>, vector<32x8xf32>, vector<8x8xf32> -> vector<8x8xf32>
    %cst_35 = arith.constant 0.176776692 : f32
    %78 = vector.broadcast %cst_35 : f32 to vector<8x8xf32>
    %79 = arith.mulf %77, %78 : vector<8x8xf32>
    %80 = vector.broadcast %44 : vector<1x8xf32> to vector<8x8xf32>
    %81 = arith.addf %79, %80 : vector<8x8xf32>
    %cst_36 = arith.constant dense<0xFF800000> : vector<8xf32>
    %82 = vector.multi_reduction <maximumf>, %81, %cst_36 [1] : vector<8x8xf32> to vector<8xf32>
    %83 = vector.shape_cast %82 : vector<8xf32> to vector<8x1xf32>
    %84 = vector.broadcast %83 : vector<8x1xf32> to vector<8x8xf32>
    %85 = arith.subf %81, %84 : vector<8x8xf32>
    %86 = math.exp %85 : vector<8x8xf32>
    %cst_37 = arith.constant dense<0.000000e+00> : vector<8xf32>
    %87 = vector.multi_reduction <add>, %86, %cst_37 [1] : vector<8x8xf32> to vector<8xf32>
    %88 = vector.shape_cast %87 : vector<8xf32> to vector<8x1xf32>
    %89 = tpu.reciprocal %88 {approx = true} : vector<8x1xf32> -> vector<8x1xf32>
    %90 = vector.broadcast %89 : vector<8x1xf32> to vector<8x8xf32>
    %91 = arith.mulf %86, %90 : vector<8x8xf32>
    %cst_38 = arith.constant dense<0.000000e+00> : vector<8x32xf32>
    %92 = tpu.matmul %91, %75, %cst_38 {dimension_numbers = #tpu.dot_dimension_numbers<[1], [0], [0], [1], [0, 0, 1, 1], [], []>} : vector<8x8xf32>, vector<8x32xf32>, vector<8x32xf32> -> vector<8x32xf32>
    %93 = vector.extract_strided_slice %52 {offsets = [0, 64], sizes = [8, 32], strides = [1, 1]} : vector<8x384xf32> to vector<8x32xf32>
    %94 = vector.extract_strided_slice %52 {offsets = [0, 192], sizes = [8, 32], strides = [1, 1]} : vector<8x384xf32> to vector<8x32xf32>
    %95 = vector.extract_strided_slice %52 {offsets = [0, 320], sizes = [8, 32], strides = [1, 1]} : vector<8x384xf32> to vector<8x32xf32>
    %96 = tpu.transpose %94, [1, 0] : vector<8x32xf32> -> vector<32x8xf32>
    %cst_39 = arith.constant dense<0.000000e+00> : vector<8x8xf32>
    %97 = tpu.matmul %93, %96, %cst_39 {dimension_numbers = #tpu.dot_dimension_numbers<[1], [0], [0], [1], [0, 0, 1, 1], [], []>} : vector<8x32xf32>, vector<32x8xf32>, vector<8x8xf32> -> vector<8x8xf32>
    %cst_40 = arith.constant 0.176776692 : f32
    %98 = vector.broadcast %cst_40 : f32 to vector<8x8xf32>
    %99 = arith.mulf %97, %98 : vector<8x8xf32>
    %100 = vector.broadcast %44 : vector<1x8xf32> to vector<8x8xf32>
    %101 = arith.addf %99, %100 : vector<8x8xf32>
    %cst_41 = arith.constant dense<0xFF800000> : vector<8xf32>
    %102 = vector.multi_reduction <maximumf>, %101, %cst_41 [1] : vector<8x8xf32> to vector<8xf32>
    %103 = vector.shape_cast %102 : vector<8xf32> to vector<8x1xf32>
    %104 = vector.broadcast %103 : vector<8x1xf32> to vector<8x8xf32>
    %105 = arith.subf %101, %104 : vector<8x8xf32>
    %106 = math.exp %105 : vector<8x8xf32>
    %cst_42 = arith.constant dense<0.000000e+00> : vector<8xf32>
    %107 = vector.multi_reduction <add>, %106, %cst_42 [1] : vector<8x8xf32> to vector<8xf32>
    %108 = vector.shape_cast %107 : vector<8xf32> to vector<8x1xf32>
    %109 = tpu.reciprocal %108 {approx = true} : vector<8x1xf32> -> vector<8x1xf32>
    %110 = vector.broadcast %109 : vector<8x1xf32> to vector<8x8xf32>
    %111 = arith.mulf %106, %110 : vector<8x8xf32>
    %cst_43 = arith.constant dense<0.000000e+00> : vector<8x32xf32>
    %112 = tpu.matmul %111, %95, %cst_43 {dimension_numbers = #tpu.dot_dimension_numbers<[1], [0], [0], [1], [0, 0, 1, 1], [], []>} : vector<8x8xf32>, vector<8x32xf32>, vector<8x32xf32> -> vector<8x32xf32>
    %113 = vector.extract_strided_slice %52 {offsets = [0, 96], sizes = [8, 32], strides = [1, 1]} : vector<8x384xf32> to vector<8x32xf32>
    %114 = vector.extract_strided_slice %52 {offsets = [0, 224], sizes = [8, 32], strides = [1, 1]} : vector<8x384xf32> to vector<8x32xf32>
    %115 = vector.extract_strided_slice %52 {offsets = [0, 352], sizes = [8, 32], strides = [1, 1]} : vector<8x384xf32> to vector<8x32xf32>
    %116 = tpu.transpose %114, [1, 0] : vector<8x32xf32> -> vector<32x8xf32>
    %cst_44 = arith.constant dense<0.000000e+00> : vector<8x8xf32>
    %117 = tpu.matmul %113, %116, %cst_44 {dimension_numbers = #tpu.dot_dimension_numbers<[1], [0], [0], [1], [0, 0, 1, 1], [], []>} : vector<8x32xf32>, vector<32x8xf32>, vector<8x8xf32> -> vector<8x8xf32>
    %cst_45 = arith.constant 0.176776692 : f32
    %118 = vector.broadcast %cst_45 : f32 to vector<8x8xf32>
    %119 = arith.mulf %117, %118 : vector<8x8xf32>
    %120 = vector.broadcast %44 : vector<1x8xf32> to vector<8x8xf32>
    %121 = arith.addf %119, %120 : vector<8x8xf32>
    %cst_46 = arith.constant dense<0xFF800000> : vector<8xf32>
    %122 = vector.multi_reduction <maximumf>, %121, %cst_46 [1] : vector<8x8xf32> to vector<8xf32>
    %123 = vector.shape_cast %122 : vector<8xf32> to vector<8x1xf32>
    %124 = vector.broadcast %123 : vector<8x1xf32> to vector<8x8xf32>
    %125 = arith.subf %121, %124 : vector<8x8xf32>
    %126 = math.exp %125 : vector<8x8xf32>
    %cst_47 = arith.constant dense<0.000000e+00> : vector<8xf32>
    %127 = vector.multi_reduction <add>, %126, %cst_47 [1] : vector<8x8xf32> to vector<8xf32>
    %128 = vector.shape_cast %127 : vector<8xf32> to vector<8x1xf32>
    %129 = tpu.reciprocal %128 {approx = true} : vector<8x1xf32> -> vector<8x1xf32>
    %130 = vector.broadcast %129 : vector<8x1xf32> to vector<8x8xf32>
    %131 = arith.mulf %126, %130 : vector<8x8xf32>
    %cst_48 = arith.constant dense<0.000000e+00> : vector<8x32xf32>
    %132 = tpu.matmul %131, %115, %cst_48 {dimension_numbers = #tpu.dot_dimension_numbers<[1], [0], [0], [1], [0, 0, 1, 1], [], []>} : vector<8x8xf32>, vector<8x32xf32>, vector<8x32xf32> -> vector<8x32xf32>
    %133 = tpu.concatenate %72, %92, %112, %132 in 1 : vector<8x32xf32>, vector<8x32xf32>, vector<8x32xf32>, vector<8x32xf32> -> vector<8x128xf32>
    %c0_49 = arith.constant 0 : index
    %c0_50 = arith.constant 0 : index
    %c0_51 = arith.constant 0 : index
    %134 = vector.load %arg9[%c0_49, %c0_50, %c0_51] : memref<2x128x128xbf16, #tpu.memory_space<vmem>>, vector<1x128x128xbf16>
    %135 = vector.shape_cast %134 : vector<1x128x128xbf16> to vector<128x128xbf16>
    %c0_52 = arith.constant 0 : index
    %c0_53 = arith.constant 0 : index
    %c0_54 = arith.constant 0 : index
    %136 = vector.load %arg10[%c0_52, %c0_53, %c0_54] : memref<2x1x128xf32, #tpu.memory_space<vmem>>, vector<1x1x128xf32>
    %137 = vector.shape_cast %136 : vector<1x1x128xf32> to vector<1x128xf32>
    %138 = arith.truncf %133 : vector<8x128xf32> to vector<8x128xbf16>
    %cst_55 = arith.constant dense<0.000000e+00> : vector<8x128xf32>
    %139 = tpu.matmul %138, %135, %cst_55 {dimension_numbers = #tpu.dot_dimension_numbers<[1], [0], [0], [1], [0, 0, 1, 1], [], []>} : vector<8x128xbf16>, vector<128x128xbf16>, vector<8x128xf32> -> vector<8x128xf32>
    %140 = vector.broadcast %137 : vector<1x128xf32> to vector<8x128xf32>
    %141 = arith.addf %139, %140 : vector<8x128xf32>
    %142 = arith.addf %38, %141 : vector<8x128xf32>
    %c0_56 = arith.constant 0 : index
    %c0_57 = arith.constant 0 : index
    %c0_58 = arith.constant 0 : index
    %143 = vector.load %arg11[%c0_56, %c0_57, %c0_58] : memref<2x1x128xf32, #tpu.memory_space<vmem>>, vector<1x1x128xf32>
    %144 = vector.shape_cast %143 : vector<1x1x128xf32> to vector<1x128xf32>
    %c0_59 = arith.constant 0 : index
    %c0_60 = arith.constant 0 : index
    %c0_61 = arith.constant 0 : index
    %145 = vector.load %arg12[%c0_59, %c0_60, %c0_61] : memref<2x1x128xf32, #tpu.memory_space<vmem>>, vector<1x1x128xf32>
    %146 = vector.shape_cast %145 : vector<1x1x128xf32> to vector<1x128xf32>
    %cst_62 = arith.constant dense<0.000000e+00> : vector<8xf32>
    %147 = vector.multi_reduction <add>, %142, %cst_62 [1] : vector<8x128xf32> to vector<8xf32>
    %148 = vector.shape_cast %147 : vector<8xf32> to vector<8x1xf32>
    %cst_63 = arith.constant 1.280000e+02 : f32
    %149 = vector.broadcast %cst_63 : f32 to vector<8x1xf32>
    %150 = arith.divf %148, %149 : vector<8x1xf32>
    %151 = vector.broadcast %150 : vector<8x1xf32> to vector<8x128xf32>
    %152 = arith.subf %142, %151 : vector<8x128xf32>
    %153 = vector.broadcast %150 : vector<8x1xf32> to vector<8x128xf32>
    %154 = arith.subf %142, %153 : vector<8x128xf32>
    %155 = arith.mulf %152, %154 : vector<8x128xf32>
    %cst_64 = arith.constant dense<0.000000e+00> : vector<8xf32>
    %156 = vector.multi_reduction <add>, %155, %cst_64 [1] : vector<8x128xf32> to vector<8xf32>
    %157 = vector.shape_cast %156 : vector<8xf32> to vector<8x1xf32>
    %cst_65 = arith.constant 1.280000e+02 : f32
    %158 = vector.broadcast %cst_65 : f32 to vector<8x1xf32>
    %159 = arith.divf %157, %158 : vector<8x1xf32>
    %160 = vector.broadcast %150 : vector<8x1xf32> to vector<8x128xf32>
    %161 = arith.subf %142, %160 : vector<8x128xf32>
    %cst_66 = arith.constant 9.99999996E-13 : f32
    %162 = vector.broadcast %cst_66 : f32 to vector<8x1xf32>
    %163 = arith.addf %159, %162 : vector<8x1xf32>
    %164 = math.rsqrt %163 : vector<8x1xf32>
    %165 = vector.broadcast %164 : vector<8x1xf32> to vector<8x128xf32>
    %166 = arith.mulf %161, %165 : vector<8x128xf32>
    %167 = vector.broadcast %144 : vector<1x128xf32> to vector<8x128xf32>
    %168 = arith.mulf %166, %167 : vector<8x128xf32>
    %169 = vector.broadcast %146 : vector<1x128xf32> to vector<8x128xf32>
    %170 = arith.addf %168, %169 : vector<8x128xf32>
    %c0_67 = arith.constant 0 : index
    %c0_68 = arith.constant 0 : index
    %c0_69 = arith.constant 0 : index
    %171 = vector.load %arg13[%c0_67, %c0_68, %c0_69] : memref<2x128x256xbf16, #tpu.memory_space<vmem>>, vector<1x128x256xbf16>
    %172 = vector.shape_cast %171 : vector<1x128x256xbf16> to vector<128x256xbf16>
    %c0_70 = arith.constant 0 : index
    %c0_71 = arith.constant 0 : index
    %c0_72 = arith.constant 0 : index
    %173 = vector.load %arg14[%c0_70, %c0_71, %c0_72] : memref<2x1x256xf32, #tpu.memory_space<vmem>>, vector<1x1x256xf32>
    %174 = vector.shape_cast %173 : vector<1x1x256xf32> to vector<1x256xf32>
    %175 = arith.truncf %170 : vector<8x128xf32> to vector<8x128xbf16>
    %cst_73 = arith.constant dense<0.000000e+00> : vector<8x256xf32>
    %176 = tpu.matmul %175, %172, %cst_73 {dimension_numbers = #tpu.dot_dimension_numbers<[1], [0], [0], [1], [0, 0, 1, 1], [], []>} : vector<8x128xbf16>, vector<128x256xbf16>, vector<8x256xf32> -> vector<8x256xf32>
    %177 = vector.broadcast %174 : vector<1x256xf32> to vector<8x256xf32>
    %178 = arith.addf %176, %177 : vector<8x256xf32>
    %cst_74 = arith.constant 5.000000e-01 : f32
    %179 = vector.broadcast %cst_74 : f32 to vector<8x256xf32>
    %180 = arith.mulf %179, %178 : vector<8x256xf32>
    %cst_75 = arith.constant 4.471500e-02 : f32
    %181 = vector.broadcast %cst_75 : f32 to vector<8x256xf32>
    %182 = arith.mulf %181, %178 : vector<8x256xf32>
    %183 = arith.mulf %182, %178 : vector<8x256xf32>
    %184 = arith.mulf %183, %178 : vector<8x256xf32>
    %185 = arith.addf %178, %184 : vector<8x256xf32>
    %cst_76 = arith.constant 0.797884583 : f32
    %186 = vector.broadcast %cst_76 : f32 to vector<8x256xf32>
    %187 = arith.mulf %186, %185 : vector<8x256xf32>
    %188 = math.tanh %187 : vector<8x256xf32>
    %cst_77 = arith.constant 1.000000e+00 : f32
    %189 = vector.broadcast %cst_77 : f32 to vector<8x256xf32>
    %190 = arith.addf %189, %188 : vector<8x256xf32>
    %191 = arith.mulf %180, %190 : vector<8x256xf32>
    %c0_78 = arith.constant 0 : index
    %c0_79 = arith.constant 0 : index
    %c0_80 = arith.constant 0 : index
    %192 = vector.load %arg15[%c0_78, %c0_79, %c0_80] : memref<2x256x128xbf16, #tpu.memory_space<vmem>>, vector<1x256x128xbf16>
    %193 = vector.shape_cast %192 : vector<1x256x128xbf16> to vector<256x128xbf16>
    %c0_81 = arith.constant 0 : index
    %c0_82 = arith.constant 0 : index
    %c0_83 = arith.constant 0 : index
    %194 = vector.load %arg16[%c0_81, %c0_82, %c0_83] : memref<2x1x128xf32, #tpu.memory_space<vmem>>, vector<1x1x128xf32>
    %195 = vector.shape_cast %194 : vector<1x1x128xf32> to vector<1x128xf32>
    %196 = arith.truncf %191 : vector<8x256xf32> to vector<8x256xbf16>
    %cst_84 = arith.constant dense<0.000000e+00> : vector<8x128xf32>
    %197 = tpu.matmul %196, %193, %cst_84 {dimension_numbers = #tpu.dot_dimension_numbers<[1], [0], [0], [1], [0, 0, 1, 1], [], []>} : vector<8x256xbf16>, vector<256x128xbf16>, vector<8x128xf32> -> vector<8x128xf32>
    %198 = vector.broadcast %195 : vector<1x128xf32> to vector<8x128xf32>
    %199 = arith.addf %197, %198 : vector<8x128xf32>
    %200 = arith.addf %170, %199 : vector<8x128xf32>
    %c0_85 = arith.constant 0 : index
    %c0_86 = arith.constant 0 : index
    %c0_87 = arith.constant 0 : index
    %201 = vector.load %arg17[%c0_85, %c0_86, %c0_87] : memref<2x1x128xf32, #tpu.memory_space<vmem>>, vector<1x1x128xf32>
    %202 = vector.shape_cast %201 : vector<1x1x128xf32> to vector<1x128xf32>
    %c0_88 = arith.constant 0 : index
    %c0_89 = arith.constant 0 : index
    %c0_90 = arith.constant 0 : index
    %203 = vector.load %arg18[%c0_88, %c0_89, %c0_90] : memref<2x1x128xf32, #tpu.memory_space<vmem>>, vector<1x1x128xf32>
    %204 = vector.shape_cast %203 : vector<1x1x128xf32> to vector<1x128xf32>
    %cst_91 = arith.constant dense<0.000000e+00> : vector<8xf32>
    %205 = vector.multi_reduction <add>, %200, %cst_91 [1] : vector<8x128xf32> to vector<8xf32>
    %206 = vector.shape_cast %205 : vector<8xf32> to vector<8x1xf32>
    %cst_92 = arith.constant 1.280000e+02 : f32
    %207 = vector.broadcast %cst_92 : f32 to vector<8x1xf32>
    %208 = arith.divf %206, %207 : vector<8x1xf32>
    %209 = vector.broadcast %208 : vector<8x1xf32> to vector<8x128xf32>
    %210 = arith.subf %200, %209 : vector<8x128xf32>
    %211 = vector.broadcast %208 : vector<8x1xf32> to vector<8x128xf32>
    %212 = arith.subf %200, %211 : vector<8x128xf32>
    %213 = arith.mulf %210, %212 : vector<8x128xf32>
    %cst_93 = arith.constant dense<0.000000e+00> : vector<8xf32>
    %214 = vector.multi_reduction <add>, %213, %cst_93 [1] : vector<8x128xf32> to vector<8xf32>
    %215 = vector.shape_cast %214 : vector<8xf32> to vector<8x1xf32>
    %cst_94 = arith.constant 1.280000e+02 : f32
    %216 = vector.broadcast %cst_94 : f32 to vector<8x1xf32>
    %217 = arith.divf %215, %216 : vector<8x1xf32>
    %218 = vector.broadcast %208 : vector<8x1xf32> to vector<8x128xf32>
    %219 = arith.subf %200, %218 : vector<8x128xf32>
    %cst_95 = arith.constant 9.99999996E-13 : f32
    %220 = vector.broadcast %cst_95 : f32 to vector<8x1xf32>
    %221 = arith.addf %217, %220 : vector<8x1xf32>
    %222 = math.rsqrt %221 : vector<8x1xf32>
    %223 = vector.broadcast %222 : vector<8x1xf32> to vector<8x128xf32>
    %224 = arith.mulf %219, %223 : vector<8x128xf32>
    %225 = vector.broadcast %202 : vector<1x128xf32> to vector<8x128xf32>
    %226 = arith.mulf %224, %225 : vector<8x128xf32>
    %227 = vector.broadcast %204 : vector<1x128xf32> to vector<8x128xf32>
    %228 = arith.addf %226, %227 : vector<8x128xf32>
    %c1 = arith.constant 1 : index
    %c0_96 = arith.constant 0 : index
    %c0_97 = arith.constant 0 : index
    %229 = vector.load %arg7[%c1, %c0_96, %c0_97] : memref<2x128x384xbf16, #tpu.memory_space<vmem>>, vector<1x128x384xbf16>
    %230 = vector.shape_cast %229 : vector<1x128x384xbf16> to vector<128x384xbf16>
    %c1_98 = arith.constant 1 : index
    %c0_99 = arith.constant 0 : index
    %c0_100 = arith.constant 0 : index
    %231 = vector.load %arg8[%c1_98, %c0_99, %c0_100] : memref<2x1x384xf32, #tpu.memory_space<vmem>>, vector<1x1x384xf32>
    %232 = vector.shape_cast %231 : vector<1x1x384xf32> to vector<1x384xf32>
    %233 = arith.truncf %228 : vector<8x128xf32> to vector<8x128xbf16>
    %cst_101 = arith.constant dense<0.000000e+00> : vector<8x384xf32>
    %234 = tpu.matmul %233, %230, %cst_101 {dimension_numbers = #tpu.dot_dimension_numbers<[1], [0], [0], [1], [0, 0, 1, 1], [], []>} : vector<8x128xbf16>, vector<128x384xbf16>, vector<8x384xf32> -> vector<8x384xf32>
    %235 = vector.broadcast %232 : vector<1x384xf32> to vector<8x384xf32>
    %236 = arith.addf %234, %235 : vector<8x384xf32>
    %237 = vector.extract_strided_slice %236 {offsets = [0, 0], sizes = [8, 32], strides = [1, 1]} : vector<8x384xf32> to vector<8x32xf32>
    %238 = vector.extract_strided_slice %236 {offsets = [0, 128], sizes = [8, 32], strides = [1, 1]} : vector<8x384xf32> to vector<8x32xf32>
    %239 = vector.extract_strided_slice %236 {offsets = [0, 256], sizes = [8, 32], strides = [1, 1]} : vector<8x384xf32> to vector<8x32xf32>
    %240 = tpu.transpose %238, [1, 0] : vector<8x32xf32> -> vector<32x8xf32>
    %cst_102 = arith.constant dense<0.000000e+00> : vector<8x8xf32>
    %241 = tpu.matmul %237, %240, %cst_102 {dimension_numbers = #tpu.dot_dimension_numbers<[1], [0], [0], [1], [0, 0, 1, 1], [], []>} : vector<8x32xf32>, vector<32x8xf32>, vector<8x8xf32> -> vector<8x8xf32>
    %cst_103 = arith.constant 0.176776692 : f32
    %242 = vector.broadcast %cst_103 : f32 to vector<8x8xf32>
    %243 = arith.mulf %241, %242 : vector<8x8xf32>
    %244 = vector.broadcast %44 : vector<1x8xf32> to vector<8x8xf32>
    %245 = arith.addf %243, %244 : vector<8x8xf32>
    %cst_104 = arith.constant dense<0xFF800000> : vector<8xf32>
    %246 = vector.multi_reduction <maximumf>, %245, %cst_104 [1] : vector<8x8xf32> to vector<8xf32>
    %247 = vector.shape_cast %246 : vector<8xf32> to vector<8x1xf32>
    %248 = vector.broadcast %247 : vector<8x1xf32> to vector<8x8xf32>
    %249 = arith.subf %245, %248 : vector<8x8xf32>
    %250 = math.exp %249 : vector<8x8xf32>
    %cst_105 = arith.constant dense<0.000000e+00> : vector<8xf32>
    %251 = vector.multi_reduction <add>, %250, %cst_105 [1] : vector<8x8xf32> to vector<8xf32>
    %252 = vector.shape_cast %251 : vector<8xf32> to vector<8x1xf32>
    %253 = tpu.reciprocal %252 {approx = true} : vector<8x1xf32> -> vector<8x1xf32>
    %254 = vector.broadcast %253 : vector<8x1xf32> to vector<8x8xf32>
    %255 = arith.mulf %250, %254 : vector<8x8xf32>
    %cst_106 = arith.constant dense<0.000000e+00> : vector<8x32xf32>
    %256 = tpu.matmul %255, %239, %cst_106 {dimension_numbers = #tpu.dot_dimension_numbers<[1], [0], [0], [1], [0, 0, 1, 1], [], []>} : vector<8x8xf32>, vector<8x32xf32>, vector<8x32xf32> -> vector<8x32xf32>
    %257 = vector.extract_strided_slice %236 {offsets = [0, 32], sizes = [8, 32], strides = [1, 1]} : vector<8x384xf32> to vector<8x32xf32>
    %258 = vector.extract_strided_slice %236 {offsets = [0, 160], sizes = [8, 32], strides = [1, 1]} : vector<8x384xf32> to vector<8x32xf32>
    %259 = vector.extract_strided_slice %236 {offsets = [0, 288], sizes = [8, 32], strides = [1, 1]} : vector<8x384xf32> to vector<8x32xf32>
    %260 = tpu.transpose %258, [1, 0] : vector<8x32xf32> -> vector<32x8xf32>
    %cst_107 = arith.constant dense<0.000000e+00> : vector<8x8xf32>
    %261 = tpu.matmul %257, %260, %cst_107 {dimension_numbers = #tpu.dot_dimension_numbers<[1], [0], [0], [1], [0, 0, 1, 1], [], []>} : vector<8x32xf32>, vector<32x8xf32>, vector<8x8xf32> -> vector<8x8xf32>
    %cst_108 = arith.constant 0.176776692 : f32
    %262 = vector.broadcast %cst_108 : f32 to vector<8x8xf32>
    %263 = arith.mulf %261, %262 : vector<8x8xf32>
    %264 = vector.broadcast %44 : vector<1x8xf32> to vector<8x8xf32>
    %265 = arith.addf %263, %264 : vector<8x8xf32>
    %cst_109 = arith.constant dense<0xFF800000> : vector<8xf32>
    %266 = vector.multi_reduction <maximumf>, %265, %cst_109 [1] : vector<8x8xf32> to vector<8xf32>
    %267 = vector.shape_cast %266 : vector<8xf32> to vector<8x1xf32>
    %268 = vector.broadcast %267 : vector<8x1xf32> to vector<8x8xf32>
    %269 = arith.subf %265, %268 : vector<8x8xf32>
    %270 = math.exp %269 : vector<8x8xf32>
    %cst_110 = arith.constant dense<0.000000e+00> : vector<8xf32>
    %271 = vector.multi_reduction <add>, %270, %cst_110 [1] : vector<8x8xf32> to vector<8xf32>
    %272 = vector.shape_cast %271 : vector<8xf32> to vector<8x1xf32>
    %273 = tpu.reciprocal %272 {approx = true} : vector<8x1xf32> -> vector<8x1xf32>
    %274 = vector.broadcast %273 : vector<8x1xf32> to vector<8x8xf32>
    %275 = arith.mulf %270, %274 : vector<8x8xf32>
    %cst_111 = arith.constant dense<0.000000e+00> : vector<8x32xf32>
    %276 = tpu.matmul %275, %259, %cst_111 {dimension_numbers = #tpu.dot_dimension_numbers<[1], [0], [0], [1], [0, 0, 1, 1], [], []>} : vector<8x8xf32>, vector<8x32xf32>, vector<8x32xf32> -> vector<8x32xf32>
    %277 = vector.extract_strided_slice %236 {offsets = [0, 64], sizes = [8, 32], strides = [1, 1]} : vector<8x384xf32> to vector<8x32xf32>
    %278 = vector.extract_strided_slice %236 {offsets = [0, 192], sizes = [8, 32], strides = [1, 1]} : vector<8x384xf32> to vector<8x32xf32>
    %279 = vector.extract_strided_slice %236 {offsets = [0, 320], sizes = [8, 32], strides = [1, 1]} : vector<8x384xf32> to vector<8x32xf32>
    %280 = tpu.transpose %278, [1, 0] : vector<8x32xf32> -> vector<32x8xf32>
    %cst_112 = arith.constant dense<0.000000e+00> : vector<8x8xf32>
    %281 = tpu.matmul %277, %280, %cst_112 {dimension_numbers = #tpu.dot_dimension_numbers<[1], [0], [0], [1], [0, 0, 1, 1], [], []>} : vector<8x32xf32>, vector<32x8xf32>, vector<8x8xf32> -> vector<8x8xf32>
    %cst_113 = arith.constant 0.176776692 : f32
    %282 = vector.broadcast %cst_113 : f32 to vector<8x8xf32>
    %283 = arith.mulf %281, %282 : vector<8x8xf32>
    %284 = vector.broadcast %44 : vector<1x8xf32> to vector<8x8xf32>
    %285 = arith.addf %283, %284 : vector<8x8xf32>
    %cst_114 = arith.constant dense<0xFF800000> : vector<8xf32>
    %286 = vector.multi_reduction <maximumf>, %285, %cst_114 [1] : vector<8x8xf32> to vector<8xf32>
    %287 = vector.shape_cast %286 : vector<8xf32> to vector<8x1xf32>
    %288 = vector.broadcast %287 : vector<8x1xf32> to vector<8x8xf32>
    %289 = arith.subf %285, %288 : vector<8x8xf32>
    %290 = math.exp %289 : vector<8x8xf32>
    %cst_115 = arith.constant dense<0.000000e+00> : vector<8xf32>
    %291 = vector.multi_reduction <add>, %290, %cst_115 [1] : vector<8x8xf32> to vector<8xf32>
    %292 = vector.shape_cast %291 : vector<8xf32> to vector<8x1xf32>
    %293 = tpu.reciprocal %292 {approx = true} : vector<8x1xf32> -> vector<8x1xf32>
    %294 = vector.broadcast %293 : vector<8x1xf32> to vector<8x8xf32>
    %295 = arith.mulf %290, %294 : vector<8x8xf32>
    %cst_116 = arith.constant dense<0.000000e+00> : vector<8x32xf32>
    %296 = tpu.matmul %295, %279, %cst_116 {dimension_numbers = #tpu.dot_dimension_numbers<[1], [0], [0], [1], [0, 0, 1, 1], [], []>} : vector<8x8xf32>, vector<8x32xf32>, vector<8x32xf32> -> vector<8x32xf32>
    %297 = vector.extract_strided_slice %236 {offsets = [0, 96], sizes = [8, 32], strides = [1, 1]} : vector<8x384xf32> to vector<8x32xf32>
    %298 = vector.extract_strided_slice %236 {offsets = [0, 224], sizes = [8, 32], strides = [1, 1]} : vector<8x384xf32> to vector<8x32xf32>
    %299 = vector.extract_strided_slice %236 {offsets = [0, 352], sizes = [8, 32], strides = [1, 1]} : vector<8x384xf32> to vector<8x32xf32>
    %300 = tpu.transpose %298, [1, 0] : vector<8x32xf32> -> vector<32x8xf32>
    %cst_117 = arith.constant dense<0.000000e+00> : vector<8x8xf32>
    %301 = tpu.matmul %297, %300, %cst_117 {dimension_numbers = #tpu.dot_dimension_numbers<[1], [0], [0], [1], [0, 0, 1, 1], [], []>} : vector<8x32xf32>, vector<32x8xf32>, vector<8x8xf32> -> vector<8x8xf32>
    %cst_118 = arith.constant 0.176776692 : f32
    %302 = vector.broadcast %cst_118 : f32 to vector<8x8xf32>
    %303 = arith.mulf %301, %302 : vector<8x8xf32>
    %304 = vector.broadcast %44 : vector<1x8xf32> to vector<8x8xf32>
    %305 = arith.addf %303, %304 : vector<8x8xf32>
    %cst_119 = arith.constant dense<0xFF800000> : vector<8xf32>
    %306 = vector.multi_reduction <maximumf>, %305, %cst_119 [1] : vector<8x8xf32> to vector<8xf32>
    %307 = vector.shape_cast %306 : vector<8xf32> to vector<8x1xf32>
    %308 = vector.broadcast %307 : vector<8x1xf32> to vector<8x8xf32>
    %309 = arith.subf %305, %308 : vector<8x8xf32>
    %310 = math.exp %309 : vector<8x8xf32>
    %cst_120 = arith.constant dense<0.000000e+00> : vector<8xf32>
    %311 = vector.multi_reduction <add>, %310, %cst_120 [1] : vector<8x8xf32> to vector<8xf32>
    %312 = vector.shape_cast %311 : vector<8xf32> to vector<8x1xf32>
    %313 = tpu.reciprocal %312 {approx = true} : vector<8x1xf32> -> vector<8x1xf32>
    %314 = vector.broadcast %313 : vector<8x1xf32> to vector<8x8xf32>
    %315 = arith.mulf %310, %314 : vector<8x8xf32>
    %cst_121 = arith.constant dense<0.000000e+00> : vector<8x32xf32>
    %316 = tpu.matmul %315, %299, %cst_121 {dimension_numbers = #tpu.dot_dimension_numbers<[1], [0], [0], [1], [0, 0, 1, 1], [], []>} : vector<8x8xf32>, vector<8x32xf32>, vector<8x32xf32> -> vector<8x32xf32>
    %317 = tpu.concatenate %256, %276, %296, %316 in 1 : vector<8x32xf32>, vector<8x32xf32>, vector<8x32xf32>, vector<8x32xf32> -> vector<8x128xf32>
    %c1_122 = arith.constant 1 : index
    %c0_123 = arith.constant 0 : index
    %c0_124 = arith.constant 0 : index
    %318 = vector.load %arg9[%c1_122, %c0_123, %c0_124] : memref<2x128x128xbf16, #tpu.memory_space<vmem>>, vector<1x128x128xbf16>
    %319 = vector.shape_cast %318 : vector<1x128x128xbf16> to vector<128x128xbf16>
    %c1_125 = arith.constant 1 : index
    %c0_126 = arith.constant 0 : index
    %c0_127 = arith.constant 0 : index
    %320 = vector.load %arg10[%c1_125, %c0_126, %c0_127] : memref<2x1x128xf32, #tpu.memory_space<vmem>>, vector<1x1x128xf32>
    %321 = vector.shape_cast %320 : vector<1x1x128xf32> to vector<1x128xf32>
    %322 = arith.truncf %317 : vector<8x128xf32> to vector<8x128xbf16>
    %cst_128 = arith.constant dense<0.000000e+00> : vector<8x128xf32>
    %323 = tpu.matmul %322, %319, %cst_128 {dimension_numbers = #tpu.dot_dimension_numbers<[1], [0], [0], [1], [0, 0, 1, 1], [], []>} : vector<8x128xbf16>, vector<128x128xbf16>, vector<8x128xf32> -> vector<8x128xf32>
    %324 = vector.broadcast %321 : vector<1x128xf32> to vector<8x128xf32>
    %325 = arith.addf %323, %324 : vector<8x128xf32>
    %326 = arith.addf %228, %325 : vector<8x128xf32>
    %c1_129 = arith.constant 1 : index
    %c0_130 = arith.constant 0 : index
    %c0_131 = arith.constant 0 : index
    %327 = vector.load %arg11[%c1_129, %c0_130, %c0_131] : memref<2x1x128xf32, #tpu.memory_space<vmem>>, vector<1x1x128xf32>
    %328 = vector.shape_cast %327 : vector<1x1x128xf32> to vector<1x128xf32>
    %c1_132 = arith.constant 1 : index
    %c0_133 = arith.constant 0 : index
    %c0_134 = arith.constant 0 : index
    %329 = vector.load %arg12[%c1_132, %c0_133, %c0_134] : memref<2x1x128xf32, #tpu.memory_space<vmem>>, vector<1x1x128xf32>
    %330 = vector.shape_cast %329 : vector<1x1x128xf32> to vector<1x128xf32>
    %cst_135 = arith.constant dense<0.000000e+00> : vector<8xf32>
    %331 = vector.multi_reduction <add>, %326, %cst_135 [1] : vector<8x128xf32> to vector<8xf32>
    %332 = vector.shape_cast %331 : vector<8xf32> to vector<8x1xf32>
    %cst_136 = arith.constant 1.280000e+02 : f32
    %333 = vector.broadcast %cst_136 : f32 to vector<8x1xf32>
    %334 = arith.divf %332, %333 : vector<8x1xf32>
    %335 = vector.broadcast %334 : vector<8x1xf32> to vector<8x128xf32>
    %336 = arith.subf %326, %335 : vector<8x128xf32>
    %337 = vector.broadcast %334 : vector<8x1xf32> to vector<8x128xf32>
    %338 = arith.subf %326, %337 : vector<8x128xf32>
    %339 = arith.mulf %336, %338 : vector<8x128xf32>
    %cst_137 = arith.constant dense<0.000000e+00> : vector<8xf32>
    %340 = vector.multi_reduction <add>, %339, %cst_137 [1] : vector<8x128xf32> to vector<8xf32>
    %341 = vector.shape_cast %340 : vector<8xf32> to vector<8x1xf32>
    %cst_138 = arith.constant 1.280000e+02 : f32
    %342 = vector.broadcast %cst_138 : f32 to vector<8x1xf32>
    %343 = arith.divf %341, %342 : vector<8x1xf32>
    %344 = vector.broadcast %334 : vector<8x1xf32> to vector<8x128xf32>
    %345 = arith.subf %326, %344 : vector<8x128xf32>
    %cst_139 = arith.constant 9.99999996E-13 : f32
    %346 = vector.broadcast %cst_139 : f32 to vector<8x1xf32>
    %347 = arith.addf %343, %346 : vector<8x1xf32>
    %348 = math.rsqrt %347 : vector<8x1xf32>
    %349 = vector.broadcast %348 : vector<8x1xf32> to vector<8x128xf32>
    %350 = arith.mulf %345, %349 : vector<8x128xf32>
    %351 = vector.broadcast %328 : vector<1x128xf32> to vector<8x128xf32>
    %352 = arith.mulf %350, %351 : vector<8x128xf32>
    %353 = vector.broadcast %330 : vector<1x128xf32> to vector<8x128xf32>
    %354 = arith.addf %352, %353 : vector<8x128xf32>
    %c1_140 = arith.constant 1 : index
    %c0_141 = arith.constant 0 : index
    %c0_142 = arith.constant 0 : index
    %355 = vector.load %arg13[%c1_140, %c0_141, %c0_142] : memref<2x128x256xbf16, #tpu.memory_space<vmem>>, vector<1x128x256xbf16>
    %356 = vector.shape_cast %355 : vector<1x128x256xbf16> to vector<128x256xbf16>
    %c1_143 = arith.constant 1 : index
    %c0_144 = arith.constant 0 : index
    %c0_145 = arith.constant 0 : index
    %357 = vector.load %arg14[%c1_143, %c0_144, %c0_145] : memref<2x1x256xf32, #tpu.memory_space<vmem>>, vector<1x1x256xf32>
    %358 = vector.shape_cast %357 : vector<1x1x256xf32> to vector<1x256xf32>
    %359 = arith.truncf %354 : vector<8x128xf32> to vector<8x128xbf16>
    %cst_146 = arith.constant dense<0.000000e+00> : vector<8x256xf32>
    %360 = tpu.matmul %359, %356, %cst_146 {dimension_numbers = #tpu.dot_dimension_numbers<[1], [0], [0], [1], [0, 0, 1, 1], [], []>} : vector<8x128xbf16>, vector<128x256xbf16>, vector<8x256xf32> -> vector<8x256xf32>
    %361 = vector.broadcast %358 : vector<1x256xf32> to vector<8x256xf32>
    %362 = arith.addf %360, %361 : vector<8x256xf32>
    %cst_147 = arith.constant 5.000000e-01 : f32
    %363 = vector.broadcast %cst_147 : f32 to vector<8x256xf32>
    %364 = arith.mulf %363, %362 : vector<8x256xf32>
    %cst_148 = arith.constant 4.471500e-02 : f32
    %365 = vector.broadcast %cst_148 : f32 to vector<8x256xf32>
    %366 = arith.mulf %365, %362 : vector<8x256xf32>
    %367 = arith.mulf %366, %362 : vector<8x256xf32>
    %368 = arith.mulf %367, %362 : vector<8x256xf32>
    %369 = arith.addf %362, %368 : vector<8x256xf32>
    %cst_149 = arith.constant 0.797884583 : f32
    %370 = vector.broadcast %cst_149 : f32 to vector<8x256xf32>
    %371 = arith.mulf %370, %369 : vector<8x256xf32>
    %372 = math.tanh %371 : vector<8x256xf32>
    %cst_150 = arith.constant 1.000000e+00 : f32
    %373 = vector.broadcast %cst_150 : f32 to vector<8x256xf32>
    %374 = arith.addf %373, %372 : vector<8x256xf32>
    %375 = arith.mulf %364, %374 : vector<8x256xf32>
    %c1_151 = arith.constant 1 : index
    %c0_152 = arith.constant 0 : index
    %c0_153 = arith.constant 0 : index
    %376 = vector.load %arg15[%c1_151, %c0_152, %c0_153] : memref<2x256x128xbf16, #tpu.memory_space<vmem>>, vector<1x256x128xbf16>
    %377 = vector.shape_cast %376 : vector<1x256x128xbf16> to vector<256x128xbf16>
    %c1_154 = arith.constant 1 : index
    %c0_155 = arith.constant 0 : index
    %c0_156 = arith.constant 0 : index
    %378 = vector.load %arg16[%c1_154, %c0_155, %c0_156] : memref<2x1x128xf32, #tpu.memory_space<vmem>>, vector<1x1x128xf32>
    %379 = vector.shape_cast %378 : vector<1x1x128xf32> to vector<1x128xf32>
    %380 = arith.truncf %375 : vector<8x256xf32> to vector<8x256xbf16>
    %cst_157 = arith.constant dense<0.000000e+00> : vector<8x128xf32>
    %381 = tpu.matmul %380, %377, %cst_157 {dimension_numbers = #tpu.dot_dimension_numbers<[1], [0], [0], [1], [0, 0, 1, 1], [], []>} : vector<8x256xbf16>, vector<256x128xbf16>, vector<8x128xf32> -> vector<8x128xf32>
    %382 = vector.broadcast %379 : vector<1x128xf32> to vector<8x128xf32>
    %383 = arith.addf %381, %382 : vector<8x128xf32>
    %384 = arith.addf %354, %383 : vector<8x128xf32>
    %c1_158 = arith.constant 1 : index
    %c0_159 = arith.constant 0 : index
    %c0_160 = arith.constant 0 : index
    %385 = vector.load %arg17[%c1_158, %c0_159, %c0_160] : memref<2x1x128xf32, #tpu.memory_space<vmem>>, vector<1x1x128xf32>
    %386 = vector.shape_cast %385 : vector<1x1x128xf32> to vector<1x128xf32>
    %c1_161 = arith.constant 1 : index
    %c0_162 = arith.constant 0 : index
    %c0_163 = arith.constant 0 : index
    %387 = vector.load %arg18[%c1_161, %c0_162, %c0_163] : memref<2x1x128xf32, #tpu.memory_space<vmem>>, vector<1x1x128xf32>
    %388 = vector.shape_cast %387 : vector<1x1x128xf32> to vector<1x128xf32>
    %cst_164 = arith.constant dense<0.000000e+00> : vector<8xf32>
    %389 = vector.multi_reduction <add>, %384, %cst_164 [1] : vector<8x128xf32> to vector<8xf32>
    %390 = vector.shape_cast %389 : vector<8xf32> to vector<8x1xf32>
    %cst_165 = arith.constant 1.280000e+02 : f32
    %391 = vector.broadcast %cst_165 : f32 to vector<8x1xf32>
    %392 = arith.divf %390, %391 : vector<8x1xf32>
    %393 = vector.broadcast %392 : vector<8x1xf32> to vector<8x128xf32>
    %394 = arith.subf %384, %393 : vector<8x128xf32>
    %395 = vector.broadcast %392 : vector<8x1xf32> to vector<8x128xf32>
    %396 = arith.subf %384, %395 : vector<8x128xf32>
    %397 = arith.mulf %394, %396 : vector<8x128xf32>
    %cst_166 = arith.constant dense<0.000000e+00> : vector<8xf32>
    %398 = vector.multi_reduction <add>, %397, %cst_166 [1] : vector<8x128xf32> to vector<8xf32>
    %399 = vector.shape_cast %398 : vector<8xf32> to vector<8x1xf32>
    %cst_167 = arith.constant 1.280000e+02 : f32
    %400 = vector.broadcast %cst_167 : f32 to vector<8x1xf32>
    %401 = arith.divf %399, %400 : vector<8x1xf32>
    %402 = vector.broadcast %392 : vector<8x1xf32> to vector<8x128xf32>
    %403 = arith.subf %384, %402 : vector<8x128xf32>
    %cst_168 = arith.constant 9.99999996E-13 : f32
    %404 = vector.broadcast %cst_168 : f32 to vector<8x1xf32>
    %405 = arith.addf %401, %404 : vector<8x1xf32>
    %406 = math.rsqrt %405 : vector<8x1xf32>
    %407 = vector.broadcast %406 : vector<8x1xf32> to vector<8x128xf32>
    %408 = arith.mulf %403, %407 : vector<8x128xf32>
    %409 = vector.broadcast %386 : vector<1x128xf32> to vector<8x128xf32>
    %410 = arith.mulf %408, %409 : vector<8x128xf32>
    %411 = vector.broadcast %388 : vector<1x128xf32> to vector<8x128xf32>
    %412 = arith.addf %410, %411 : vector<8x128xf32>
    %413 = vector.extract_strided_slice %412 {offsets = [0, 0], sizes = [1, 128], strides = [1, 1]} : vector<8x128xf32> to vector<1x128xf32>
    %c0_169 = arith.constant 0 : index
    %c0_170 = arith.constant 0 : index
    %414 = vector.load %arg19[%c0_169, %c0_170] : memref<128x64xbf16, #tpu.memory_space<vmem>>, vector<128x64xbf16>
    %c0_171 = arith.constant 0 : index
    %c0_172 = arith.constant 0 : index
    %415 = vector.load %arg20[%c0_171, %c0_172] : memref<1x64xf32, #tpu.memory_space<vmem>>, vector<1x64xf32>
    %416 = arith.truncf %413 : vector<1x128xf32> to vector<1x128xbf16>
    %cst_173 = arith.constant dense<0.000000e+00> : vector<1x64xf32>
    %417 = tpu.matmul %416, %414, %cst_173 {dimension_numbers = #tpu.dot_dimension_numbers<[1], [0], [0], [1], [0, 0, 1, 1], [], []>} : vector<1x128xbf16>, vector<128x64xbf16>, vector<1x64xf32> -> vector<1x64xf32>
    %418 = arith.addf %417, %415 : vector<1x64xf32>
    %cst_174 = arith.constant 0.000000e+00 : f32
    %419 = vector.broadcast %cst_174 : f32 to vector<1x64xf32>
    %420 = arith.maximumf %418, %419 : vector<1x64xf32>
    %c0_175 = arith.constant 0 : index
    %c0_176 = arith.constant 0 : index
    %421 = vector.load %arg21[%c0_175, %c0_176] : memref<64x1xbf16, #tpu.memory_space<vmem>>, vector<64x1xbf16>
    %c0_177 = arith.constant 0 : index
    %c0_178 = arith.constant 0 : index
    %422 = vector.load %arg22[%c0_177, %c0_178] : memref<1x1xf32, #tpu.memory_space<vmem>>, vector<1x1xf32>
    %423 = arith.truncf %420 : vector<1x64xf32> to vector<1x64xbf16>
    %cst_179 = arith.constant dense<0.000000e+00> : vector<1x1xf32>
    %424 = tpu.matmul %423, %421, %cst_179 {dimension_numbers = #tpu.dot_dimension_numbers<[1], [0], [0], [1], [0, 0, 1, 1], [], []>} : vector<1x64xbf16>, vector<64x1xbf16>, vector<1x1xf32> -> vector<1x1xf32>
    %425 = arith.addf %424, %422 : vector<1x1xf32>
    %cst_180 = arith.constant 0.000000e+00 : f32
    %426 = vector.broadcast %cst_180 : f32 to vector<1x1xf32>
    %427 = arith.subf %426, %425 : vector<1x1xf32>
    %428 = math.exp %427 : vector<1x1xf32>
    %cst_181 = arith.constant 1.000000e+00 : f32
    %429 = vector.broadcast %cst_181 : f32 to vector<1x1xf32>
    %430 = arith.addf %429, %428 : vector<1x1xf32>
    %cst_182 = arith.constant 1.000000e+00 : f32
    %431 = vector.broadcast %cst_182 : f32 to vector<1x1xf32>
    %432 = arith.divf %431, %430 : vector<1x1xf32>
    %c0_183 = arith.constant 0 : index
    %c0_184 = arith.constant 0 : index
    %c0_185 = arith.constant 0 : index
    %433 = vector.load %arg23[%c0_183, %c0_184, %c0_185] : memref<1x1x1xf32, #tpu.memory_space<vmem>>, vector<1x1x1xf32>
    %434 = vector.shape_cast %433 : vector<1x1x1xf32> to vector<1x1xf32>
    %435 = vector.shape_cast %432 : vector<1x1xf32> to vector<1x1x1xf32>
    tpu.vector_store %arg23[%c0_183, %c0_184, %c0_185], %435 {strides = array<i32>} : memref<1x1x1xf32, #tpu.memory_space<vmem>>, vector<1x1x1xf32>,
    return
  }
  func.func @transform_0(%arg0: i32) -> (i32, i32, i32) {
    %c0_i32 = arith.constant 0 : i32
    %c0_i32_0 = arith.constant 0 : i32
    %c0_i32_1 = arith.constant 0 : i32
    return %arg0, %c0_i32, %c0_i32_0 : i32, i32, i32
  }
  func.func @transform_1(%arg0: i32) -> (i32, i32, i32) {
    %c0_i32 = arith.constant 0 : i32
    %c0_i32_0 = arith.constant 0 : i32
    %c0_i32_1 = arith.constant 0 : i32
    return %arg0, %c0_i32, %c0_i32_0 : i32, i32, i32
  }
  func.func @transform_2(%arg0: i32) -> (i32, i32) {
    %c0_i32 = arith.constant 0 : i32
    %c0_i32_0 = arith.constant 0 : i32
    %c0_i32_1 = arith.constant 0 : i32
    return %c0_i32, %c0_i32_0 : i32, i32
  }
  func.func @transform_3(%arg0: i32) -> (i32, i32) {
    %c0_i32 = arith.constant 0 : i32
    %c0_i32_0 = arith.constant 0 : i32
    %c0_i32_1 = arith.constant 0 : i32
    return %c0_i32, %c0_i32_0 : i32, i32
  }
  func.func @transform_4(%arg0: i32) -> (i32, i32) {
    %c0_i32 = arith.constant 0 : i32
    %c0_i32_0 = arith.constant 0 : i32
    %c0_i32_1 = arith.constant 0 : i32
    return %c0_i32, %c0_i32_0 : i32, i32
  }
  func.func @transform_5(%arg0: i32) -> (i32, i32) {
    %c0_i32 = arith.constant 0 : i32
    %c0_i32_0 = arith.constant 0 : i32
    %c0_i32_1 = arith.constant 0 : i32
    return %c0_i32, %c0_i32_0 : i32, i32
  }
  func.func @transform_6(%arg0: i32) -> (i32, i32, i32) {
    %c0_i32 = arith.constant 0 : i32
    %c0_i32_0 = arith.constant 0 : i32
    %c0_i32_1 = arith.constant 0 : i32
    %c0_i32_2 = arith.constant 0 : i32
    return %c0_i32, %c0_i32_0, %c0_i32_1 : i32, i32, i32
  }
  func.func @transform_7(%arg0: i32) -> (i32, i32, i32) {
    %c0_i32 = arith.constant 0 : i32
    %c0_i32_0 = arith.constant 0 : i32
    %c0_i32_1 = arith.constant 0 : i32
    %c0_i32_2 = arith.constant 0 : i32
    return %c0_i32, %c0_i32_0, %c0_i32_1 : i32, i32, i32
  }
  func.func @transform_8(%arg0: i32) -> (i32, i32, i32) {
    %c0_i32 = arith.constant 0 : i32
    %c0_i32_0 = arith.constant 0 : i32
    %c0_i32_1 = arith.constant 0 : i32
    %c0_i32_2 = arith.constant 0 : i32
    return %c0_i32, %c0_i32_0, %c0_i32_1 : i32, i32, i32
  }
  func.func @transform_9(%arg0: i32) -> (i32, i32, i32) {
    %c0_i32 = arith.constant 0 : i32
    %c0_i32_0 = arith.constant 0 : i32
    %c0_i32_1 = arith.constant 0 : i32
    %c0_i32_2 = arith.constant 0 : i32
    return %c0_i32, %c0_i32_0, %c0_i32_1 : i32, i32, i32
  }
  func.func @transform_10(%arg0: i32) -> (i32, i32, i32) {
    %c0_i32 = arith.constant 0 : i32
    %c0_i32_0 = arith.constant 0 : i32
    %c0_i32_1 = arith.constant 0 : i32
    %c0_i32_2 = arith.constant 0 : i32
    return %c0_i32, %c0_i32_0, %c0_i32_1 : i32, i32, i32
  }
  func.func @transform_11(%arg0: i32) -> (i32, i32, i32) {
    %c0_i32 = arith.constant 0 : i32
    %c0_i32_0 = arith.constant 0 : i32
    %c0_i32_1 = arith.constant 0 : i32
    %c0_i32_2 = arith.constant 0 : i32
    return %c0_i32, %c0_i32_0, %c0_i32_1 : i32, i32, i32
  }
  func.func @transform_12(%arg0: i32) -> (i32, i32, i32) {
    %c0_i32 = arith.constant 0 : i32
    %c0_i32_0 = arith.constant 0 : i32
    %c0_i32_1 = arith.constant 0 : i32
    %c0_i32_2 = arith.constant 0 : i32
    return %c0_i32, %c0_i32_0, %c0_i32_1 : i32, i32, i32
  }
  func.func @transform_13(%arg0: i32) -> (i32, i32, i32) {
    %c0_i32 = arith.constant 0 : i32
    %c0_i32_0 = arith.constant 0 : i32
    %c0_i32_1 = arith.constant 0 : i32
    %c0_i32_2 = arith.constant 0 : i32
    return %c0_i32, %c0_i32_0, %c0_i32_1 : i32, i32, i32
  }
  func.func @transform_14(%arg0: i32) -> (i32, i32, i32) {
    %c0_i32 = arith.constant 0 : i32
    %c0_i32_0 = arith.constant 0 : i32
    %c0_i32_1 = arith.constant 0 : i32
    %c0_i32_2 = arith.constant 0 : i32
    return %c0_i32, %c0_i32_0, %c0_i32_1 : i32, i32, i32
  }
  func.func @transform_15(%arg0: i32) -> (i32, i32, i32) {
    %c0_i32 = arith.constant 0 : i32
    %c0_i32_0 = arith.constant 0 : i32
    %c0_i32_1 = arith.constant 0 : i32
    %c0_i32_2 = arith.constant 0 : i32
    return %c0_i32, %c0_i32_0, %c0_i32_1 : i32, i32, i32
  }
  func.func @transform_16(%arg0: i32) -> (i32, i32, i32) {
    %c0_i32 = arith.constant 0 : i32
    %c0_i32_0 = arith.constant 0 : i32
    %c0_i32_1 = arith.constant 0 : i32
    %c0_i32_2 = arith.constant 0 : i32
    return %c0_i32, %c0_i32_0, %c0_i32_1 : i32, i32, i32
  }
  func.func @transform_17(%arg0: i32) -> (i32, i32, i32) {
    %c0_i32 = arith.constant 0 : i32
    %c0_i32_0 = arith.constant 0 : i32
    %c0_i32_1 = arith.constant 0 : i32
    %c0_i32_2 = arith.constant 0 : i32
    return %c0_i32, %c0_i32_0, %c0_i32_1 : i32, i32, i32
  }
  func.func @transform_18(%arg0: i32) -> (i32, i32) {
    %c0_i32 = arith.constant 0 : i32
    %c0_i32_0 = arith.constant 0 : i32
    %c0_i32_1 = arith.constant 0 : i32
    return %c0_i32, %c0_i32_0 : i32, i32
  }
  func.func @transform_19(%arg0: i32) -> (i32, i32) {
    %c0_i32 = arith.constant 0 : i32
    %c0_i32_0 = arith.constant 0 : i32
    %c0_i32_1 = arith.constant 0 : i32
    return %c0_i32, %c0_i32_0 : i32, i32
  }
  func.func @transform_20(%arg0: i32) -> (i32, i32) {
    %c0_i32 = arith.constant 0 : i32
    %c0_i32_0 = arith.constant 0 : i32
    %c0_i32_1 = arith.constant 0 : i32
    return %c0_i32, %c0_i32_0 : i32, i32
  }
  func.func @transform_21(%arg0: i32) -> (i32, i32) {
    %c0_i32 = arith.constant 0 : i32
    %c0_i32_0 = arith.constant 0 : i32
    %c0_i32_1 = arith.constant 0 : i32
    return %c0_i32, %c0_i32_0 : i32, i32
  }
  func.func @transform_22(%arg0: i32) -> (i32, i32, i32) {
    %c0_i32 = arith.constant 0 : i32
    %c0_i32_0 = arith.constant 0 : i32
    %c0_i32_1 = arith.constant 0 : i32
    return %arg0, %c0_i32, %c0_i32_0 : i32, i32, i32
  }
}

</mosaic_0001>

<llo_original>
// kernel: bert_classification_forward.1
$region0: #{bert_classification_forward.1}
  #allocation0 [shape = 'u32[]', space=smem, size = 0x4, offset = 0x4, fixed_abs, tag = 'smem constant byte address 0x4 - core index']
  #allocation1 [shape = 'u32[144,128]{1,0:T(1,128)}', space=vmem, size = 0x12000, scoped, tag = 'internal scratch']
  #allocation2 [shape = 'f32[1,1]{1,0:T(1,128)S(1)}', space=vmem, size = 0x200, scoped, tag = 'scoped memory for bert_classification_forward.1']
  %s0 = inlined_call_operand.vmem [shape: s32[2,8,1], index: 0, kind: input, shape index: {}]
  %s1 = inlined_call_operand.vmem [shape: f32[2,1,8], index: 1, kind: input, shape index: {}]
  %s2 = inlined_call_operand.vmem [shape: bf16[100,128], index: 2, kind: input, shape index: {}]
  %s3 = inlined_call_operand.hbm [shape: f32[16,128], index: 3, kind: input, shape index: {}]
  %s4 = inlined_call_operand.vmem [shape: f32[1,128], index: 4, kind: input, shape index: {}]
  %s5 = inlined_call_operand.hbm [shape: f32[1,128], index: 5, kind: input, shape index: {}]
  %s6 = inlined_call_operand.hbm [shape: bf16[2,128,384], index: 6, kind: input, shape index: {}]
  %s7 = inlined_call_operand.hbm [shape: f32[2,1,384], index: 7, kind: input, shape index: {}]
  %s8 = inlined_call_operand.vmem [shape: bf16[2,128,128], index: 8, kind: input, shape index: {}]
  %s9 = inlined_call_operand.hbm [shape: f32[2,1,128], index: 9, kind: input, shape index: {}]
  %s10 = inlined_call_operand.hbm [shape: f32[2,1,128], index: 10, kind: input, shape index: {}]
  %s11 = inlined_call_operand.hbm [shape: f32[2,1,128], index: 11, kind: input, shape index: {}]
  %s12 = inlined_call_operand.hbm [shape: bf16[2,128,256], index: 12, kind: input, shape index: {}]
  %s13 = inlined_call_operand.vmem [shape: f32[2,1,256], index: 13, kind: input, shape index: {}]
  %s14 = inlined_call_operand.hbm [shape: bf16[2,256,128], index: 14, kind: input, shape index: {}]
  %s15 = inlined_call_operand.hbm [shape: f32[2,1,128], index: 15, kind: input, shape index: {}]
  %s16 = inlined_call_operand.hbm [shape: f32[2,1,128], index: 16, kind: input, shape index: {}]
  %s17 = inlined_call_operand.hbm [shape: f32[2,1,128], index: 17, kind: input, shape index: {}]
  %s18 = inlined_call_operand.vmem [shape: bf16[128,64], index: 18, kind: input, shape index: {}]
  %s19 = inlined_call_operand.hbm [shape: f32[1,64], index: 19, kind: input, shape index: {}]
  %s20 = inlined_call_operand.vmem [shape: bf16[64,1], index: 20, kind: input, shape index: {}]
  %s21 = inlined_call_operand.<no memory space> [shape: f32[1,1], index: 21, kind: input, shape index: {}]
  %s22 = inlined_call_operand.vmem [shape: f32[2,1,1], index: 22, kind: output, shape index: {}]
  %s23 = sld [smem:[#allocation0]]
  $region173: #{bert_classification_forward.1} parent=0
    _
  %s25 = ssub.s32 1, %s23
  %s26 = scalar_select 0, %s25, %s23
  %v27 = vstv %s21
  %28 = vst [vmem:[#allocation2] sm:$0x1] %v27
  $region1: #{bert_classification_forward.1} parent=0
    #allocation3 [shape = 'u8[8192]{0}', space=vmem, size = 0x2000, scoped, tag = 'input window, operand 3, single buffered']
    #allocation4 [shape = 's32[2]{0}', space=sflag, size = 0x8, scoped, tag = 'scoped memory for bert_classification_forward.1']
    #allocation5 [shape = 'u8[512]{0}', space=vmem, size = 0x400, scoped, tag = 'input window, operand 5, single buffered']
    #allocation6 [shape = 's32[1]{0}', space=sflag, size = 0x4, scoped, tag = 'scoped memory for bert_classification_forward.1']
    #allocation7 [shape = 'u8[196608]{0}', space=vmem, size = 0x30000, scoped, tag = 'input window, operand 6, single buffered']
    #allocation8 [shape = 'u8[3072]{0}', space=vmem, size = 0xc00, scoped, tag = 'input window, operand 7, single buffered']
    #allocation9 [shape = 's32[1]{0}', space=sflag, size = 0x4, scoped, tag = 'scoped memory for bert_classification_forward.1']
    #allocation10 [shape = 'u8[1024]{0}', space=vmem, size = 0x400, scoped, tag = 'input window, operand 9, single buffered']
    #allocation11 [shape = 'u8[1024]{0}', space=vmem, size = 0x400, scoped, tag = 'input window, operand 10, single buffered']
    #allocation12 [shape = 's32[1]{0}', space=sflag, size = 0x4, scoped, tag = 'scoped memory for bert_classification_forward.1']
    #allocation13 [shape = 'u8[1024]{0}', space=vmem, size = 0x400, scoped, tag = 'input window, operand 11, single buffered']
    #allocation14 [shape = 'u8[131072]{0}', space=vmem, size = 0x20000, scoped, tag = 'input window, operand 12, single buffered']
    #allocation15 [shape = 's32[1]{0}', space=sflag, size = 0x4, scoped, tag = 'scoped memory for bert_classification_forward.1']
    #allocation16 [shape = 'u8[131072]{0}', space=vmem, size = 0x20000, scoped, tag = 'input window, operand 14, single buffered']
    #allocation17 [shape = 'u8[1024]{0}', space=vmem, size = 0x400, scoped, tag = 'input window, operand 15, single buffered']
    #allocation18 [shape = 's32[1]{0}', space=sflag, size = 0x4, scoped, tag = 'scoped memory for bert_classification_forward.1']
    #allocation19 [shape = 'u8[1024]{0}', space=vmem, size = 0x400, scoped, tag = 'input window, operand 16, single buffered']
    #allocation20 [shape = 'u8[1024]{0}', space=vmem, size = 0x400, scoped, tag = 'input window, operand 17, single buffered']
    #allocation21 [shape = 's32[1]{0}', space=sflag, size = 0x4, scoped, tag = 'scoped memory for bert_classification_forward.1']
    #allocation22 [shape = 'u8[512]{0}', space=vmem, size = 0x400, scoped, tag = 'input window, operand 19, single buffered']
    %29 = vsyncpa [#allocation4], 0
    %30 = vsyncpa [#allocation6], 0
    %31 = vsyncpa [#allocation9], 0
    %32 = vsyncpa [#allocation12], 0
    %33 = vsyncpa [#allocation15], 0
    %34 = vsyncpa [#allocation18], 0
    %35 = vsyncpa [#allocation21], 0
    loop: start=0, step=1, limit=4
    $region2: #{bert_classification_forward.1} parent=1 // loop_pre_header
      _
    $region3: #{bert_classification_forward.1} parent=1 // loop_header
      %s37 = sphi 0, %s41
      %p38 = scmp.ge.s32.totalorder %s37, 4
      %s47 = sphi 0, %s49
      %s50 = sphi 0, %s47
      %s51 = sphi 0, %s50
      %s67 = sphi 0, %s51
      %s73 = sphi 0, %s75
      %s76 = sphi 0, %s73
      %s77 = sphi 0, %s76
      %s93 = sphi 0, %s77
      %s97 = sphi 0, %s97
      %s99 = sphi 0, %s97
      %s100 = sphi 0, %s99
      %s114 = sphi 0, %s100
      %s118 = sphi 0, %s118
      %s120 = sphi 0, %s118
      %s121 = sphi 0, %s120
      %s135 = sphi 0, %s121
      %s139 = sphi 0, %s139
      %s141 = sphi 0, %s139
      %s142 = sphi 0, %s141
      %s156 = sphi 0, %s142
      %s160 = sphi 0, %s160
      %s162 = sphi 0, %s160
      %s163 = sphi 0, %s162
      %s177 = sphi 0, %s163
      %s181 = sphi 0, %s181
      %s183 = sphi 0, %s181
      %s184 = sphi 0, %s183
      %s198 = sphi 0, %s184
      %s202 = sphi 0, %s202
      %s204 = sphi 0, %s202
      %s205 = sphi 0, %s204
      %s219 = sphi 0, %s205
      %s223 = sphi 0, %s223
      %s225 = sphi 0, %s223
      %s226 = sphi 0, %s225
      %s240 = sphi 0, %s226
      %s244 = sphi 0, %s244
      %s246 = sphi 0, %s244
      %s247 = sphi 0, %s246
      %s261 = sphi 0, %s247
      %s265 = sphi 0, %s265
      %s267 = sphi 0, %s265
      %s268 = sphi 0, %s267
      %s282 = sphi 0, %s268
      %s286 = sphi 0, %s286
      %s288 = sphi 0, %s286
      %s289 = sphi 0, %s288
      %s303 = sphi 0, %s289
      %s307 = sphi 0, %s307
      %s309 = sphi 0, %s307
      %s310 = sphi 0, %s309
      %s324 = sphi 0, %s310
      %s328 = sphi 0, %s328
      %s330 = sphi 0, %s328
      %s331 = sphi 0, %s330
      %s345 = sphi 0, %s331
      %s349 = sphi 0, %s349
      %s351 = sphi 0, %s349
      %s352 = sphi 0, %s351
      %s366 = sphi 0, %s352
      %s370 = sphi 0, %s370
      %s372 = sphi 0, %s370
      %s373 = sphi 0, %s372
      %s387 = sphi 0, %s373
      %s391 = sphi 0, %s391
      %s393 = sphi 0, %s391
      %s394 = sphi 0, %s393
      %s408 = sphi 0, %s394
      %s412 = sphi 0, %s412
      %s414 = sphi 0, %s412
      %s415 = sphi 0, %s414
      %s429 = sphi 0, %s415
      %s433 = sphi 0, %s433
      %s435 = sphi 0, %s433
      %s436 = sphi 0, %s435
      %s450 = sphi 0, %s436
      %s454 = sphi 0, %s454
      %s456 = sphi 0, %s454
      %s457 = sphi 0, %s456
      %s471 = sphi 0, %s457
      %s475 = sphi 0, %s475
      %s477 = sphi 0, %s475
      %s478 = sphi 0, %s477
      %s492 = sphi 0, %s478
      %s496 = sphi 0, %s496
      %s498 = sphi 0, %s496
      %s499 = sphi 0, %s498
      %s513 = sphi 0, %s499
      %s519 = sphi 0, %s521
      %s522 = sphi 0, %s519
      %s523 = sphi 0, %s522
      %s539 = sphi 0, %s523
    $region4: #{bert_classification_forward.1} parent=1 // loop_header_branch
      %40 = sbr.rel (%p38) target = $region8
    $region5: #{bert_classification_forward.1} parent=1 // loop_body
      %s42 = ssub.s32 %s37, 1
      %s43 = ssub.s32 %s37, 2
      %s44 = sadd.s32 %s37, 1
      %s45 = ssub.s32 %s37, %s44
      %p46 = scmp.eq.s32.totalorder %s45, 0
      %s48 = sadd.s32 %s47, 1
      %s49 = scalar_select %p46, %s47, %s48
      %p52 = pneg %p46
      %p53 = scmp.eq.s32.totalorder %s37, 1
      %p54 = por %p52, %p53
      %p55 = scmp.ne.s32.totalorder %s47, %s50
      %p56 = scmp.eq.s32.totalorder %s37, 0
      %p57 = por %p55, %p56
      %p58 = scmp.ne.s32.totalorder %s47, %s50
      %p59 = scmp.eq.s32.totalorder %s42, 1
      %p60 = por %p58, %p59
      %p61 = scmp.ne.s32.totalorder %s50, %s51
      %p62 = scmp.eq.s32.totalorder %s42, 0
      %p63 = por %p61, %p62
      %p64 = scmp.ne.s32.totalorder %s50, %s51
      %p65 = scmp.eq.s32.totalorder %s43, 1
      %p66 = por %p64, %p65
      %p68 = scmp.ne.s32.totalorder %s51, %s67
      %p69 = scmp.eq.s32.totalorder %s43, 0
      %p70 = por %p68, %p69
      %s71 = ssub.s32 %s37, %s44
      %p72 = scmp.eq.s32.totalorder %s71, 0
      %s74 = sadd.s32 %s73, 1
      %s75 = scalar_select %p72, %s73, %s74
      %p78 = pneg %p72
      %p79 = scmp.eq.s32.totalorder %s37, 1
      %p80 = por %p78, %p79
      %p81 = scmp.ne.s32.totalorder %s73, %s76
      %p82 = scmp.eq.s32.totalorder %s37, 0
      %p83 = por %p81, %p82
      %p84 = scmp.ne.s32.totalorder %s73, %s76
      %p85 = scmp.eq.s32.totalorder %s42, 1
      %p86 = por %p84, %p85
      %p87 = scmp.ne.s32.totalorder %s76, %s77
      %p88 = scmp.eq.s32.totalorder %s42, 0
      %p89 = por %p87, %p88
      %p90 = scmp.ne.s32.totalorder %s76, %s77
      %p91 = scmp.eq.s32.totalorder %s43, 1
      %p92 = por %p90, %p91
      %p94 = scmp.ne.s32.totalorder %s77, %s93
      %p95 = scmp.eq.s32.totalorder %s43, 0
      %p96 = por %p94, %p95
      %s98 = sadd.s32 %s97, 1
      %p101 = scmp.eq.s32.totalorder %s37, 1
      %p102 = scmp.ne.s32.totalorder %s97, %s99
      %p103 = scmp.eq.s32.totalorder %s37, 0
      %p104 = por %p102, %p103
      %p105 = scmp.ne.s32.totalorder %s97, %s99
      %p106 = scmp.eq.s32.totalorder %s42, 1
      %p107 = por %p105, %p106
      %p108 = scmp.ne.s32.totalorder %s99, %s100
      %p109 = scmp.eq.s32.totalorder %s42, 0
      %p110 = por %p108, %p109
      %p111 = scmp.ne.s32.totalorder %s99, %s100
      %p112 = scmp.eq.s32.totalorder %s43, 1
      %p113 = por %p111, %p112
      %p115 = scmp.ne.s32.totalorder %s100, %s114
      %p116 = scmp.eq.s32.totalorder %s43, 0
      %p117 = por %p115, %p116
      %s119 = sadd.s32 %s118, 1
      %p122 = scmp.eq.s32.totalorder %s37, 1
      %p123 = scmp.ne.s32.totalorder %s118, %s120
      %p124 = scmp.eq.s32.totalorder %s37, 0
      %p125 = por %p123, %p124
      %p126 = scmp.ne.s32.totalorder %s118, %s120
      %p127 = scmp.eq.s32.totalorder %s42, 1
      %p128 = por %p126, %p127
      %p129 = scmp.ne.s32.totalorder %s120, %s121
      %p130 = scmp.eq.s32.totalorder %s42, 0
      %p131 = por %p129, %p130
      %p132 = scmp.ne.s32.totalorder %s120, %s121
      %p133 = scmp.eq.s32.totalorder %s43, 1
      %p134 = por %p132, %p133
      %p136 = scmp.ne.s32.totalorder %s121, %s135
      %p137 = scmp.eq.s32.totalorder %s43, 0
      %p138 = por %p136, %p137
      %s140 = sadd.s32 %s139, 1
      %p143 = scmp.eq.s32.totalorder %s37, 1
      %p144 = scmp.ne.s32.totalorder %s139, %s141
      %p145 = scmp.eq.s32.totalorder %s37, 0
      %p146 = por %p144, %p145
      %p147 = scmp.ne.s32.totalorder %s139, %s141
      %p148 = scmp.eq.s32.totalorder %s42, 1
      %p149 = por %p147, %p148
      %p150 = scmp.ne.s32.totalorder %s141, %s142
      %p151 = scmp.eq.s32.totalorder %s42, 0
      %p152 = por %p150, %p151
      %p153 = scmp.ne.s32.totalorder %s141, %s142
      %p154 = scmp.eq.s32.totalorder %s43, 1
      %p155 = por %p153, %p154
      %p157 = scmp.ne.s32.totalorder %s142, %s156
      %p158 = scmp.eq.s32.totalorder %s43, 0
      %p159 = por %p157, %p158
      %s161 = sadd.s32 %s160, 1
      %p164 = scmp.eq.s32.totalorder %s37, 1
      %p165 = scmp.ne.s32.totalorder %s160, %s162
      %p166 = scmp.eq.s32.totalorder %s37, 0
      %p167 = por %p165, %p166
      %p168 = scmp.ne.s32.totalorder %s160, %s162
      %p169 = scmp.eq.s32.totalorder %s42, 1
      %p170 = por %p168, %p169
      %p171 = scmp.ne.s32.totalorder %s162, %s163
      %p172 = scmp.eq.s32.totalorder %s42, 0
      %p173 = por %p171, %p172
      %p174 = scmp.ne.s32.totalorder %s162, %s163
      %p175 = scmp.eq.s32.totalorder %s43, 1
      %p176 = por %p174, %p175
      %p178 = scmp.ne.s32.totalorder %s163, %s177
      %p179 = scmp.eq.s32.totalorder %s43, 0
      %p180 = por %p178, %p179
      %s182 = sadd.s32 %s181, 1
      %p185 = scmp.eq.s32.totalorder %s37, 1
      %p186 = scmp.ne.s32.totalorder %s181, %s183
      %p187 = scmp.eq.s32.totalorder %s37, 0
      %p188 = por %p186, %p187
      %p189 = scmp.ne.s32.totalorder %s181, %s183
      %p190 = scmp.eq.s32.totalorder %s42, 1
      %p191 = por %p189, %p190
      %p192 = scmp.ne.s32.totalorder %s183, %s184
      %p193 = scmp.eq.s32.totalorder %s42, 0
      %p194 = por %p192, %p193
      %p195 = scmp.ne.s32.totalorder %s183, %s184
      %p196 = scmp.eq.s32.totalorder %s43, 1
      %p197 = por %p195, %p196
      %p199 = scmp.ne.s32.totalorder %s184, %s198
      %p200 = scmp.eq.s32.totalorder %s43, 0
      %p201 = por %p199, %p200
      %s203 = sadd.s32 %s202, 1
      %p206 = scmp.eq.s32.totalorder %s37, 1
      %p207 = scmp.ne.s32.totalorder %s202, %s204
      %p208 = scmp.eq.s32.totalorder %s37, 0
      %p209 = por %p207, %p208
      %p210 = scmp.ne.s32.totalorder %s202, %s204
      %p211 = scmp.eq.s32.totalorder %s42, 1
      %p212 = por %p210, %p211
      %p213 = scmp.ne.s32.totalorder %s204, %s205
      %p214 = scmp.eq.s32.totalorder %s42, 0
      %p215 = por %p213, %p214
      %p216 = scmp.ne.s32.totalorder %s204, %s205
      %p217 = scmp.eq.s32.totalorder %s43, 1
      %p218 = por %p216, %p217
      %p220 = scmp.ne.s32.totalorder %s205, %s219
      %p221 = scmp.eq.s32.totalorder %s43, 0
      %p222 = por %p220, %p221
      %s224 = sadd.s32 %s223, 1
      %p227 = scmp.eq.s32.totalorder %s37, 1
      %p228 = scmp.ne.s32.totalorder %s223, %s225
      %p229 = scmp.eq.s32.totalorder %s37, 0
      %p230 = por %p228, %p229
      %p231 = scmp.ne.s32.totalorder %s223, %s225
      %p232 = scmp.eq.s32.totalorder %s42, 1
      %p233 = por %p231, %p232
      %p234 = scmp.ne.s32.totalorder %s225, %s226
      %p235 = scmp.eq.s32.totalorder %s42, 0
      %p236 = por %p234, %p235
      %p237 = scmp.ne.s32.totalorder %s225, %s226
      %p238 = scmp.eq.s32.totalorder %s43, 1
      %p239 = por %p237, %p238
      %p241 = scmp.ne.s32.totalorder %s226, %s240
      %p242 = scmp.eq.s32.totalorder %s43, 0
      %p243 = por %p241, %p242
      %s245 = sadd.s32 %s244, 1
      %p248 = scmp.eq.s32.totalorder %s37, 1
      %p249 = scmp.ne.s32.totalorder %s244, %s246
      %p250 = scmp.eq.s32.totalorder %s37, 0
      %p251 = por %p249, %p250
      %p252 = scmp.ne.s32.totalorder %s244, %s246
      %p253 = scmp.eq.s32.totalorder %s42, 1
      %p254 = por %p252, %p253
      %p255 = scmp.ne.s32.totalorder %s246, %s247
      %p256 = scmp.eq.s32.totalorder %s42, 0
      %p257 = por %p255, %p256
      %p258 = scmp.ne.s32.totalorder %s246, %s247
      %p259 = scmp.eq.s32.totalorder %s43, 1
      %p260 = por %p258, %p259
      %p262 = scmp.ne.s32.totalorder %s247, %s261
      %p263 = scmp.eq.s32.totalorder %s43, 0
      %p264 = por %p262, %p263
      %s266 = sadd.s32 %s265, 1
      %p269 = scmp.eq.s32.totalorder %s37, 1
      %p270 = scmp.ne.s32.totalorder %s265, %s267
      %p271 = scmp.eq.s32.totalorder %s37, 0
      %p272 = por %p270, %p271
      %p273 = scmp.ne.s32.totalorder %s265, %s267
      %p274 = scmp.eq.s32.totalorder %s42, 1
      %p275 = por %p273, %p274
      %p276 = scmp.ne.s32.totalorder %s267, %s268
      %p277 = scmp.eq.s32.totalorder %s42, 0
      %p278 = por %p276, %p277
      %p279 = scmp.ne.s32.totalorder %s267, %s268
      %p280 = scmp.eq.s32.totalorder %s43, 1
      %p281 = por %p279, %p280
      %p283 = scmp.ne.s32.totalorder %s268, %s282
      %p284 = scmp.eq.s32.totalorder %s43, 0
      %p285 = por %p283, %p284
      %s287 = sadd.s32 %s286, 1
      %p290 = scmp.eq.s32.totalorder %s37, 1
      %p291 = scmp.ne.s32.totalorder %s286, %s288
      %p292 = scmp.eq.s32.totalorder %s37, 0
      %p293 = por %p291, %p292
      %p294 = scmp.ne.s32.totalorder %s286, %s288
      %p295 = scmp.eq.s32.totalorder %s42, 1
      %p296 = por %p294, %p295
      %p297 = scmp.ne.s32.totalorder %s288, %s289
      %p298 = scmp.eq.s32.totalorder %s42, 0
      %p299 = por %p297, %p298
      %p300 = scmp.ne.s32.totalorder %s288, %s289
      %p301 = scmp.eq.s32.totalorder %s43, 1
      %p302 = por %p300, %p301
      %p304 = scmp.ne.s32.totalorder %s289, %s303
      %p305 = scmp.eq.s32.totalorder %s43, 0
      %p306 = por %p304, %p305
      %s308 = sadd.s32 %s307, 1
      %p311 = scmp.eq.s32.totalorder %s37, 1
      %p312 = scmp.ne.s32.totalorder %s307, %s309
      %p313 = scmp.eq.s32.totalorder %s37, 0
      %p314 = por %p312, %p313
      %p315 = scmp.ne.s32.totalorder %s307, %s309
      %p316 = scmp.eq.s32.totalorder %s42, 1
      %p317 = por %p315, %p316
      %p318 = scmp.ne.s32.totalorder %s309, %s310
      %p319 = scmp.eq.s32.totalorder %s42, 0
      %p320 = por %p318, %p319
      %p321 = scmp.ne.s32.totalorder %s309, %s310
      %p322 = scmp.eq.s32.totalorder %s43, 1
      %p323 = por %p321, %p322
      %p325 = scmp.ne.s32.totalorder %s310, %s324
      %p326 = scmp.eq.s32.totalorder %s43, 0
      %p327 = por %p325, %p326
      %s329 = sadd.s32 %s328, 1
      %p332 = scmp.eq.s32.totalorder %s37, 1
      %p333 = scmp.ne.s32.totalorder %s328, %s330
      %p334 = scmp.eq.s32.totalorder %s37, 0
      %p335 = por %p333, %p334
      %p336 = scmp.ne.s32.totalorder %s328, %s330
      %p337 = scmp.eq.s32.totalorder %s42, 1
      %p338 = por %p336, %p337
      %p339 = scmp.ne.s32.totalorder %s330, %s331
      %p340 = scmp.eq.s32.totalorder %s42, 0
      %p341 = por %p339, %p340
      %p342 = scmp.ne.s32.totalorder %s330, %s331
      %p343 = scmp.eq.s32.totalorder %s43, 1
      %p344 = por %p342, %p343
      %p346 = scmp.ne.s32.totalorder %s331, %s345
      %p347 = scmp.eq.s32.totalorder %s43, 0
      %p348 = por %p346, %p347
      %s350 = sadd.s32 %s349, 1
      %p353 = scmp.eq.s32.totalorder %s37, 1
      %p354 = scmp.ne.s32.totalorder %s349, %s351
      %p355 = scmp.eq.s32.totalorder %s37, 0
      %p356 = por %p354, %p355
      %p357 = scmp.ne.s32.totalorder %s349, %s351
      %p358 = scmp.eq.s32.totalorder %s42, 1
      %p359 = por %p357, %p358
      %p360 = scmp.ne.s32.totalorder %s351, %s352
      %p361 = scmp.eq.s32.totalorder %s42, 0
      %p362 = por %p360, %p361
      %p363 = scmp.ne.s32.totalorder %s351, %s352
      %p364 = scmp.eq.s32.totalorder %s43, 1
      %p365 = por %p363, %p364
      %p367 = scmp.ne.s32.totalorder %s352, %s366
      %p368 = scmp.eq.s32.totalorder %s43, 0
      %p369 = por %p367, %p368
      %s371 = sadd.s32 %s370, 1
      %p374 = scmp.eq.s32.totalorder %s37, 1
      %p375 = scmp.ne.s32.totalorder %s370, %s372
      %p376 = scmp.eq.s32.totalorder %s37, 0
      %p377 = por %p375, %p376
      %p378 = scmp.ne.s32.totalorder %s370, %s372
      %p379 = scmp.eq.s32.totalorder %s42, 1
      %p380 = por %p378, %p379
      %p381 = scmp.ne.s32.totalorder %s372, %s373
      %p382 = scmp.eq.s32.totalorder %s42, 0
      %p383 = por %p381, %p382
      %p384 = scmp.ne.s32.totalorder %s372, %s373
      %p385 = scmp.eq.s32.totalorder %s43, 1
      %p386 = por %p384, %p385
      %p388 = scmp.ne.s32.totalorder %s373, %s387
      %p389 = scmp.eq.s32.totalorder %s43, 0
      %p390 = por %p388, %p389
      %s392 = sadd.s32 %s391, 1
      %p395 = scmp.eq.s32.totalorder %s37, 1
      %p396 = scmp.ne.s32.totalorder %s391, %s393
      %p397 = scmp.eq.s32.totalorder %s37, 0
      %p398 = por %p396, %p397
      %p399 = scmp.ne.s32.totalorder %s391, %s393
      %p400 = scmp.eq.s32.totalorder %s42, 1
      %p401 = por %p399, %p400
      %p402 = scmp.ne.s32.totalorder %s393, %s394
      %p403 = scmp.eq.s32.totalorder %s42, 0
      %p404 = por %p402, %p403
      %p405 = scmp.ne.s32.totalorder %s393, %s394
      %p406 = scmp.eq.s32.totalorder %s43, 1
      %p407 = por %p405, %p406
      %p409 = scmp.ne.s32.totalorder %s394, %s408
      %p410 = scmp.eq.s32.totalorder %s43, 0
      %p411 = por %p409, %p410
      %s413 = sadd.s32 %s412, 1
      %p416 = scmp.eq.s32.totalorder %s37, 1
      %p417 = scmp.ne.s32.totalorder %s412, %s414
      %p418 = scmp.eq.s32.totalorder %s37, 0
      %p419 = por %p417, %p418
      %p420 = scmp.ne.s32.totalorder %s412, %s414
      %p421 = scmp.eq.s32.totalorder %s42, 1
      %p422 = por %p420, %p421
      %p423 = scmp.ne.s32.totalorder %s414, %s415
      %p424 = scmp.eq.s32.totalorder %s42, 0
      %p425 = por %p423, %p424
      %p426 = scmp.ne.s32.totalorder %s414, %s415
      %p427 = scmp.eq.s32.totalorder %s43, 1
      %p428 = por %p426, %p427
      %p430 = scmp.ne.s32.totalorder %s415, %s429
      %p431 = scmp.eq.s32.totalorder %s43, 0
      %p432 = por %p430, %p431
      %s434 = sadd.s32 %s433, 1
      %p437 = scmp.eq.s32.totalorder %s37, 1
      %p438 = scmp.ne.s32.totalorder %s433, %s435
      %p439 = scmp.eq.s32.totalorder %s37, 0
      %p440 = por %p438, %p439
      %p441 = scmp.ne.s32.totalorder %s433, %s435
      %p442 = scmp.eq.s32.totalorder %s42, 1
      %p443 = por %p441, %p442
      %p444 = scmp.ne.s32.totalorder %s435, %s436
      %p445 = scmp.eq.s32.totalorder %s42, 0
      %p446 = por %p444, %p445
      %p447 = scmp.ne.s32.totalorder %s435, %s436
      %p448 = scmp.eq.s32.totalorder %s43, 1
      %p449 = por %p447, %p448
      %p451 = scmp.ne.s32.totalorder %s436, %s450
      %p452 = scmp.eq.s32.totalorder %s43, 0
      %p453 = por %p451, %p452
      %s455 = sadd.s32 %s454, 1
      %p458 = scmp.eq.s32.totalorder %s37, 1
      %p459 = scmp.ne.s32.totalorder %s454, %s456
      %p460 = scmp.eq.s32.totalorder %s37, 0
      %p461 = por %p459, %p460
      %p462 = scmp.ne.s32.totalorder %s454, %s456
      %p463 = scmp.eq.s32.totalorder %s42, 1
      %p464 = por %p462, %p463
      %p465 = scmp.ne.s32.totalorder %s456, %s457
      %p466 = scmp.eq.s32.totalorder %s42, 0
      %p467 = por %p465, %p466
      %p468 = scmp.ne.s32.totalorder %s456, %s457
      %p469 = scmp.eq.s32.totalorder %s43, 1
      %p470 = por %p468, %p469
      %p472 = scmp.ne.s32.totalorder %s457, %s471
      %p473 = scmp.eq.s32.totalorder %s43, 0
      %p474 = por %p472, %p473
      %s476 = sadd.s32 %s475, 1
      %p479 = scmp.eq.s32.totalorder %s37, 1
      %p480 = scmp.ne.s32.totalorder %s475, %s477
      %p481 = scmp.eq.s32.totalorder %s37, 0
      %p482 = por %p480, %p481
      %p483 = scmp.ne.s32.totalorder %s475, %s477
      %p484 = scmp.eq.s32.totalorder %s42, 1
      %p485 = por %p483, %p484
      %p486 = scmp.ne.s32.totalorder %s477, %s478
      %p487 = scmp.eq.s32.totalorder %s42, 0
      %p488 = por %p486, %p487
      %p489 = scmp.ne.s32.totalorder %s477, %s478
      %p490 = scmp.eq.s32.totalorder %s43, 1
      %p491 = por %p489, %p490
      %p493 = scmp.ne.s32.totalorder %s478, %s492
      %p494 = scmp.eq.s32.totalorder %s43, 0
      %p495 = por %p493, %p494
      %s497 = sadd.s32 %s496, 1
      %p500 = scmp.eq.s32.totalorder %s37, 1
      %p501 = scmp.ne.s32.totalorder %s496, %s498
      %p502 = scmp.eq.s32.totalorder %s37, 0
      %p503 = por %p501, %p502
      %p504 = scmp.ne.s32.totalorder %s496, %s498
      %p505 = scmp.eq.s32.totalorder %s42, 1
      %p506 = por %p504, %p505
      %p507 = scmp.ne.s32.totalorder %s498, %s499
      %p508 = scmp.eq.s32.totalorder %s42, 0
      %p509 = por %p507, %p508
      %p510 = scmp.ne.s32.totalorder %s498, %s499
      %p511 = scmp.eq.s32.totalorder %s43, 1
      %p512 = por %p510, %p511
      %p514 = scmp.ne.s32.totalorder %s499, %s513
      %p515 = scmp.eq.s32.totalorder %s43, 0
      %p516 = por %p514, %p515
      %s517 = ssub.s32 %s37, %s44
      %p518 = scmp.eq.s32.totalorder %s517, 0
      %s520 = sadd.s32 %s519, 1
      %s521 = scalar_select %p518, %s519, %s520
      %p524 = pneg %p518
      %p525 = scmp.eq.s32.totalorder %s37, 1
      %p526 = por %p524, %p525
      %p527 = scmp.ne.s32.totalorder %s519, %s522
      %p528 = scmp.eq.s32.totalorder %s37, 0
      %p529 = por %p527, %p528
      %p530 = scmp.ne.s32.totalorder %s519, %s522
      %p531 = scmp.eq.s32.totalorder %s42, 1
      %p532 = por %p530, %p531
      %p533 = scmp.ne.s32.totalorder %s522, %s523
      %p534 = scmp.eq.s32.totalorder %s42, 0
      %p535 = por %p533, %p534
      %p536 = scmp.ne.s32.totalorder %s522, %s523
      %p537 = scmp.eq.s32.totalorder %s43, 1
      %p538 = por %p536, %p537
      %p540 = scmp.ne.s32.totalorder %s523, %s539
      %p541 = scmp.eq.s32.totalorder %s43, 0
      %p542 = por %p540, %p541
      %p543 = scmp.le.s32.totalorder 1, %s37
      %p544 = scmp.lt.s32.totalorder %s37, 3
      %p545 = pnand %p543, %p544
      %p546 = pneg %p545
      // Predicated region
      $region9: #{bert_classification_forward.1} parent=5 // pred_check
        _
      $region10: #{bert_classification_forward.1} parent=5 // pred_check_branch
        %548 = sbr.rel (%p545) target = $region12
      $region11: #{bert_classification_forward.1} parent=5 // pred_region
        %s549 = ssub.s32 %s37, 1
        // Predicated region
        $region13: #{bert_classification_forward.1} parent=11 // pred_check
          %p550 = pneg %p110
        $region14: #{bert_classification_forward.1} parent=11 // pred_check_branch
          %552 = sbr.rel (%p550) target = $region16
        $region15: #{bert_classification_forward.1} parent=11 // pred_region
          _
        $region16: #{bert_classification_forward.1} parent=11 // pred_fallthru
          _
        // Predicated region
        $region17: #{bert_classification_forward.1} parent=11 // pred_check
          %p553 = pneg %p131
        $region18: #{bert_classification_forward.1} parent=11 // pred_check_branch
          %555 = sbr.rel (%p553) target = $region20
        $region19: #{bert_classification_forward.1} parent=11 // pred_region
          %s557 = ssub.s32 256, 256
          %558 = vsyncadd [#allocation4], %s557
          %s559 = sshll.u32 [#allocation3], 4
          %s560 = int_to_ptr.vmem [resolvable:$true] %s559
          %565 = dma.hbm_to_vmem [thread:$0]  %s3, 256, %s560, [#allocation4], 128, 128, 8
        $region20: #{bert_classification_forward.1} parent=11 // pred_fallthru
          _
        // Predicated region
        $region21: #{bert_classification_forward.1} parent=11 // pred_check
          %p566 = pneg %p152
        $region22: #{bert_classification_forward.1} parent=11 // pred_check_branch
          %568 = sbr.rel (%p566) target = $region24
        $region23: #{bert_classification_forward.1} parent=11 // pred_region
          _
        $region24: #{bert_classification_forward.1} parent=11 // pred_fallthru
          _
        // Predicated region
        $region25: #{bert_classification_forward.1} parent=11 // pred_check
          %p569 = pneg %p173
        $region26: #{bert_classification_forward.1} parent=11 // pred_check_branch
          %571 = sbr.rel (%p569) target = $region28
        $region27: #{bert_classification_forward.1} parent=11 // pred_region
          %s573 = ssub.s32 16, 16
          %574 = vsyncadd [#allocation6], %s573
          %s576 = sshll.u32 [#allocation5], 4
          %s577 = int_to_ptr.vmem [resolvable:$true] %s576
          %579 = dma.hbm_to_vmem [thread:$0]  %s5, 16, %s577, [#allocation6]
        $region28: #{bert_classification_forward.1} parent=11 // pred_fallthru
          _
        // Predicated region
        $region29: #{bert_classification_forward.1} parent=11 // pred_check
          %p580 = pneg %p194
        $region30: #{bert_classification_forward.1} parent=11 // pred_check_branch
          %582 = sbr.rel (%p580) target = $region32
        $region31: #{bert_classification_forward.1} parent=11 // pred_region
          %s584 = ssub.s32 6144, 6144
          %585 = vsyncadd [#allocation6], %s584
          %s586 = sshll.u32 [#allocation7], 4
          %s587 = int_to_ptr.vmem [resolvable:$true] %s586
          %592 = dma.hbm_to_vmem [thread:$0]  %s6, 6144, %s587, [#allocation6], 192, 192, 12
        $region32: #{bert_classification_forward.1} parent=11 // pred_fallthru
          _
        // Predicated region
        $region33: #{bert_classification_forward.1} parent=11 // pred_check
          %p593 = pneg %p215
        $region34: #{bert_classification_forward.1} parent=11 // pred_check_branch
          %595 = sbr.rel (%p593) target = $region36
        $region35: #{bert_classification_forward.1} parent=11 // pred_region
          %s597 = ssub.s32 96, 96
          %598 = vsyncadd [#allocation9], %s597
          %s599 = sshll.u32 [#allocation8], 4
          %s600 = int_to_ptr.vmem [resolvable:$true] %s599
          %605 = dma.hbm_to_vmem [thread:$0]  %s7, 96, %s600, [#allocation9], 48, 48, 3
        $region36: #{bert_classification_forward.1} parent=11 // pred_fallthru
          _
        // Predicated region
        $region37: #{bert_classification_forward.1} parent=11 // pred_check
          %p606 = pneg %p236
        $region38: #{bert_classification_forward.1} parent=11 // pred_check_branch
          %608 = sbr.rel (%p606) target = $region40
        $region39: #{bert_classification_forward.1} parent=11 // pred_region
          _
        $region40: #{bert_classification_forward.1} parent=11 // pred_fallthru
          _
        // Predicated region
        $region41: #{bert_classification_forward.1} parent=11 // pred_check
          %p609 = pneg %p257
        $region42: #{bert_classification_forward.1} parent=11 // pred_check_branch
          %611 = sbr.rel (%p609) target = $region44
        $region43: #{bert_classification_forward.1} parent=11 // pred_region
          %s613 = ssub.s32 32, 32
          %614 = vsyncadd [#allocation9], %s613
          %s615 = sshll.u32 [#allocation10], 4
          %s616 = int_to_ptr.vmem [resolvable:$true] %s615
          %621 = dma.hbm_to_vmem [thread:$0]  %s9, 32, %s616, [#allocation9], 16, 16, 1
        $region44: #{bert_classification_forward.1} parent=11 // pred_fallthru
          _
        // Predicated region
        $region45: #{bert_classification_forward.1} parent=11 // pred_check
          %p622 = pneg %p278
        $region46: #{bert_classification_forward.1} parent=11 // pred_check_branch
          %624 = sbr.rel (%p622) target = $region48
        $region47: #{bert_classification_forward.1} parent=11 // pred_region
          %s626 = ssub.s32 32, 32
          %627 = vsyncadd [#allocation12], %s626
          %s628 = sshll.u32 [#allocation11], 4
          %s629 = int_to_ptr.vmem [resolvable:$true] %s628
          %634 = dma.hbm_to_vmem [thread:$0]  %s10, 32, %s629, [#allocation12], 16, 16, 1
        $region48: #{bert_classification_forward.1} parent=11 // pred_fallthru
          _
        // Predicated region
        $region49: #{bert_classification_forward.1} parent=11 // pred_check
          %p635 = pneg %p299
        $region50: #{bert_classification_forward.1} parent=11 // pred_check_branch
          %637 = sbr.rel (%p635) target = $region52
        $region51: #{bert_classification_forward.1} parent=11 // pred_region
          %s639 = ssub.s32 32, 32
          %640 = vsyncadd [#allocation12], %s639
          %s641 = sshll.u32 [#allocation13], 4
          %s642 = int_to_ptr.vmem [resolvable:$true] %s641
          %647 = dma.hbm_to_vmem [thread:$0]  %s11, 32, %s642, [#allocation12], 16, 16, 1
        $region52: #{bert_classification_forward.1} parent=11 // pred_fallthru
          _
        // Predicated region
        $region53: #{bert_classification_forward.1} parent=11 // pred_check
          %p648 = pneg %p320
        $region54: #{bert_classification_forward.1} parent=11 // pred_check_branch
          %650 = sbr.rel (%p648) target = $region56
        $region55: #{bert_classification_forward.1} parent=11 // pred_region
          %s652 = ssub.s32 4096, 4096
          %653 = vsyncadd [#allocation15], %s652
          %s654 = sshll.u32 [#allocation14], 4
          %s655 = int_to_ptr.vmem [resolvable:$true] %s654
          %660 = dma.hbm_to_vmem [thread:$0]  %s12, 4096, %s655, [#allocation15], 128, 128, 8
        $region56: #{bert_classification_forward.1} parent=11 // pred_fallthru
          _
        // Predicated region
        $region57: #{bert_classification_forward.1} parent=11 // pred_check
          %p661 = pneg %p341
        $region58: #{bert_classification_forward.1} parent=11 // pred_check_branch
          %663 = sbr.rel (%p661) target = $region60
        $region59: #{bert_classification_forward.1} parent=11 // pred_region
          _
        $region60: #{bert_classification_forward.1} parent=11 // pred_fallthru
          _
        // Predicated region
        $region61: #{bert_classification_forward.1} parent=11 // pred_check
          %p664 = pneg %p362
        $region62: #{bert_classification_forward.1} parent=11 // pred_check_branch
          %666 = sbr.rel (%p664) target = $region64
        $region63: #{bert_classification_forward.1} parent=11 // pred_region
          %s668 = ssub.s32 4096, 4096
          %669 = vsyncadd [#allocation15], %s668
          %s670 = sshll.u32 [#allocation16], 4
          %s671 = int_to_ptr.vmem [resolvable:$true] %s670
          %676 = dma.hbm_to_vmem [thread:$0]  %s14, 4096, %s671, [#allocation15], 64, 64, 4
        $region64: #{bert_classification_forward.1} parent=11 // pred_fallthru
          _
        // Predicated region
        $region65: #{bert_classification_forward.1} parent=11 // pred_check
          %p677 = pneg %p383
        $region66: #{bert_classification_forward.1} parent=11 // pred_check_branch
          %679 = sbr.rel (%p677) target = $region68
        $region67: #{bert_classification_forward.1} parent=11 // pred_region
          %s681 = ssub.s32 32, 32
          %682 = vsyncadd [#allocation18], %s681
          %s683 = sshll.u32 [#allocation17], 4
          %s684 = int_to_ptr.vmem [resolvable:$true] %s683
          %689 = dma.hbm_to_vmem [thread:$0]  %s15, 32, %s684, [#allocation18], 16, 16, 1
        $region68: #{bert_classification_forward.1} parent=11 // pred_fallthru
          _
        // Predicated region
        $region69: #{bert_classification_forward.1} parent=11 // pred_check
          %p690 = pneg %p404
        $region70: #{bert_classification_forward.1} parent=11 // pred_check_branch
          %692 = sbr.rel (%p690) target = $region72
        $region71: #{bert_classification_forward.1} parent=11 // pred_region
          %s694 = ssub.s32 32, 32
          %695 = vsyncadd [#allocation18], %s694
          %s696 = sshll.u32 [#allocation19], 4
          %s697 = int_to_ptr.vmem [resolvable:$true] %s696
          %702 = dma.hbm_to_vmem [thread:$0]  %s16, 32, %s697, [#allocation18], 16, 16, 1
        $region72: #{bert_classification_forward.1} parent=11 // pred_fallthru
          _
        // Predicated region
        $region73: #{bert_classification_forward.1} parent=11 // pred_check
          %p703 = pneg %p425
        $region74: #{bert_classification_forward.1} parent=11 // pred_check_branch
          %705 = sbr.rel (%p703) target = $region76
        $region75: #{bert_classification_forward.1} parent=11 // pred_region
          %s707 = ssub.s32 32, 32
          %708 = vsyncadd [#allocation21], %s707
          %s709 = sshll.u32 [#allocation20], 4
          %s710 = int_to_ptr.vmem [resolvable:$true] %s709
          %715 = dma.hbm_to_vmem [thread:$0]  %s17, 32, %s710, [#allocation21], 16, 16, 1
        $region76: #{bert_classification_forward.1} parent=11 // pred_fallthru
          _
        // Predicated region
        $region77: #{bert_classification_forward.1} parent=11 // pred_check
          %p716 = pneg %p446
        $region78: #{bert_classification_forward.1} parent=11 // pred_check_branch
          %718 = sbr.rel (%p716) target = $region80
        $region79: #{bert_classification_forward.1} parent=11 // pred_region
          _
        $region80: #{bert_classification_forward.1} parent=11 // pred_fallthru
          _
        // Predicated region
        $region81: #{bert_classification_forward.1} parent=11 // pred_check
          %p719 = pneg %p467
        $region82: #{bert_classification_forward.1} parent=11 // pred_check_branch
          %721 = sbr.rel (%p719) target = $region84
        $region83: #{bert_classification_forward.1} parent=11 // pred_region
          %s723 = ssub.s32 16, 16
          %724 = vsyncadd [#allocation21], %s723
          %s726 = sshll.u32 [#allocation22], 4
          %s727 = int_to_ptr.vmem [resolvable:$true] %s726
          %729 = dma.hbm_to_vmem [thread:$0]  %s19, 16, %s727, [#allocation21]
        $region84: #{bert_classification_forward.1} parent=11 // pred_fallthru
          _
        // Predicated region
        $region85: #{bert_classification_forward.1} parent=11 // pred_check
          %p730 = pneg %p488
        $region86: #{bert_classification_forward.1} parent=11 // pred_check_branch
          %732 = sbr.rel (%p730) target = $region88
        $region87: #{bert_classification_forward.1} parent=11 // pred_region
          _
        $region88: #{bert_classification_forward.1} parent=11 // pred_fallthru
          _
        // Predicated region
        $region89: #{bert_classification_forward.1} parent=11 // pred_check
          %p733 = pneg %p509
        $region90: #{bert_classification_forward.1} parent=11 // pred_check_branch
          %735 = sbr.rel (%p733) target = $region92
        $region91: #{bert_classification_forward.1} parent=11 // pred_region
          _
        $region92: #{bert_classification_forward.1} parent=11 // pred_fallthru
          _
      $region12: #{bert_classification_forward.1} parent=5 // pred_fallthru
        _
      %p736 = scmp.lt.s32.totalorder %s37, 2
      // Predicated region
      $region93: #{bert_classification_forward.1} parent=5 // pred_check
        %p737 = pneg %p736
      $region94: #{bert_classification_forward.1} parent=5 // pred_check_branch
        %739 = sbr.rel (%p737) target = $region96
      $region95: #{bert_classification_forward.1} parent=5 // pred_region
        // Predicated region
        $region97: #{bert_classification_forward.1} parent=95 // pred_check
          %p740 = pneg %p57
        $region98: #{bert_classification_forward.1} parent=95 // pred_check_branch
          %742 = sbr.rel (%p740) target = $region100
        $region99: #{bert_classification_forward.1} parent=95 // pred_region
          %p743 = scmp.lt.s32.totalorder %s37, 1
          %s744 = scalar_select %p743, %s37, 1
          %s745 = smul.addr %s744, 8
          %s746 = scalar_lea.vmem %s0, %s745
        $region100: #{bert_classification_forward.1} parent=95 // pred_fallthru
          _
        // Predicated region
        $region101: #{bert_classification_forward.1} parent=95 // pred_check
          %p747 = pneg %p83
        $region102: #{bert_classification_forward.1} parent=95 // pred_check_branch
          %749 = sbr.rel (%p747) target = $region104
        $region103: #{bert_classification_forward.1} parent=95 // pred_region
          %p750 = scmp.lt.s32.totalorder %s37, 1
          %s751 = scalar_select %p750, %s37, 1
          %s752 = scalar_lea.vmem %s1, %s751
        $region104: #{bert_classification_forward.1} parent=95 // pred_fallthru
          _
      $region96: #{bert_classification_forward.1} parent=5 // pred_fallthru
        _
      %p753 = scmp.le.s32.totalorder 1, %s37
      %p754 = scmp.lt.s32.totalorder %s37, 3
      %p755 = pnand %p753, %p754
      %p756 = pneg %p755
      // Predicated region
      $region105: #{bert_classification_forward.1} parent=5 // pred_check
        _
      $region106: #{bert_classification_forward.1} parent=5 // pred_check_branch
        %758 = sbr.rel (%p755) target = $region108
      $region107: #{bert_classification_forward.1} parent=5 // pred_region
        %s759 = ssub.s32 %s37, 1
        // Predicated region
        $region109: #{bert_classification_forward.1} parent=107 // pred_check
          %p760 = pneg %p131
        $region110: #{bert_classification_forward.1} parent=107 // pred_check_branch
          %762 = sbr.rel (%p760) target = $region112
        $region111: #{bert_classification_forward.1} parent=107 // pred_region
          %763 = dma.done [#allocation4], 256
        $region112: #{bert_classification_forward.1} parent=107 // pred_fallthru
          _
        // Predicated region
        $region113: #{bert_classification_forward.1} parent=107 // pred_check
          %p764 = pneg %p173
        $region114: #{bert_classification_forward.1} parent=107 // pred_check_branch
          %766 = sbr.rel (%p764) target = $region116
        $region115: #{bert_classification_forward.1} parent=107 // pred_region
          %767 = dma.done [#allocation6], 16
        $region116: #{bert_classification_forward.1} parent=107 // pred_fallthru
          _
        // Predicated region
        $region117: #{bert_classification_forward.1} parent=107 // pred_check
          %p768 = pneg %p194
        $region118: #{bert_classification_forward.1} parent=107 // pred_check_branch
          %770 = sbr.rel (%p768) target = $region120
        $region119: #{bert_classification_forward.1} parent=107 // pred_region
          %771 = dma.done [#allocation6], 6144
        $region120: #{bert_classification_forward.1} parent=107 // pred_fallthru
          _
        // Predicated region
        $region121: #{bert_classification_forward.1} parent=107 // pred_check
          %p772 = pneg %p215
        $region122: #{bert_classification_forward.1} parent=107 // pred_check_branch
          %774 = sbr.rel (%p772) target = $region124
        $region123: #{bert_classification_forward.1} parent=107 // pred_region
          %775 = dma.done [#allocation9], 96
        $region124: #{bert_classification_forward.1} parent=107 // pred_fallthru
          _
        // Predicated region
        $region125: #{bert_classification_forward.1} parent=107 // pred_check
          %p776 = pneg %p257
        $region126: #{bert_classification_forward.1} parent=107 // pred_check_branch
          %778 = sbr.rel (%p776) target = $region128
        $region127: #{bert_classification_forward.1} parent=107 // pred_region
          %779 = dma.done [#allocation9], 32
        $region128: #{bert_classification_forward.1} parent=107 // pred_fallthru
          _
        // Predicated region
        $region129: #{bert_classification_forward.1} parent=107 // pred_check
          %p780 = pneg %p278
        $region130: #{bert_classification_forward.1} parent=107 // pred_check_branch
          %782 = sbr.rel (%p780) target = $region132
        $region131: #{bert_classification_forward.1} parent=107 // pred_region
          %783 = dma.done [#allocation12], 32
        $region132: #{bert_classification_forward.1} parent=107 // pred_fallthru
          _
        // Predicated region
        $region133: #{bert_classification_forward.1} parent=107 // pred_check
          %p784 = pneg %p299
        $region134: #{bert_classification_forward.1} parent=107 // pred_check_branch
          %786 = sbr.rel (%p784) target = $region136
        $region135: #{bert_classification_forward.1} parent=107 // pred_region
          %787 = dma.done [#allocation12], 32
        $region136: #{bert_classification_forward.1} parent=107 // pred_fallthru
          _
        // Predicated region
        $region137: #{bert_classification_forward.1} parent=107 // pred_check
          %p788 = pneg %p320
        $region138: #{bert_classification_forward.1} parent=107 // pred_check_branch
          %790 = sbr.rel (%p788) target = $region140
        $region139: #{bert_classification_forward.1} parent=107 // pred_region
          %791 = dma.done [#allocation15], 4096
        $region140: #{bert_classification_forward.1} parent=107 // pred_fallthru
          _
        // Predicated region
        $region141: #{bert_classification_forward.1} parent=107 // pred_check
          %p792 = pneg %p362
        $region142: #{bert_classification_forward.1} parent=107 // pred_check_branch
          %794 = sbr.rel (%p792) target = $region144
        $region143: #{bert_classification_forward.1} parent=107 // pred_region
          %795 = dma.done [#allocation15], 4096
        $region144: #{bert_classification_forward.1} parent=107 // pred_fallthru
          _
        // Predicated region
        $region145: #{bert_classification_forward.1} parent=107 // pred_check
          %p796 = pneg %p383
        $region146: #{bert_classification_forward.1} parent=107 // pred_check_branch
          %798 = sbr.rel (%p796) target = $region148
        $region147: #{bert_classification_forward.1} parent=107 // pred_region
          %799 = dma.done [#allocation18], 32
        $region148: #{bert_classification_forward.1} parent=107 // pred_fallthru
          _
        // Predicated region
        $region149: #{bert_classification_forward.1} parent=107 // pred_check
          %p800 = pneg %p404
        $region150: #{bert_classification_forward.1} parent=107 // pred_check_branch
          %802 = sbr.rel (%p800) target = $region152
        $region151: #{bert_classification_forward.1} parent=107 // pred_region
          %803 = dma.done [#allocation18], 32
        $region152: #{bert_classification_forward.1} parent=107 // pred_fallthru
          _
        // Predicated region
        $region153: #{bert_classification_forward.1} parent=107 // pred_check
          %p804 = pneg %p425
        $region154: #{bert_classification_forward.1} parent=107 // pred_check_branch
          %806 = sbr.rel (%p804) target = $region156
        $region155: #{bert_classification_forward.1} parent=107 // pred_region
          %807 = dma.done [#allocation21], 32
        $region156: #{bert_classification_forward.1} parent=107 // pred_fallthru
          _
        // Predicated region
        $region157: #{bert_classification_forward.1} parent=107 // pred_check
          %p808 = pneg %p467
        $region158: #{bert_classification_forward.1} parent=107 // pred_check_branch
          %810 = sbr.rel (%p808) target = $region160
        $region159: #{bert_classification_forward.1} parent=107 // pred_region
          %811 = dma.done [#allocation21], 16
        $region160: #{bert_classification_forward.1} parent=107 // pred_fallthru
          _
        %p812 = scmp.lt.s32.totalorder %s42, 1
        %s813 = scalar_select %p812, %s42, 1
        %s814 = smul.addr %s813, 8
        %s815 = scalar_lea.vmem %s0, %s814
        %p816 = pneg %p63
        %p817 = pneg %p60
        %p818 = scmp.lt.s32.totalorder %s42, 1
        %s819 = scalar_select %p818, %s42, 1
        %s820 = scalar_lea.vmem %s1, %s819
        %p821 = pneg %p89
        %p822 = pneg %p86
        %p823 = pneg %p110
        %p824 = pneg %p107
        %p825 = pneg %p131
        %p826 = pneg %p128
        %p827 = pneg %p152
        %p828 = pneg %p149
        %p829 = pneg %p173
        %p830 = pneg %p170
        %p831 = pneg %p194
        %p832 = pneg %p191
        %p833 = pneg %p215
        %p834 = pneg %p212
        %p835 = pneg %p236
        %p836 = pneg %p233
        %p837 = pneg %p257
        %p838 = pneg %p254
        %p839 = pneg %p278
        %p840 = pneg %p275
        %p841 = pneg %p299
        %p842 = pneg %p296
        %p843 = pneg %p320
        %p844 = pneg %p317
        %p845 = pneg %p341
        %p846 = pneg %p338
        %p847 = pneg %p362
        %p848 = pneg %p359
        %p849 = pneg %p383
        %p850 = pneg %p380
        %p851 = pneg %p404
        %p852 = pneg %p401
        %p853 = pneg %p425
        %p854 = pneg %p422
        %p855 = pneg %p446
        %p856 = pneg %p443
        %p857 = pneg %p467
        %p858 = pneg %p464
        %p859 = pneg %p488
        %p860 = pneg %p485
        %p861 = pneg %p509
        %p862 = pneg %p506
        %p863 = pneg %p535
        %p864 = pneg %p532
        %p865 = scmp.lt.s32.totalorder %s42, 1
        %s866 = scalar_select %p865, %s42, 1
        %s867 = scalar_lea.vmem %s22, %s866
        %p868 = scmp.lt.s32.totalorder %s42, 1
        %s869 = scalar_select %p868, %s42, 1
        %s870 = smul.addr %s869, 8
        %s871 = scalar_lea.vmem %s0, %s870
        %p872 = scmp.lt.s32.totalorder %s42, 1
        %s873 = scalar_select %p872, %s42, 1
        %s874 = scalar_lea.vmem %s1, %s873
        %p875 = scmp.lt.s32.totalorder %s42, 1
        %s876 = scalar_select %p875, %s42, 1
        %s877 = scalar_lea.vmem %s22, %s876
        %v879 = vld [vmem:[%s871] sm:$0xff]
        %v880 = vlaneseq
        %v881 = vand.u32 %v880, 127
        %882 = vset.pattern.permute.xlu0 0
        %883 = vperm.xlu0 %882, %v879
        %v884 = vpop.permute.xlu0 %883
        %vm885 = vcmp.eq.s32.totalorder %v881, %v884
        %v886 = vsel %vm885, 1.0, 0.0
        %v887 = vpack.c.bf16 %v886, %v886
        %v888 = vld [vmem:[%s2] sm:$0xf]
        %v889 = vld [vmem:[%s2 + $0x4] sm:$0xf]
        %v890 = vld [vmem:[%s2 + $0x8] sm:$0xf]
        %v891 = vld [vmem:[%s2 + $0xc] sm:$0xf]
        %v892 = vld [vmem:[%s2 + $0x10] sm:$0xf]
        %v893 = vld [vmem:[%s2 + $0x14] sm:$0xf]
        %v894 = vld [vmem:[%s2 + $0x18] sm:$0xf]
        %v895 = vld [vmem:[%s2 + $0x1c] sm:$0xf]
        %v896 = vld [vmem:[%s2 + $0x20] sm:$0xf]
        %v897 = vld [vmem:[%s2 + $0x24] sm:$0xf]
        %v898 = vld [vmem:[%s2 + $0x28] sm:$0xf]
        %v899 = vld [vmem:[%s2 + $0x2c] sm:$0xf]
        %v900 = vld [vmem:[%s2 + $0x30] sm:$0x3]
        %v901 = vld [vmem:[#allocation3] sm:$0xff]
        %v915 = vunpack.c.l.b16 %v888
        %v916 = vunpack.c.l.b16 %v889
        %v917 = vunpack.c.l.b16 %v890
        %v918 = vunpack.c.l.b16 %v891
        %v919 = vunpack.c.l.b16 %v892
        %v920 = vunpack.c.l.b16 %v893
        %v921 = vunpack.c.l.b16 %v894
        %v922 = vunpack.c.l.b16 %v895
        %v923 = vunpack.c.l.b16 %v896
        %v924 = vunpack.c.l.b16 %v897
        %v925 = vunpack.c.l.b16 %v898
        %v926 = vunpack.c.l.b16 %v899
        %v927 = vunpack.c.l.b16 %v900
        %v928 = vpack.c.b16 %v916, %v915
        %v929 = vpack.c.b16 %v918, %v917
        %v930 = vpack.c.b16 %v920, %v919
        %v931 = vpack.c.b16 %v922, %v921
        %v932 = vpack.c.b16 %v924, %v923
        %v933 = vpack.c.b16 %v926, %v925
        %v934 = vpack.c.b16 %v927, %v927
        %vm941 = vcmask 818176
        %v943 = vsel %vm941, %v887, 0
        %vm945 = vcmask 1041408
        %v947 = vsel %vm945, %v934, 0
        %949 = vmatprep.subr.bf16.mxu0 0
        %950 = vmatpush1.bf16.msra.mxu0 0
        %951 = vmatprep.subr.bf16.mxu0 0
        %952 = vmatpush1.bf16.msra.mxu0 %v947
        %953 = vmatprep.subr.bf16.mxu0 0
        %954 = vmatpush1.bf16.msra.mxu0 %v933
        %955 = vmatprep.subr.bf16.mxu0 0
        %956 = vmatpush1.bf16.msra.mxu0 %v932
        %957 = vmatprep.subr.bf16.mxu0 0
        %958 = vmatpush1.bf16.msra.mxu0 %v931
        %959 = vmatprep.subr.bf16.mxu0 0
        %960 = vmatpush1.bf16.msra.mxu0 %v930
        %961 = vmatprep.subr.bf16.mxu0 0
        %962 = vmatpush1.bf16.msra.mxu0 %v929
        %963 = vmatprep.subr.bf16.mxu0 0
        %964 = vmatpush1.bf16.msra.mxu0 %v928
        %965 = vmatprep.subr.bf16.mxu0 0
        %966 = vmatpush2.bf16.msra.mxu0 0
        %967 = vmatprep.subr.bf16.mxu0 0
        %968 = vmatpush2.bf16.msra.mxu0 0
        %969 = vmatprep.subr.bf16.mxu0 0
        %970 = vmatpush2.bf16.msra.mxu0 0
        %971 = vmatprep.subr.bf16.mxu0 0
        %972 = vmatpush2.bf16.msra.mxu0 0
        %973 = vmatprep.subr.bf16.mxu0 0
        %974 = vmatpush2.bf16.msra.mxu0 0
        %975 = vmatprep.subr.bf16.mxu0 0
        %976 = vmatpush2.bf16.msra.mxu0 0
        %977 = vmatprep.subr.bf16.mxu0 0
        %978 = vmatpush2.bf16.msra.mxu0 0
        %979 = vmatprep.subr.bf16.mxu0 0
        %980 = vmatpush2.bf16.msra.mxu0 0
        %981 = vmatprep.mubr.bf16.mxu0 0
        %982 = vmatmul.mubr.bf16.gmra.mxu0 %v943
        %v983 = vpop.f32.mrf.mxu0
        %v984 = vadd.f32 %v901, %v983
        %v985 = vpop.f32.mrf.mxu0
        %v986 = vpop.f32.mrf.mxu0
        %v987 = vpop.f32.mrf.mxu0
        %988 = vdwg.mxu0
        %v989 = vld [vmem:[%s4] sm:$0x1]
        %v990 = vld [vmem:[#allocation5] sm:$0x1]
        %991 = vadd.xlane.f32.xlu0 %v984
        %v992 = vpop.xlane.xlu0 %991
        %v993 = vrcp.pop 128.0
        %v994 = vmul.f32 %v992, %v993
        %v995 = vsub.f32 %v984, %v994
        %v996 = vmul.f32 %v995, %v995
        %997 = vadd.xlane.f32.xlu0 %v996
        %v998 = vpop.xlane.xlu0 %997
        %v999 = vmul.f32 %v998, %v993
        %v1000 = vadd.f32 %v999, 1e-12
        %v1001 = vrsqrt.pop %v1000
        %v1002 = vmul.f32 %v995, %v1001
        %v1004 = vlaneseq
        %v1005 = vshrl.u32 %v1004, 7
        %v1006 = vsub.s32 0, %v1005
        %v1007 = vrot.slane %v989, %v1006
        %v1009 = vmul.f32 %v1002, %v1007
        %v1011 = vlaneseq
        %v1012 = vshrl.u32 %v1011, 7
        %v1013 = vsub.s32 0, %v1012
        %v1014 = vrot.slane %v990, %v1013
        %v1016 = vadd.f32 %v1009, %v1014
        %v1017 = vld [vmem:[%s874] sm:$0x1]
        %v1018 = vsub.f32 1.0, %v1017
        %v1019 = vmul.f32 %v1018, -1e+09
        %v1020 = vld [vmem:[#allocation7] sm:$0xff]
        %v1021 = vld [vmem:[#allocation7 + $0x8] sm:$0xf]
        %v1022 = vld [vmem:[#allocation7 + $0xc] sm:$0xff]
        %v1023 = vld [vmem:[#allocation7 + $0x14] sm:$0xf]
        %v1024 = vld [vmem:[#allocation7 + $0x18] sm:$0xff]
        %v1025 = vld [vmem:[#allocation7 + $0x20] sm:$0xf]
        %v1026 = vld [vmem:[#allocation7 + $0x24] sm:$0xff]
        %v1027 = vld [vmem:[#allocation7 + $0x2c] sm:$0xf]
        %v1028 = vld [vmem:[#allocation7 + $0x30] sm:$0xff]
        %v1029 = vld [vmem:[#allocation7 + $0x38] sm:$0xf]
        %v1030 = vld [vmem:[#allocation7 + $0x3c] sm:$0xff]
        %v1031 = vld [vmem:[#allocation7 + $0x44] sm:$0xf]
        %v1032 = vld [vmem:[#allocation7 + $0x48] sm:$0xff]
        %v1033 = vld [vmem:[#allocation7 + $0x50] sm:$0xf]
        %v1034 = vld [vmem:[#allocation7 + $0x54] sm:$0xff]
        %v1035 = vld [vmem:[#allocation7 + $0x5c] sm:$0xf]
        %v1036 = vld [vmem:[#allocation7 + $0x60] sm:$0xff]
        %v1037 = vld [vmem:[#allocation7 + $0x68] sm:$0xf]
        %v1038 = vld [vmem:[#allocation7 + $0x6c] sm:$0xff]
        %v1039 = vld [vmem:[#allocation7 + $0x74] sm:$0xf]
        %v1040 = vld [vmem:[#allocation7 + $0x78] sm:$0xff]
        %v1041 = vld [vmem:[#allocation7 + $0x80] sm:$0xf]
        %v1042 = vld [vmem:[#allocation7 + $0x84] sm:$0xff]
        %v1043 = vld [vmem:[#allocation7 + $0x8c] sm:$0xf]
        %v1044 = vld [vmem:[#allocation7 + $0x90] sm:$0xff]
        %v1045 = vld [vmem:[#allocation7 + $0x98] sm:$0xf]
        %v1046 = vld [vmem:[#allocation7 + $0x9c] sm:$0xff]
        %v1047 = vld [vmem:[#allocation7 + $0xa4] sm:$0xf]
        %v1048 = vld [vmem:[#allocation7 + $0xa8] sm:$0xff]
        %v1049 = vld [vmem:[#allocation7 + $0xb0] sm:$0xf]
        %v1050 = vld [vmem:[#allocation7 + $0xb4] sm:$0xff]
        %v1051 = vld [vmem:[#allocation7 + $0xbc] sm:$0xf]
        %v1052 = vld [vmem:[#allocation8] sm:$0x7]
        %v1053 = vpack.c.bf16 %v1016, %v1016
        %v1055 = vlaneseq
        %v1056 = vshrl.u32 %v1055, 7
        %v1057 = vsub.s32 0, %v1056
        %v1058 = vrot.slane %v1052, %v1057
        %v1059 = vlaneseq
        %v1060 = vshrl.u32 %v1059, 7
        %v1061 = vsub.s32 1, %v1060
        %v1062 = vrot.slane %v1052, %v1061
        %v1063 = vlaneseq
        %v1064 = vshrl.u32 %v1063, 7
        %v1065 = vsub.s32 2, %v1064
        %v1066 = vrot.slane %v1052, %v1065
        %v1102 = vunpack.c.l.b16 %v1020
        %v1103 = vunpack.c.h.b16 %v1020
        %v1104 = vunpack.c.l.b16 %v1021
        %v1105 = vunpack.c.l.b16 %v1022
        %v1106 = vunpack.c.h.b16 %v1022
        %v1107 = vunpack.c.l.b16 %v1023
        %v1108 = vunpack.c.l.b16 %v1024
        %v1109 = vunpack.c.h.b16 %v1024
        %v1110 = vunpack.c.l.b16 %v1025
        %v1111 = vunpack.c.l.b16 %v1026
        %v1112 = vunpack.c.h.b16 %v1026
        %v1113 = vunpack.c.l.b16 %v1027
        %v1114 = vunpack.c.l.b16 %v1028
        %v1115 = vunpack.c.h.b16 %v1028
        %v1116 = vunpack.c.l.b16 %v1029
        %v1117 = vunpack.c.l.b16 %v1030
        %v1118 = vunpack.c.h.b16 %v1030
        %v1119 = vunpack.c.l.b16 %v1031
        %v1120 = vunpack.c.l.b16 %v1032
        %v1121 = vunpack.c.h.b16 %v1032
        %v1122 = vunpack.c.l.b16 %v1033
        %v1123 = vunpack.c.l.b16 %v1034
        %v1124 = vunpack.c.h.b16 %v1034
        %v1125 = vunpack.c.l.b16 %v1035
        %v1126 = vunpack.c.l.b16 %v1036
        %v1127 = vunpack.c.h.b16 %v1036
        %v1128 = vunpack.c.l.b16 %v1037
        %v1129 = vunpack.c.l.b16 %v1038
        %v1130 = vunpack.c.h.b16 %v1038
        %v1131 = vunpack.c.l.b16 %v1039
        %v1132 = vunpack.c.l.b16 %v1040
        %v1133 = vunpack.c.h.b16 %v1040
        %v1134 = vunpack.c.l.b16 %v1041
        %v1135 = vunpack.c.l.b16 %v1042
        %v1136 = vunpack.c.h.b16 %v1042
        %v1137 = vunpack.c.l.b16 %v1043
        %v1138 = vunpack.c.l.b16 %v1044
        %v1139 = vunpack.c.h.b16 %v1044
        %v1140 = vunpack.c.l.b16 %v1045
        %v1141 = vunpack.c.l.b16 %v1046
        %v1142 = vunpack.c.h.b16 %v1046
        %v1143 = vunpack.c.l.b16 %v1047
        %v1144 = vunpack.c.l.b16 %v1048
        %v1145 = vunpack.c.h.b16 %v1048
        %v1146 = vunpack.c.l.b16 %v1049
        %v1147 = vunpack.c.l.b16 %v1050
        %v1148 = vunpack.c.h.b16 %v1050
        %v1149 = vunpack.c.l.b16 %v1051
        %v1150 = vpack.c.b16 %v1105, %v1102
        %v1151 = vpack.c.b16 %v1106, %v1103
        %v1152 = vpack.c.b16 %v1107, %v1104
        %v1153 = vpack.c.b16 %v1111, %v1108
        %v1154 = vpack.c.b16 %v1112, %v1109
        %v1155 = vpack.c.b16 %v1113, %v1110
        %v1156 = vpack.c.b16 %v1117, %v1114
        %v1157 = vpack.c.b16 %v1118, %v1115
        %v1158 = vpack.c.b16 %v1119, %v1116
        %v1159 = vpack.c.b16 %v1123, %v1120
        %v1160 = vpack.c.b16 %v1124, %v1121
        %v1161 = vpack.c.b16 %v1125, %v1122
        %v1162 = vpack.c.b16 %v1129, %v1126
        %v1163 = vpack.c.b16 %v1130, %v1127
        %v1164 = vpack.c.b16 %v1131, %v1128
        %v1165 = vpack.c.b16 %v1135, %v1132
        %v1166 = vpack.c.b16 %v1136, %v1133
        %v1167 = vpack.c.b16 %v1137, %v1134
        %v1168 = vpack.c.b16 %v1141, %v1138
        %v1169 = vpack.c.b16 %v1142, %v1139
        %v1170 = vpack.c.b16 %v1143, %v1140
        %v1171 = vpack.c.b16 %v1147, %v1144
        %v1172 = vpack.c.b16 %v1148, %v1145
        %v1173 = vpack.c.b16 %v1149, %v1146
        %1198 = vmatprep.subr.bf16.mxu0 %v1172
        %1199 = vmatpush1.bf16.msra.mxu0 %v1171
        %1200 = vmatprep.subr.bf16.mxu0 %v1169
        %1201 = vmatpush1.bf16.msra.mxu0 %v1168
        %1202 = vmatprep.subr.bf16.mxu0 %v1166
        %1203 = vmatpush1.bf16.msra.mxu0 %v1165
        %1204 = vmatprep.subr.bf16.mxu0 %v1163
        %1205 = vmatpush1.bf16.msra.mxu0 %v1162
        %1206 = vmatprep.subr.bf16.mxu0 %v1160
        %1207 = vmatpush1.bf16.msra.mxu0 %v1159
        %1208 = vmatprep.subr.bf16.mxu0 %v1157
        %1209 = vmatpush1.bf16.msra.mxu0 %v1156
        %1210 = vmatprep.subr.bf16.mxu0 %v1154
        %1211 = vmatpush1.bf16.msra.mxu0 %v1153
        %1212 = vmatprep.subr.bf16.mxu0 %v1151
        %1213 = vmatpush1.bf16.msra.mxu0 %v1150
        %1214 = vmatprep.subr.bf16.mxu0 0
        %1215 = vmatpush2.bf16.msra.mxu0 0
        %1216 = vmatprep.subr.bf16.mxu0 0
        %1217 = vmatpush2.bf16.msra.mxu0 0
        %1218 = vmatprep.subr.bf16.mxu0 0
        %1219 = vmatpush2.bf16.msra.mxu0 0
        %1220 = vmatprep.subr.bf16.mxu0 0
        %1221 = vmatpush2.bf16.msra.mxu0 0
        %1222 = vmatprep.subr.bf16.mxu0 0
        %1223 = vmatpush2.bf16.msra.mxu0 0
        %1224 = vmatprep.subr.bf16.mxu0 0
        %1225 = vmatpush2.bf16.msra.mxu0 0
        %1226 = vmatprep.subr.bf16.mxu0 0
        %1227 = vmatpush2.bf16.msra.mxu0 0
        %1228 = vmatprep.subr.bf16.mxu0 0
        %1229 = vmatpush2.bf16.msra.mxu0 0
        %1230 = vmatprep.mubr.bf16.mxu0 0
        %1231 = vmatmul.mubr.bf16.gmra.mxu0 %v1053
        %v1232 = vpop.f32.mrf.mxu0
        %v1233 = vadd.f32 %v1058, %v1232
        %v1234 = vpop.f32.mrf.mxu0
        %v1235 = vadd.f32 %v1062, %v1234
        %v1236 = vpop.f32.mrf.mxu0
        %v1237 = vpop.f32.mrf.mxu0
        %1238 = vdwg.mxu0
        %1239 = vmatprep.subr.bf16.mxu0 0
        %1240 = vmatpush1.bf16.msra.mxu0 %v1173
        %1241 = vmatprep.subr.bf16.mxu0 0
        %1242 = vmatpush1.bf16.msra.mxu0 %v1170
        %1243 = vmatprep.subr.bf16.mxu0 0
        %1244 = vmatpush1.bf16.msra.mxu0 %v1167
        %1245 = vmatprep.subr.bf16.mxu0 0
        %1246 = vmatpush1.bf16.msra.mxu0 %v1164
        %1247 = vmatprep.subr.bf16.mxu0 0
        %1248 = vmatpush1.bf16.msra.mxu0 %v1161
        %1249 = vmatprep.subr.bf16.mxu0 0
        %1250 = vmatpush1.bf16.msra.mxu0 %v1158
        %1251 = vmatprep.subr.bf16.mxu0 0
        %1252 = vmatpush1.bf16.msra.mxu0 %v1155
        %1253 = vmatprep.subr.bf16.mxu0 0
        %1254 = vmatpush1.bf16.msra.mxu0 %v1152
        %1255 = vmatprep.subr.bf16.mxu0 0
        %1256 = vmatpush2.bf16.msra.mxu0 0
        %1257 = vmatprep.subr.bf16.mxu0 0
        %1258 = vmatpush2.bf16.msra.mxu0 0
        %1259 = vmatprep.subr.bf16.mxu0 0
        %1260 = vmatpush2.bf16.msra.mxu0 0
        %1261 = vmatprep.subr.bf16.mxu0 0
        %1262 = vmatpush2.bf16.msra.mxu0 0
        %1263 = vmatprep.subr.bf16.mxu0 0
        %1264 = vmatpush2.bf16.msra.mxu0 0
        %1265 = vmatprep.subr.bf16.mxu0 0
        %1266 = vmatpush2.bf16.msra.mxu0 0
        %1267 = vmatprep.subr.bf16.mxu0 0
        %1268 = vmatpush2.bf16.msra.mxu0 0
        %1269 = vmatprep.subr.bf16.mxu0 0
        %1270 = vmatpush2.bf16.msra.mxu0 0
        %1271 = vmatprep.mubr.bf16.mxu0 0
        %1272 = vmatmul.mubr.bf16.gmra.mxu0 %v1053
        %v1273 = vpop.f32.mrf.mxu0
        %v1274 = vadd.f32 %v1066, %v1273
        %v1275 = vpop.f32.mrf.mxu0
        %v1276 = vpop.f32.mrf.mxu0
        %v1277 = vpop.f32.mrf.mxu0
        %1278 = vdwg.mxu0
        %vm1279 = vcmask 261120
        %v1281 = vsel %vm1279, %v1233, 0
        %v1284 = vsel %vm1279, %v1235, 0
        %1286 = vmatprep.subr.mxu0 0.0
        %1287 = vmatpush1.xpose.msra.mxu0 0.0
        %1288 = vmatprep.subr.mxu0 0.0
        %1289 = vmatpush1.xpose.msra.mxu0 0.0
        %1290 = vmatprep.subr.mxu0 0.0
        %1291 = vmatpush1.xpose.msra.mxu0 0.0
        %1292 = vmatprep.subr.mxu0 0.0
        %1293 = vmatpush1.xpose.msra.mxu0 0.0
        %1294 = vmatprep.subr.mxu0 0.0
        %1295 = vmatpush1.xpose.msra.mxu0 0.0
        %1296 = vmatprep.subr.mxu0 0.0
        %1297 = vmatpush1.xpose.msra.mxu0 0.0
        %1298 = vmatprep.subr.mxu0 0.0
        %1299 = vmatpush1.xpose.msra.mxu0 0.0
        %1300 = vmatprep.subr.mxu0 0.0
        %1301 = vmatpush1.xpose.msra.mxu0 0.0
        %1302 = vmatprep.subr.mxu0 0.0
        %1303 = vmatpush1.xpose.msra.mxu0 0.0
        %1304 = vmatprep.subr.mxu0 0.0
        %1305 = vmatpush1.xpose.msra.mxu0 0.0
        %1306 = vmatprep.subr.mxu0 0.0
        %1307 = vmatpush1.xpose.msra.mxu0 0.0
        %1308 = vmatprep.subr.mxu0 0.0
        %1309 = vmatpush1.xpose.msra.mxu0 0.0
        %1310 = vmatprep.subr.mxu0 0.0
        %1311 = vmatpush1.xpose.msra.mxu0 0.0
        %1312 = vmatprep.subr.mxu0 0.0
        %1313 = vmatpush1.xpose.msra.mxu0 0.0
        %1314 = vmatprep.subr.mxu0 0.0
        %1315 = vmatpush1.xpose.msra.mxu0 0.0
        %1316 = vmatprep.subr.mxu0 0.0
        %1317 = vmatpush1.xpose.msra.mxu0 %v1284
        %1318 = vmatprep.subr.mxu0 0.0
        %1319 = vmatpush2.xpose.msra.mxu0 0.0
        %1320 = vmatprep.subr.mxu0 0.0
        %1321 = vmatpush2.xpose.msra.mxu0 0.0
        %1322 = vmatprep.subr.mxu0 0.0
        %1323 = vmatpush2.xpose.msra.mxu0 0.0
        %1324 = vmatprep.subr.mxu0 0.0
        %1325 = vmatpush2.xpose.msra.mxu0 0.0
        %1326 = vmatprep.subr.mxu0 0.0
        %1327 = vmatpush2.xpose.msra.mxu0 0.0
        %1328 = vmatprep.subr.mxu0 0.0
        %1329 = vmatpush2.xpose.msra.mxu0 0.0
        %1330 = vmatprep.subr.mxu0 0.0
        %1331 = vmatpush2.xpose.msra.mxu0 0.0
        %1332 = vmatprep.subr.mxu0 0.0
        %1333 = vmatpush2.xpose.msra.mxu0 0.0
        %1334 = vmatprep.subr.mxu0 0.0
        %1335 = vmatpush2.xpose.msra.mxu0 0.0
        %1336 = vmatprep.subr.mxu0 0.0
        %1337 = vmatpush2.xpose.msra.mxu0 0.0
        %1338 = vmatprep.subr.mxu0 0.0
        %1339 = vmatpush2.xpose.msra.mxu0 0.0
        %1340 = vmatprep.subr.mxu0 0.0
        %1341 = vmatpush2.xpose.msra.mxu0 0.0
        %1342 = vmatprep.subr.mxu0 0.0
        %1343 = vmatpush2.xpose.msra.mxu0 0.0
        %1344 = vmatprep.subr.mxu0 0.0
        %1345 = vmatpush2.xpose.msra.mxu0 0.0
        %1346 = vmatprep.subr.mxu0 0.0
        %1347 = vmatpush2.xpose.msra.mxu0 0.0
        %1348 = vmatprep.subr.mxu0 0.0
        %1349 = vmatpush2.xpose.msra.mxu0 0.0
        %1350 = vmatprep.mubr.f32.mxu0 0.0
        %1351 = vmatmul.mubr.f32.gmra.mxu0 %v1281
        %v1352 = vpop.f32.mrf.mxu0
        %v1353 = vadd.f32 0.0, %v1352
        %v1354 = vpop.f32.mrf.mxu0
        %1355 = vdwg.mxu0
        %v1356 = vmul.f32 %v1353, 0.17677669
        %v1358 = vlaneseq
        %v1359 = vshrl.u32 %v1358, 7
        %v1360 = vsub.s32 0, %v1359
        %v1361 = vrot.slane %v1019, %v1360
        %v1363 = vadd.f32 %v1356, %v1361
        %vm1364 = vcmask 64512
        %v1365 = vsel %vm1364, %v1363, -inf
        %1366 = vmax.xlane.f32.xlu0 %v1365
        %v1367 = vpop.xlane.xlu0 %1366
        %v1368 = vsub.f32 %v1363, %v1367
        %v1369 = vmul.f32 %v1368, 1.442695
        %v1370 = vpow.pop %v1369
        %v1371 = vsel %vm1364, %v1370, 0.0
        %1372 = vadd.xlane.f32.xlu0 %v1371
        %v1373 = vpop.xlane.xlu0 %1372
        %v1374 = vrcp.pop %v1373
        %v1375 = vmul.f32 %v1370, %v1374
        %v1377 = vsel %vm1364, %v1375, 0
        %1379 = vmatprep.subr.mxu0 0.0
        %1380 = vmatpush1.msra.mxu0 0.0
        %1381 = vmatprep.subr.mxu0 0.0
        %1382 = vmatpush1.msra.mxu0 0.0
        %1383 = vmatprep.subr.mxu0 0.0
        %1384 = vmatpush1.msra.mxu0 0.0
        %1385 = vmatprep.subr.mxu0 0.0
        %1386 = vmatpush1.msra.mxu0 0.0
        %1387 = vmatprep.subr.mxu0 0.0
        %1388 = vmatpush1.msra.mxu0 0.0
        %1389 = vmatprep.subr.mxu0 0.0
        %1390 = vmatpush1.msra.mxu0 0.0
        %1391 = vmatprep.subr.mxu0 0.0
        %1392 = vmatpush1.msra.mxu0 0.0
        %1393 = vmatprep.subr.mxu0 0.0
        %1394 = vmatpush1.msra.mxu0 0.0
        %1395 = vmatprep.subr.mxu0 0.0
        %1396 = vmatpush1.msra.mxu0 0.0
        %1397 = vmatprep.subr.mxu0 0.0
        %1398 = vmatpush1.msra.mxu0 0.0
        %1399 = vmatprep.subr.mxu0 0.0
        %1400 = vmatpush1.msra.mxu0 0.0
        %1401 = vmatprep.subr.mxu0 0.0
        %1402 = vmatpush1.msra.mxu0 0.0
        %1403 = vmatprep.subr.mxu0 0.0
        %1404 = vmatpush1.msra.mxu0 0.0
        %1405 = vmatprep.subr.mxu0 0.0
        %1406 = vmatpush1.msra.mxu0 0.0
        %1407 = vmatprep.subr.mxu0 0.0
        %1408 = vmatpush1.msra.mxu0 0.0
        %1409 = vmatprep.subr.mxu0 0.0
        %1410 = vmatpush1.msra.mxu0 %v1274
        %1411 = vmatprep.subr.mxu0 0.0
        %1412 = vmatpush2.msra.mxu0 0.0
        %1413 = vmatprep.subr.mxu0 0.0
        %1414 = vmatpush2.msra.mxu0 0.0
        %1415 = vmatprep.subr.mxu0 0.0
        %1416 = vmatpush2.msra.mxu0 0.0
        %1417 = vmatprep.subr.mxu0 0.0
        %1418 = vmatpush2.msra.mxu0 0.0
        %1419 = vmatprep.subr.mxu0 0.0
        %1420 = vmatpush2.msra.mxu0 0.0
        %1421 = vmatprep.subr.mxu0 0.0
        %1422 = vmatpush2.msra.mxu0 0.0
        %1423 = vmatprep.subr.mxu0 0.0
        %1424 = vmatpush2.msra.mxu0 0.0
        %1425 = vmatprep.subr.mxu0 0.0
        %1426 = vmatpush2.msra.mxu0 0.0
        %1427 = vmatprep.subr.mxu0 0.0
        %1428 = vmatpush2.msra.mxu0 0.0
        %1429 = vmatprep.subr.mxu0 0.0
        %1430 = vmatpush2.msra.mxu0 0.0
        %1431 = vmatprep.subr.mxu0 0.0
        %1432 = vmatpush2.msra.mxu0 0.0
        %1433 = vmatprep.subr.mxu0 0.0
        %1434 = vmatpush2.msra.mxu0 0.0
        %1435 = vmatprep.subr.mxu0 0.0
        %1436 = vmatpush2.msra.mxu0 0.0
        %1437 = vmatprep.subr.mxu0 0.0
        %1438 = vmatpush2.msra.mxu0 0.0
        %1439 = vmatprep.subr.mxu0 0.0
        %1440 = vmatpush2.msra.mxu0 0.0
        %1441 = vmatprep.subr.mxu0 0.0
        %1442 = vmatpush2.msra.mxu0 0.0
        %1443 = vmatprep.mubr.f32.mxu0 0.0
        %1444 = vmatmul.mubr.f32.gmra.mxu0 %v1377
        %v1445 = vpop.f32.mrf.mxu0
        %v1446 = vadd.f32 0.0, %v1445
        %v1447 = vpop.f32.mrf.mxu0
        %1448 = vdwg.mxu0
        %1449 = vrot.lane.b32.xlu0 %v1233, 96
        %v1450 = vpop.permute.xlu0 %1449
        %1451 = vrot.lane.b32.xlu0 %v1235, 96
        %v1452 = vpop.permute.xlu0 %1451
        %v1453 = vsel %vm1279, %v1450, 0
        %v1455 = vsel %vm1279, %v1452, 0
        %1457 = vmatprep.subr.mxu0 0.0
        %1458 = vmatpush1.xpose.msra.mxu0 0.0
        %1459 = vmatprep.subr.mxu0 0.0
        %1460 = vmatpush1.xpose.msra.mxu0 0.0
        %1461 = vmatprep.subr.mxu0 0.0
        %1462 = vmatpush1.xpose.msra.mxu0 0.0
        %1463 = vmatprep.subr.mxu0 0.0
        %1464 = vmatpush1.xpose.msra.mxu0 0.0
        %1465 = vmatprep.subr.mxu0 0.0
        %1466 = vmatpush1.xpose.msra.mxu0 0.0
        %1467 = vmatprep.subr.mxu0 0.0
        %1468 = vmatpush1.xpose.msra.mxu0 0.0
        %1469 = vmatprep.subr.mxu0 0.0
        %1470 = vmatpush1.xpose.msra.mxu0 0.0
        %1471 = vmatprep.subr.mxu0 0.0
        %1472 = vmatpush1.xpose.msra.mxu0 0.0
        %1473 = vmatprep.subr.mxu0 0.0
        %1474 = vmatpush1.xpose.msra.mxu0 0.0
        %1475 = vmatprep.subr.mxu0 0.0
        %1476 = vmatpush1.xpose.msra.mxu0 0.0
        %1477 = vmatprep.subr.mxu0 0.0
        %1478 = vmatpush1.xpose.msra.mxu0 0.0
        %1479 = vmatprep.subr.mxu0 0.0
        %1480 = vmatpush1.xpose.msra.mxu0 0.0
        %1481 = vmatprep.subr.mxu0 0.0
        %1482 = vmatpush1.xpose.msra.mxu0 0.0
        %1483 = vmatprep.subr.mxu0 0.0
        %1484 = vmatpush1.xpose.msra.mxu0 0.0
        %1485 = vmatprep.subr.mxu0 0.0
        %1486 = vmatpush1.xpose.msra.mxu0 0.0
        %1487 = vmatprep.subr.mxu0 0.0
        %1488 = vmatpush1.xpose.msra.mxu0 %v1455
        %1489 = vmatprep.subr.mxu0 0.0
        %1490 = vmatpush2.xpose.msra.mxu0 0.0
        %1491 = vmatprep.subr.mxu0 0.0
        %1492 = vmatpush2.xpose.msra.mxu0 0.0
        %1493 = vmatprep.subr.mxu0 0.0
        %1494 = vmatpush2.xpose.msra.mxu0 0.0
        %1495 = vmatprep.subr.mxu0 0.0
        %1496 = vmatpush2.xpose.msra.mxu0 0.0
        %1497 = vmatprep.subr.mxu0 0.0
        %1498 = vmatpush2.xpose.msra.mxu0 0.0
        %1499 = vmatprep.subr.mxu0 0.0
        %1500 = vmatpush2.xpose.msra.mxu0 0.0
        %1501 = vmatprep.subr.mxu0 0.0
        %1502 = vmatpush2.xpose.msra.mxu0 0.0
        %1503 = vmatprep.subr.mxu0 0.0
        %1504 = vmatpush2.xpose.msra.mxu0 0.0
        %1505 = vmatprep.subr.mxu0 0.0
        %1506 = vmatpush2.xpose.msra.mxu0 0.0
        %1507 = vmatprep.subr.mxu0 0.0
        %1508 = vmatpush2.xpose.msra.mxu0 0.0
        %1509 = vmatprep.subr.mxu0 0.0
        %1510 = vmatpush2.xpose.msra.mxu0 0.0
        %1511 = vmatprep.subr.mxu0 0.0
        %1512 = vmatpush2.xpose.msra.mxu0 0.0
        %1513 = vmatprep.subr.mxu0 0.0
        %1514 = vmatpush2.xpose.msra.mxu0 0.0
        %1515 = vmatprep.subr.mxu0 0.0
        %1516 = vmatpush2.xpose.msra.mxu0 0.0
        %1517 = vmatprep.subr.mxu0 0.0
        %1518 = vmatpush2.xpose.msra.mxu0 0.0
        %1519 = vmatprep.subr.mxu0 0.0
        %1520 = vmatpush2.xpose.msra.mxu0 0.0
        %1521 = vmatprep.mubr.f32.mxu0 0.0
        %1522 = vmatmul.mubr.f32.gmra.mxu0 %v1453
        %v1523 = vpop.f32.mrf.mxu0
        %v1524 = vadd.f32 0.0, %v1523
        %v1525 = vpop.f32.mrf.mxu0
        %1526 = vdwg.mxu0
        %v1527 = vmul.f32 %v1524, 0.17677669
        %v1528 = vadd.f32 %v1527, %v1361
        %v1529 = vsel %vm1364, %v1528, -inf
        %1530 = vmax.xlane.f32.xlu0 %v1529
        %v1531 = vpop.xlane.xlu0 %1530
        %v1532 = vsub.f32 %v1528, %v1531
        %v1533 = vmul.f32 %v1532, 1.442695
        %v1534 = vpow.pop %v1533
        %v1535 = vsel %vm1364, %v1534, 0.0
        %1536 = vadd.xlane.f32.xlu0 %v1535
        %v1537 = vpop.xlane.xlu0 %1536
        %v1538 = vrcp.pop %v1537
        %v1539 = vmul.f32 %v1534, %v1538
        %1541 = vrot.lane.b32.xlu0 %v1274, 96
        %v1542 = vpop.permute.xlu0 %1541
        %v1545 = vsel %vm1364, %v1539, 0
        %1547 = vmatprep.subr.mxu0 0.0
        %1548 = vmatpush1.msra.mxu0 0.0
        %1549 = vmatprep.subr.mxu0 0.0
        %1550 = vmatpush1.msra.mxu0 0.0
        %1551 = vmatprep.subr.mxu0 0.0
        %1552 = vmatpush1.msra.mxu0 0.0
        %1553 = vmatprep.subr.mxu0 0.0
        %1554 = vmatpush1.msra.mxu0 0.0
        %1555 = vmatprep.subr.mxu0 0.0
        %1556 = vmatpush1.msra.mxu0 0.0
        %1557 = vmatprep.subr.mxu0 0.0
        %1558 = vmatpush1.msra.mxu0 0.0
        %1559 = vmatprep.subr.mxu0 0.0
        %1560 = vmatpush1.msra.mxu0 0.0
        %1561 = vmatprep.subr.mxu0 0.0
        %1562 = vmatpush1.msra.mxu0 0.0
        %1563 = vmatprep.subr.mxu0 0.0
        %1564 = vmatpush1.msra.mxu0 0.0
        %1565 = vmatprep.subr.mxu0 0.0
        %1566 = vmatpush1.msra.mxu0 0.0
        %1567 = vmatprep.subr.mxu0 0.0
        %1568 = vmatpush1.msra.mxu0 0.0
        %1569 = vmatprep.subr.mxu0 0.0
        %1570 = vmatpush1.msra.mxu0 0.0
        %1571 = vmatprep.subr.mxu0 0.0
        %1572 = vmatpush1.msra.mxu0 0.0
        %1573 = vmatprep.subr.mxu0 0.0
        %1574 = vmatpush1.msra.mxu0 0.0
        %1575 = vmatprep.subr.mxu0 0.0
        %1576 = vmatpush1.msra.mxu0 0.0
        %1577 = vmatprep.subr.mxu0 0.0
        %1578 = vmatpush1.msra.mxu0 %v1542
        %1579 = vmatprep.subr.mxu0 0.0
        %1580 = vmatpush2.msra.mxu0 0.0
        %1581 = vmatprep.subr.mxu0 0.0
        %1582 = vmatpush2.msra.mxu0 0.0
        %1583 = vmatprep.subr.mxu0 0.0
        %1584 = vmatpush2.msra.mxu0 0.0
        %1585 = vmatprep.subr.mxu0 0.0
        %1586 = vmatpush2.msra.mxu0 0.0
        %1587 = vmatprep.subr.mxu0 0.0
        %1588 = vmatpush2.msra.mxu0 0.0
        %1589 = vmatprep.subr.mxu0 0.0
        %1590 = vmatpush2.msra.mxu0 0.0
        %1591 = vmatprep.subr.mxu0 0.0
        %1592 = vmatpush2.msra.mxu0 0.0
        %1593 = vmatprep.subr.mxu0 0.0
        %1594 = vmatpush2.msra.mxu0 0.0
        %1595 = vmatprep.subr.mxu0 0.0
        %1596 = vmatpush2.msra.mxu0 0.0
        %1597 = vmatprep.subr.mxu0 0.0
        %1598 = vmatpush2.msra.mxu0 0.0
        %1599 = vmatprep.subr.mxu0 0.0
        %1600 = vmatpush2.msra.mxu0 0.0
        %1601 = vmatprep.subr.mxu0 0.0
        %1602 = vmatpush2.msra.mxu0 0.0
        %1603 = vmatprep.subr.mxu0 0.0
        %1604 = vmatpush2.msra.mxu0 0.0
        %1605 = vmatprep.subr.mxu0 0.0
        %1606 = vmatpush2.msra.mxu0 0.0
        %1607 = vmatprep.subr.mxu0 0.0
        %1608 = vmatpush2.msra.mxu0 0.0
        %1609 = vmatprep.subr.mxu0 0.0
        %1610 = vmatpush2.msra.mxu0 0.0
        %1611 = vmatprep.mubr.f32.mxu0 0.0
        %1612 = vmatmul.mubr.f32.gmra.mxu0 %v1545
        %v1613 = vpop.f32.mrf.mxu0
        %v1614 = vadd.f32 0.0, %v1613
        %v1615 = vpop.f32.mrf.mxu0
        %1616 = vdwg.mxu0
        %1617 = vrot.lane.b32.xlu0 %v1233, 64
        %v1618 = vpop.permute.xlu0 %1617
        %1619 = vrot.lane.b32.xlu0 %v1235, 64
        %v1620 = vpop.permute.xlu0 %1619
        %v1621 = vsel %vm1279, %v1618, 0
        %v1623 = vsel %vm1279, %v1620, 0
        %1625 = vmatprep.subr.mxu0 0.0
        %1626 = vmatpush1.xpose.msra.mxu0 0.0
        %1627 = vmatprep.subr.mxu0 0.0
        %1628 = vmatpush1.xpose.msra.mxu0 0.0
        %1629 = vmatprep.subr.mxu0 0.0
        %1630 = vmatpush1.xpose.msra.mxu0 0.0
        %1631 = vmatprep.subr.mxu0 0.0
        %1632 = vmatpush1.xpose.msra.mxu0 0.0
        %1633 = vmatprep.subr.mxu0 0.0
        %1634 = vmatpush1.xpose.msra.mxu0 0.0
        %1635 = vmatprep.subr.mxu0 0.0
        %1636 = vmatpush1.xpose.msra.mxu0 0.0
        %1637 = vmatprep.subr.mxu0 0.0
        %1638 = vmatpush1.xpose.msra.mxu0 0.0
        %1639 = vmatprep.subr.mxu0 0.0
        %1640 = vmatpush1.xpose.msra.mxu0 0.0
        %1641 = vmatprep.subr.mxu0 0.0
        %1642 = vmatpush1.xpose.msra.mxu0 0.0
        %1643 = vmatprep.subr.mxu0 0.0
        %1644 = vmatpush1.xpose.msra.mxu0 0.0
        %1645 = vmatprep.subr.mxu0 0.0
        %1646 = vmatpush1.xpose.msra.mxu0 0.0
        %1647 = vmatprep.subr.mxu0 0.0
        %1648 = vmatpush1.xpose.msra.mxu0 0.0
        %1649 = vmatprep.subr.mxu0 0.0
        %1650 = vmatpush1.xpose.msra.mxu0 0.0
        %1651 = vmatprep.subr.mxu0 0.0
        %1652 = vmatpush1.xpose.msra.mxu0 0.0
        %1653 = vmatprep.subr.mxu0 0.0
        %1654 = vmatpush1.xpose.msra.mxu0 0.0
        %1655 = vmatprep.subr.mxu0 0.0
        %1656 = vmatpush1.xpose.msra.mxu0 %v1623
        %1657 = vmatprep.subr.mxu0 0.0
        %1658 = vmatpush2.xpose.msra.mxu0 0.0
        %1659 = vmatprep.subr.mxu0 0.0
        %1660 = vmatpush2.xpose.msra.mxu0 0.0
        %1661 = vmatprep.subr.mxu0 0.0
        %1662 = vmatpush2.xpose.msra.mxu0 0.0
        %1663 = vmatprep.subr.mxu0 0.0
        %1664 = vmatpush2.xpose.msra.mxu0 0.0
        %1665 = vmatprep.subr.mxu0 0.0
        %1666 = vmatpush2.xpose.msra.mxu0 0.0
        %1667 = vmatprep.subr.mxu0 0.0
        %1668 = vmatpush2.xpose.msra.mxu0 0.0
        %1669 = vmatprep.subr.mxu0 0.0
        %1670 = vmatpush2.xpose.msra.mxu0 0.0
        %1671 = vmatprep.subr.mxu0 0.0
        %1672 = vmatpush2.xpose.msra.mxu0 0.0
        %1673 = vmatprep.subr.mxu0 0.0
        %1674 = vmatpush2.xpose.msra.mxu0 0.0
        %1675 = vmatprep.subr.mxu0 0.0
        %1676 = vmatpush2.xpose.msra.mxu0 0.0
        %1677 = vmatprep.subr.mxu0 0.0
        %1678 = vmatpush2.xpose.msra.mxu0 0.0
        %1679 = vmatprep.subr.mxu0 0.0
        %1680 = vmatpush2.xpose.msra.mxu0 0.0
        %1681 = vmatprep.subr.mxu0 0.0
        %1682 = vmatpush2.xpose.msra.mxu0 0.0
        %1683 = vmatprep.subr.mxu0 0.0
        %1684 = vmatpush2.xpose.msra.mxu0 0.0
        %1685 = vmatprep.subr.mxu0 0.0
        %1686 = vmatpush2.xpose.msra.mxu0 0.0
        %1687 = vmatprep.subr.mxu0 0.0
        %1688 = vmatpush2.xpose.msra.mxu0 0.0
        %1689 = vmatprep.mubr.f32.mxu0 0.0
        %1690 = vmatmul.mubr.f32.gmra.mxu0 %v1621
        %v1691 = vpop.f32.mrf.mxu0
        %v1692 = vadd.f32 0.0, %v1691
        %v1693 = vpop.f32.mrf.mxu0
        %1694 = vdwg.mxu0
        %v1695 = vmul.f32 %v1692, 0.17677669
        %v1696 = vadd.f32 %v1695, %v1361
        %v1697 = vsel %vm1364, %v1696, -inf
        %1698 = vmax.xlane.f32.xlu0 %v1697
        %v1699 = vpop.xlane.xlu0 %1698
        %v1700 = vsub.f32 %v1696, %v1699
        %v1701 = vmul.f32 %v1700, 1.442695
        %v1702 = vpow.pop %v1701
        %v1703 = vsel %vm1364, %v1702, 0.0
        %1704 = vadd.xlane.f32.xlu0 %v1703
        %v1705 = vpop.xlane.xlu0 %1704
        %v1706 = vrcp.pop %v1705
        %v1707 = vmul.f32 %v1702, %v1706
        %1708 = vrot.lane.b32.xlu0 %v1274, 64
        %v1709 = vpop.permute.xlu0 %1708
        %v1712 = vsel %vm1364, %v1707, 0
        %1714 = vmatprep.subr.mxu0 0.0
        %1715 = vmatpush1.msra.mxu0 0.0
        %1716 = vmatprep.subr.mxu0 0.0
        %1717 = vmatpush1.msra.mxu0 0.0
        %1718 = vmatprep.subr.mxu0 0.0
        %1719 = vmatpush1.msra.mxu0 0.0
        %1720 = vmatprep.subr.mxu0 0.0
        %1721 = vmatpush1.msra.mxu0 0.0
        %1722 = vmatprep.subr.mxu0 0.0
        %1723 = vmatpush1.msra.mxu0 0.0
        %1724 = vmatprep.subr.mxu0 0.0
        %1725 = vmatpush1.msra.mxu0 0.0
        %1726 = vmatprep.subr.mxu0 0.0
        %1727 = vmatpush1.msra.mxu0 0.0
        %1728 = vmatprep.subr.mxu0 0.0
        %1729 = vmatpush1.msra.mxu0 0.0
        %1730 = vmatprep.subr.mxu0 0.0
        %1731 = vmatpush1.msra.mxu0 0.0
        %1732 = vmatprep.subr.mxu0 0.0
        %1733 = vmatpush1.msra.mxu0 0.0
        %1734 = vmatprep.subr.mxu0 0.0
        %1735 = vmatpush1.msra.mxu0 0.0
        %1736 = vmatprep.subr.mxu0 0.0
        %1737 = vmatpush1.msra.mxu0 0.0
        %1738 = vmatprep.subr.mxu0 0.0
        %1739 = vmatpush1.msra.mxu0 0.0
        %1740 = vmatprep.subr.mxu0 0.0
        %1741 = vmatpush1.msra.mxu0 0.0
        %1742 = vmatprep.subr.mxu0 0.0
        %1743 = vmatpush1.msra.mxu0 0.0
        %1744 = vmatprep.subr.mxu0 0.0
        %1745 = vmatpush1.msra.mxu0 %v1709
        %1746 = vmatprep.subr.mxu0 0.0
        %1747 = vmatpush2.msra.mxu0 0.0
        %1748 = vmatprep.subr.mxu0 0.0
        %1749 = vmatpush2.msra.mxu0 0.0
        %1750 = vmatprep.subr.mxu0 0.0
        %1751 = vmatpush2.msra.mxu0 0.0
        %1752 = vmatprep.subr.mxu0 0.0
        %1753 = vmatpush2.msra.mxu0 0.0
        %1754 = vmatprep.subr.mxu0 0.0
        %1755 = vmatpush2.msra.mxu0 0.0
        %1756 = vmatprep.subr.mxu0 0.0
        %1757 = vmatpush2.msra.mxu0 0.0
        %1758 = vmatprep.subr.mxu0 0.0
        %1759 = vmatpush2.msra.mxu0 0.0
        %1760 = vmatprep.subr.mxu0 0.0
        %1761 = vmatpush2.msra.mxu0 0.0
        %1762 = vmatprep.subr.mxu0 0.0
        %1763 = vmatpush2.msra.mxu0 0.0
        %1764 = vmatprep.subr.mxu0 0.0
        %1765 = vmatpush2.msra.mxu0 0.0
        %1766 = vmatprep.subr.mxu0 0.0
        %1767 = vmatpush2.msra.mxu0 0.0
        %1768 = vmatprep.subr.mxu0 0.0
        %1769 = vmatpush2.msra.mxu0 0.0
        %1770 = vmatprep.subr.mxu0 0.0
        %1771 = vmatpush2.msra.mxu0 0.0
        %1772 = vmatprep.subr.mxu0 0.0
        %1773 = vmatpush2.msra.mxu0 0.0
        %1774 = vmatprep.subr.mxu0 0.0
        %1775 = vmatpush2.msra.mxu0 0.0
        %1776 = vmatprep.subr.mxu0 0.0
        %1777 = vmatpush2.msra.mxu0 0.0
        %1778 = vmatprep.mubr.f32.mxu0 0.0
        %1779 = vmatmul.mubr.f32.gmra.mxu0 %v1712
        %v1780 = vpop.f32.mrf.mxu0
        %v1781 = vadd.f32 0.0, %v1780
        %v1782 = vpop.f32.mrf.mxu0
        %1783 = vdwg.mxu0
        %1784 = vrot.lane.b32.xlu0 %v1233, 32
        %v1785 = vpop.permute.xlu0 %1784
        %1786 = vrot.lane.b32.xlu0 %v1235, 32
        %v1787 = vpop.permute.xlu0 %1786
        %v1788 = vsel %vm1279, %v1785, 0
        %v1790 = vsel %vm1279, %v1787, 0
        %1792 = vmatprep.subr.mxu0 0.0
        %1793 = vmatpush1.xpose.msra.mxu0 0.0
        %1794 = vmatprep.subr.mxu0 0.0
        %1795 = vmatpush1.xpose.msra.mxu0 0.0
        %1796 = vmatprep.subr.mxu0 0.0
        %1797 = vmatpush1.xpose.msra.mxu0 0.0
        %1798 = vmatprep.subr.mxu0 0.0
        %1799 = vmatpush1.xpose.msra.mxu0 0.0
        %1800 = vmatprep.subr.mxu0 0.0
        %1801 = vmatpush1.xpose.msra.mxu0 0.0
        %1802 = vmatprep.subr.mxu0 0.0
        %1803 = vmatpush1.xpose.msra.mxu0 0.0
        %1804 = vmatprep.subr.mxu0 0.0
        %1805 = vmatpush1.xpose.msra.mxu0 0.0
        %1806 = vmatprep.subr.mxu0 0.0
        %1807 = vmatpush1.xpose.msra.mxu0 0.0
        %1808 = vmatprep.subr.mxu0 0.0
        %1809 = vmatpush1.xpose.msra.mxu0 0.0
        %1810 = vmatprep.subr.mxu0 0.0
        %1811 = vmatpush1.xpose.msra.mxu0 0.0
        %1812 = vmatprep.subr.mxu0 0.0
        %1813 = vmatpush1.xpose.msra.mxu0 0.0
        %1814 = vmatprep.subr.mxu0 0.0
        %1815 = vmatpush1.xpose.msra.mxu0 0.0
        %1816 = vmatprep.subr.mxu0 0.0
        %1817 = vmatpush1.xpose.msra.mxu0 0.0
        %1818 = vmatprep.subr.mxu0 0.0
        %1819 = vmatpush1.xpose.msra.mxu0 0.0
        %1820 = vmatprep.subr.mxu0 0.0
        %1821 = vmatpush1.xpose.msra.mxu0 0.0
        %1822 = vmatprep.subr.mxu0 0.0
        %1823 = vmatpush1.xpose.msra.mxu0 %v1790
        %1824 = vmatprep.subr.mxu0 0.0
        %1825 = vmatpush2.xpose.msra.mxu0 0.0
        %1826 = vmatprep.subr.mxu0 0.0
        %1827 = vmatpush2.xpose.msra.mxu0 0.0
        %1828 = vmatprep.subr.mxu0 0.0
        %1829 = vmatpush2.xpose.msra.mxu0 0.0
        %1830 = vmatprep.subr.mxu0 0.0
        %1831 = vmatpush2.xpose.msra.mxu0 0.0
        %1832 = vmatprep.subr.mxu0 0.0
        %1833 = vmatpush2.xpose.msra.mxu0 0.0
        %1834 = vmatprep.subr.mxu0 0.0
        %1835 = vmatpush2.xpose.msra.mxu0 0.0
        %1836 = vmatprep.subr.mxu0 0.0
        %1837 = vmatpush2.xpose.msra.mxu0 0.0
        %1838 = vmatprep.subr.mxu0 0.0
        %1839 = vmatpush2.xpose.msra.mxu0 0.0
        %1840 = vmatprep.subr.mxu0 0.0
        %1841 = vmatpush2.xpose.msra.mxu0 0.0
        %1842 = vmatprep.subr.mxu0 0.0
        %1843 = vmatpush2.xpose.msra.mxu0 0.0
        %1844 = vmatprep.subr.mxu0 0.0
        %1845 = vmatpush2.xpose.msra.mxu0 0.0
        %1846 = vmatprep.subr.mxu0 0.0
        %1847 = vmatpush2.xpose.msra.mxu0 0.0
        %1848 = vmatprep.subr.mxu0 0.0
        %1849 = vmatpush2.xpose.msra.mxu0 0.0
        %1850 = vmatprep.subr.mxu0 0.0
        %1851 = vmatpush2.xpose.msra.mxu0 0.0
        %1852 = vmatprep.subr.mxu0 0.0
        %1853 = vmatpush2.xpose.msra.mxu0 0.0
        %1854 = vmatprep.subr.mxu0 0.0
        %1855 = vmatpush2.xpose.msra.mxu0 0.0
        %1856 = vmatprep.mubr.f32.mxu0 0.0
        %1857 = vmatmul.mubr.f32.gmra.mxu0 %v1788
        %v1858 = vpop.f32.mrf.mxu0
        %v1859 = vadd.f32 0.0, %v1858
        %v1860 = vpop.f32.mrf.mxu0
        %1861 = vdwg.mxu0
        %v1862 = vmul.f32 %v1859, 0.17677669
        %v1863 = vadd.f32 %v1862, %v1361
        %v1864 = vsel %vm1364, %v1863, -inf
        %1865 = vmax.xlane.f32.xlu0 %v1864
        %v1866 = vpop.xlane.xlu0 %1865
        %v1867 = vsub.f32 %v1863, %v1866
        %v1868 = vmul.f32 %v1867, 1.442695
        %v1869 = vpow.pop %v1868
        %v1870 = vsel %vm1364, %v1869, 0.0
        %1871 = vadd.xlane.f32.xlu0 %v1870
        %v1872 = vpop.xlane.xlu0 %1871
        %v1873 = vrcp.pop %v1872
        %v1874 = vmul.f32 %v1869, %v1873
        %1875 = vrot.lane.b32.xlu0 %v1274, 32
        %v1876 = vpop.permute.xlu0 %1875
        %v1879 = vsel %vm1364, %v1874, 0
        %1881 = vmatprep.subr.mxu0 0.0
        %1882 = vmatpush1.msra.mxu0 0.0
        %1883 = vmatprep.subr.mxu0 0.0
        %1884 = vmatpush1.msra.mxu0 0.0
        %1885 = vmatprep.subr.mxu0 0.0
        %1886 = vmatpush1.msra.mxu0 0.0
        %1887 = vmatprep.subr.mxu0 0.0
        %1888 = vmatpush1.msra.mxu0 0.0
        %1889 = vmatprep.subr.mxu0 0.0
        %1890 = vmatpush1.msra.mxu0 0.0
        %1891 = vmatprep.subr.mxu0 0.0
        %1892 = vmatpush1.msra.mxu0 0.0
        %1893 = vmatprep.subr.mxu0 0.0
        %1894 = vmatpush1.msra.mxu0 0.0
        %1895 = vmatprep.subr.mxu0 0.0
        %1896 = vmatpush1.msra.mxu0 0.0
        %1897 = vmatprep.subr.mxu0 0.0
        %1898 = vmatpush1.msra.mxu0 0.0
        %1899 = vmatprep.subr.mxu0 0.0
        %1900 = vmatpush1.msra.mxu0 0.0
        %1901 = vmatprep.subr.mxu0 0.0
        %1902 = vmatpush1.msra.mxu0 0.0
        %1903 = vmatprep.subr.mxu0 0.0
        %1904 = vmatpush1.msra.mxu0 0.0
        %1905 = vmatprep.subr.mxu0 0.0
        %1906 = vmatpush1.msra.mxu0 0.0
        %1907 = vmatprep.subr.mxu0 0.0
        %1908 = vmatpush1.msra.mxu0 0.0
        %1909 = vmatprep.subr.mxu0 0.0
        %1910 = vmatpush1.msra.mxu0 0.0
        %1911 = vmatprep.subr.mxu0 0.0
        %1912 = vmatpush1.msra.mxu0 %v1876
        %1913 = vmatprep.subr.mxu0 0.0
        %1914 = vmatpush2.msra.mxu0 0.0
        %1915 = vmatprep.subr.mxu0 0.0
        %1916 = vmatpush2.msra.mxu0 0.0
        %1917 = vmatprep.subr.mxu0 0.0
        %1918 = vmatpush2.msra.mxu0 0.0
        %1919 = vmatprep.subr.mxu0 0.0
        %1920 = vmatpush2.msra.mxu0 0.0
        %1921 = vmatprep.subr.mxu0 0.0
        %1922 = vmatpush2.msra.mxu0 0.0
        %1923 = vmatprep.subr.mxu0 0.0
        %1924 = vmatpush2.msra.mxu0 0.0
        %1925 = vmatprep.subr.mxu0 0.0
        %1926 = vmatpush2.msra.mxu0 0.0
        %1927 = vmatprep.subr.mxu0 0.0
        %1928 = vmatpush2.msra.mxu0 0.0
        %1929 = vmatprep.subr.mxu0 0.0
        %1930 = vmatpush2.msra.mxu0 0.0
        %1931 = vmatprep.subr.mxu0 0.0
        %1932 = vmatpush2.msra.mxu0 0.0
        %1933 = vmatprep.subr.mxu0 0.0
        %1934 = vmatpush2.msra.mxu0 0.0
        %1935 = vmatprep.subr.mxu0 0.0
        %1936 = vmatpush2.msra.mxu0 0.0
        %1937 = vmatprep.subr.mxu0 0.0
        %1938 = vmatpush2.msra.mxu0 0.0
        %1939 = vmatprep.subr.mxu0 0.0
        %1940 = vmatpush2.msra.mxu0 0.0
        %1941 = vmatprep.subr.mxu0 0.0
        %1942 = vmatpush2.msra.mxu0 0.0
        %1943 = vmatprep.subr.mxu0 0.0
        %1944 = vmatpush2.msra.mxu0 0.0
        %1945 = vmatprep.mubr.f32.mxu0 0.0
        %1946 = vmatmul.mubr.f32.gmra.mxu0 %v1879
        %v1947 = vpop.f32.mrf.mxu0
        %v1948 = vadd.f32 0.0, %v1947
        %v1949 = vpop.f32.mrf.mxu0
        %1950 = vdwg.mxu0
        %1952 = vrot.lane.b32.xlu0 %v1614, 32
        %v1953 = vpop.permute.xlu0 %1952
        %1956 = vrot.lane.b32.xlu0 %v1781, 64
        %v1957 = vpop.permute.xlu0 %1956
        %1960 = vrot.lane.b32.xlu0 %v1948, 96
        %v1961 = vpop.permute.xlu0 %1960
        %v1963 = vsel %vm1279, %v1446, %v1953
        %vm1964 = vcmask 523264
        %v1965 = vsel %vm1964, %v1963, %v1957
        %vm1966 = vcmask 785408
        %v1967 = vsel %vm1966, %v1965, %v1961
        %v1968 = vld [vmem:[%s8] sm:$0xf]
        %v1969 = vld [vmem:[%s8 + $0x4] sm:$0xf]
        %v1970 = vld [vmem:[%s8 + $0x8] sm:$0xf]
        %v1971 = vld [vmem:[%s8 + $0xc] sm:$0xf]
        %v1972 = vld [vmem:[%s8 + $0x10] sm:$0xf]
        %v1973 = vld [vmem:[%s8 + $0x14] sm:$0xf]
        %v1974 = vld [vmem:[%s8 + $0x18] sm:$0xf]
        %v1975 = vld [vmem:[%s8 + $0x1c] sm:$0xf]
        %v1976 = vld [vmem:[%s8 + $0x20] sm:$0xf]
        %v1977 = vld [vmem:[%s8 + $0x24] sm:$0xf]
        %v1978 = vld [vmem:[%s8 + $0x28] sm:$0xf]
        %v1979 = vld [vmem:[%s8 + $0x2c] sm:$0xf]
        %v1980 = vld [vmem:[%s8 + $0x30] sm:$0xf]
        %v1981 = vld [vmem:[%s8 + $0x34] sm:$0xf]
        %v1982 = vld [vmem:[%s8 + $0x38] sm:$0xf]
        %v1983 = vld [vmem:[%s8 + $0x3c] sm:$0xf]
        %v1984 = vld [vmem:[#allocation10] sm:$0x1]
        %v1985 = vpack.c.bf16 %v1967, %v1967
        %v1987 = vlaneseq
        %v1988 = vshrl.u32 %v1987, 7
        %v1989 = vsub.s32 0, %v1988
        %v1990 = vrot.slane %v1984, %v1989
        %v2008 = vunpack.c.l.b16 %v1968
        %v2009 = vunpack.c.l.b16 %v1969
        %v2010 = vunpack.c.l.b16 %v1970
        %v2011 = vunpack.c.l.b16 %v1971
        %v2012 = vunpack.c.l.b16 %v1972
        %v2013 = vunpack.c.l.b16 %v1973
        %v2014 = vunpack.c.l.b16 %v1974
        %v2015 = vunpack.c.l.b16 %v1975
        %v2016 = vunpack.c.l.b16 %v1976
        %v2017 = vunpack.c.l.b16 %v1977
        %v2018 = vunpack.c.l.b16 %v1978
        %v2019 = vunpack.c.l.b16 %v1979
        %v2020 = vunpack.c.l.b16 %v1980
        %v2021 = vunpack.c.l.b16 %v1981
        %v2022 = vunpack.c.l.b16 %v1982
        %v2023 = vunpack.c.l.b16 %v1983
        %v2024 = vpack.c.b16 %v2009, %v2008
        %v2025 = vpack.c.b16 %v2011, %v2010
        %v2026 = vpack.c.b16 %v2013, %v2012
        %v2027 = vpack.c.b16 %v2015, %v2014
        %v2028 = vpack.c.b16 %v2017, %v2016
        %v2029 = vpack.c.b16 %v2019, %v2018
        %v2030 = vpack.c.b16 %v2021, %v2020
        %v2031 = vpack.c.b16 %v2023, %v2022
        %2040 = vmatprep.subr.bf16.mxu0 0
        %2041 = vmatpush1.bf16.msra.mxu0 %v2031
        %2042 = vmatprep.subr.bf16.mxu0 0
        %2043 = vmatpush1.bf16.msra.mxu0 %v2030
        %2044 = vmatprep.subr.bf16.mxu0 0
        %2045 = vmatpush1.bf16.msra.mxu0 %v2029
        %2046 = vmatprep.subr.bf16.mxu0 0
        %2047 = vmatpush1.bf16.msra.mxu0 %v2028
        %2048 = vmatprep.subr.bf16.mxu0 0
        %2049 = vmatpush1.bf16.msra.mxu0 %v2027
        %2050 = vmatprep.subr.bf16.mxu0 0
        %2051 = vmatpush1.bf16.msra.mxu0 %v2026
        %2052 = vmatprep.subr.bf16.mxu0 0
        %2053 = vmatpush1.bf16.msra.mxu0 %v2025
        %2054 = vmatprep.subr.bf16.mxu0 0
        %2055 = vmatpush1.bf16.msra.mxu0 %v2024
        %2056 = vmatprep.subr.bf16.mxu0 0
        %2057 = vmatpush2.bf16.msra.mxu0 0
        %2058 = vmatprep.subr.bf16.mxu0 0
        %2059 = vmatpush2.bf16.msra.mxu0 0
        %2060 = vmatprep.subr.bf16.mxu0 0
        %2061 = vmatpush2.bf16.msra.mxu0 0
        %2062 = vmatprep.subr.bf16.mxu0 0
        %2063 = vmatpush2.bf16.msra.mxu0 0
        %2064 = vmatprep.subr.bf16.mxu0 0
        %2065 = vmatpush2.bf16.msra.mxu0 0
        %2066 = vmatprep.subr.bf16.mxu0 0
        %2067 = vmatpush2.bf16.msra.mxu0 0
        %2068 = vmatprep.subr.bf16.mxu0 0
        %2069 = vmatpush2.bf16.msra.mxu0 0
        %2070 = vmatprep.subr.bf16.mxu0 0
        %2071 = vmatpush2.bf16.msra.mxu0 0
        %2072 = vmatprep.mubr.bf16.mxu0 0
        %2073 = vmatmul.mubr.bf16.gmra.mxu0 %v1985
        %v2074 = vpop.f32.mrf.mxu0
        %v2075 = vadd.f32 %v1990, %v2074
        %v2076 = vpop.f32.mrf.mxu0
        %v2077 = vpop.f32.mrf.mxu0
        %v2078 = vpop.f32.mrf.mxu0
        %2079 = vdwg.mxu0
        %v2080 = vadd.f32 %v1016, %v2075
        %v2081 = vld [vmem:[#allocation11] sm:$0x1]
        %v2082 = vld [vmem:[#allocation13] sm:$0x1]
        %2083 = vadd.xlane.f32.xlu0 %v2080
        %v2084 = vpop.xlane.xlu0 %2083
        %v2085 = vmul.f32 %v2084, %v993
        %v2086 = vsub.f32 %v2080, %v2085
        %v2087 = vmul.f32 %v2086, %v2086
        %2088 = vadd.xlane.f32.xlu0 %v2087
        %v2089 = vpop.xlane.xlu0 %2088
        %v2090 = vmul.f32 %v2089, %v993
        %v2091 = vadd.f32 %v2090, 1e-12
        %v2092 = vrsqrt.pop %v2091
        %v2093 = vmul.f32 %v2086, %v2092
        %v2095 = vlaneseq
        %v2096 = vshrl.u32 %v2095, 7
        %v2097 = vsub.s32 0, %v2096
        %v2098 = vrot.slane %v2081, %v2097
        %v2100 = vmul.f32 %v2093, %v2098
        %v2102 = vlaneseq
        %v2103 = vshrl.u32 %v2102, 7
        %v2104 = vsub.s32 0, %v2103
        %v2105 = vrot.slane %v2082, %v2104
        %v2107 = vadd.f32 %v2100, %v2105
        %v2108 = vld [vmem:[#allocation14] sm:$0xff]
        %v2109 = vld [vmem:[#allocation14 + $0x8] sm:$0xff]
        %v2110 = vld [vmem:[#allocation14 + $0x10] sm:$0xff]
        %v2111 = vld [vmem:[#allocation14 + $0x18] sm:$0xff]
        %v2112 = vld [vmem:[#allocation14 + $0x20] sm:$0xff]
        %v2113 = vld [vmem:[#allocation14 + $0x28] sm:$0xff]
        %v2114 = vld [vmem:[#allocation14 + $0x30] sm:$0xff]
        %v2115 = vld [vmem:[#allocation14 + $0x38] sm:$0xff]
        %v2116 = vld [vmem:[#allocation14 + $0x40] sm:$0xff]
        %v2117 = vld [vmem:[#allocation14 + $0x48] sm:$0xff]
        %v2118 = vld [vmem:[#allocation14 + $0x50] sm:$0xff]
        %v2119 = vld [vmem:[#allocation14 + $0x58] sm:$0xff]
        %v2120 = vld [vmem:[#allocation14 + $0x60] sm:$0xff]
        %v2121 = vld [vmem:[#allocation14 + $0x68] sm:$0xff]
        %v2122 = vld [vmem:[#allocation14 + $0x70] sm:$0xff]
        %v2123 = vld [vmem:[#allocation14 + $0x78] sm:$0xff]
        %v2124 = vld [vmem:[%s13] sm:$0x3]
        %v2125 = vpack.c.bf16 %v2107, %v2107
        %v2127 = vlaneseq
        %v2128 = vshrl.u32 %v2127, 7
        %v2129 = vsub.s32 0, %v2128
        %v2130 = vrot.slane %v2124, %v2129
        %v2131 = vlaneseq
        %v2132 = vshrl.u32 %v2131, 7
        %v2133 = vsub.s32 1, %v2132
        %v2134 = vrot.slane %v2124, %v2133
        %v2153 = vunpack.c.l.b16 %v2108
        %v2154 = vunpack.c.h.b16 %v2108
        %v2155 = vunpack.c.l.b16 %v2109
        %v2156 = vunpack.c.h.b16 %v2109
        %v2157 = vunpack.c.l.b16 %v2110
        %v2158 = vunpack.c.h.b16 %v2110
        %v2159 = vunpack.c.l.b16 %v2111
        %v2160 = vunpack.c.h.b16 %v2111
        %v2161 = vunpack.c.l.b16 %v2112
        %v2162 = vunpack.c.h.b16 %v2112
        %v2163 = vunpack.c.l.b16 %v2113
        %v2164 = vunpack.c.h.b16 %v2113
        %v2165 = vunpack.c.l.b16 %v2114
        %v2166 = vunpack.c.h.b16 %v2114
        %v2167 = vunpack.c.l.b16 %v2115
        %v2168 = vunpack.c.h.b16 %v2115
        %v2169 = vunpack.c.l.b16 %v2116
        %v2170 = vunpack.c.h.b16 %v2116
        %v2171 = vunpack.c.l.b16 %v2117
        %v2172 = vunpack.c.h.b16 %v2117
        %v2173 = vunpack.c.l.b16 %v2118
        %v2174 = vunpack.c.h.b16 %v2118
        %v2175 = vunpack.c.l.b16 %v2119
        %v2176 = vunpack.c.h.b16 %v2119
        %v2177 = vunpack.c.l.b16 %v2120
        %v2178 = vunpack.c.h.b16 %v2120
        %v2179 = vunpack.c.l.b16 %v2121
        %v2180 = vunpack.c.h.b16 %v2121
        %v2181 = vunpack.c.l.b16 %v2122
        %v2182 = vunpack.c.h.b16 %v2122
        %v2183 = vunpack.c.l.b16 %v2123
        %v2184 = vunpack.c.h.b16 %v2123
        %v2185 = vpack.c.b16 %v2155, %v2153
        %v2186 = vpack.c.b16 %v2156, %v2154
        %v2187 = vpack.c.b16 %v2159, %v2157
        %v2188 = vpack.c.b16 %v2160, %v2158
        %v2189 = vpack.c.b16 %v2163, %v2161
        %v2190 = vpack.c.b16 %v2164, %v2162
        %v2191 = vpack.c.b16 %v2167, %v2165
        %v2192 = vpack.c.b16 %v2168, %v2166
        %v2193 = vpack.c.b16 %v2171, %v2169
        %v2194 = vpack.c.b16 %v2172, %v2170
        %v2195 = vpack.c.b16 %v2175, %v2173
        %v2196 = vpack.c.b16 %v2176, %v2174
        %v2197 = vpack.c.b16 %v2179, %v2177
        %v2198 = vpack.c.b16 %v2180, %v2178
        %v2199 = vpack.c.b16 %v2183, %v2181
        %v2200 = vpack.c.b16 %v2184, %v2182
        %2217 = vmatprep.subr.bf16.mxu0 %v2200
        %2218 = vmatpush1.bf16.msra.mxu0 %v2199
        %2219 = vmatprep.subr.bf16.mxu0 %v2198
        %2220 = vmatpush1.bf16.msra.mxu0 %v2197
        %2221 = vmatprep.subr.bf16.mxu0 %v2196
        %2222 = vmatpush1.bf16.msra.mxu0 %v2195
        %2223 = vmatprep.subr.bf16.mxu0 %v2194
        %2224 = vmatpush1.bf16.msra.mxu0 %v2193
        %2225 = vmatprep.subr.bf16.mxu0 %v2192
        %2226 = vmatpush1.bf16.msra.mxu0 %v2191
        %2227 = vmatprep.subr.bf16.mxu0 %v2190
        %2228 = vmatpush1.bf16.msra.mxu0 %v2189
        %2229 = vmatprep.subr.bf16.mxu0 %v2188
        %2230 = vmatpush1.bf16.msra.mxu0 %v2187
        %2231 = vmatprep.subr.bf16.mxu0 %v2186
        %2232 = vmatpush1.bf16.msra.mxu0 %v2185
        %2233 = vmatprep.subr.bf16.mxu0 0
        %2234 = vmatpush2.bf16.msra.mxu0 0
        %2235 = vmatprep.subr.bf16.mxu0 0
        %2236 = vmatpush2.bf16.msra.mxu0 0
        %2237 = vmatprep.subr.bf16.mxu0 0
        %2238 = vmatpush2.bf16.msra.mxu0 0
        %2239 = vmatprep.subr.bf16.mxu0 0
        %2240 = vmatpush2.bf16.msra.mxu0 0
        %2241 = vmatprep.subr.bf16.mxu0 0
        %2242 = vmatpush2.bf16.msra.mxu0 0
        %2243 = vmatprep.subr.bf16.mxu0 0
        %2244 = vmatpush2.bf16.msra.mxu0 0
        %2245 = vmatprep.subr.bf16.mxu0 0
        %2246 = vmatpush2.bf16.msra.mxu0 0
        %2247 = vmatprep.subr.bf16.mxu0 0
        %2248 = vmatpush2.bf16.msra.mxu0 0
        %2249 = vmatprep.mubr.bf16.mxu0 0
        %2250 = vmatmul.mubr.bf16.gmra.mxu0 %v2125
        %v2251 = vpop.f32.mrf.mxu0
        %v2252 = vadd.f32 %v2130, %v2251
        %v2253 = vpop.f32.mrf.mxu0
        %v2254 = vadd.f32 %v2134, %v2253
        %v2255 = vpop.f32.mrf.mxu0
        %v2256 = vpop.f32.mrf.mxu0
        %2257 = vdwg.mxu0
        %v2258 = vmul.f32 %v2252, 0.5
        %v2259 = vmul.f32 %v2254, 0.5
        %v2260 = vmul.f32 %v2252, 0.044715
        %v2261 = vmul.f32 %v2254, 0.044715
        %v2262 = vmul.f32 %v2260, %v2252
        %v2263 = vmul.f32 %v2261, %v2254
        %v2264 = vmul.f32 %v2262, %v2252
        %v2265 = vmul.f32 %v2263, %v2254
        %v2266 = vadd.f32 %v2252, %v2264
        %v2267 = vadd.f32 %v2254, %v2265
        %v2268 = vmul.f32 %v2266, 0.7978846
        %v2269 = vmul.f32 %v2267, 0.7978846
        %v2270 = vtanh.pop %v2268
        %v2271 = vtanh.pop %v2269
        %v2272 = vadd.f32 %v2270, 1.0
        %v2273 = vadd.f32 %v2271, 1.0
        %v2274 = vmul.f32 %v2258, %v2272
        %v2275 = vmul.f32 %v2259, %v2273
        %v2276 = vld [vmem:[#allocation16] sm:$0xf]
        %v2277 = vld [vmem:[#allocation16 + $0x4] sm:$0xf]
        %v2278 = vld [vmem:[#allocation16 + $0x8] sm:$0xf]
        %v2279 = vld [vmem:[#allocation16 + $0xc] sm:$0xf]
        %v2280 = vld [vmem:[#allocation16 + $0x10] sm:$0xf]
        %v2281 = vld [vmem:[#allocation16 + $0x14] sm:$0xf]
        %v2282 = vld [vmem:[#allocation16 + $0x18] sm:$0xf]
        %v2283 = vld [vmem:[#allocation16 + $0x1c] sm:$0xf]
        %v2284 = vld [vmem:[#allocation16 + $0x20] sm:$0xf]
        %v2285 = vld [vmem:[#allocation16 + $0x24] sm:$0xf]
        %v2286 = vld [vmem:[#allocation16 + $0x28] sm:$0xf]
        %v2287 = vld [vmem:[#allocation16 + $0x2c] sm:$0xf]
        %v2288 = vld [vmem:[#allocation16 + $0x30] sm:$0xf]
        %v2289 = vld [vmem:[#allocation16 + $0x34] sm:$0xf]
        %v2290 = vld [vmem:[#allocation16 + $0x38] sm:$0xf]
        %v2291 = vld [vmem:[#allocation16 + $0x3c] sm:$0xf]
        %v2292 = vld [vmem:[#allocation16 + $0x40] sm:$0xf]
        %v2293 = vld [vmem:[#allocation16 + $0x44] sm:$0xf]
        %v2294 = vld [vmem:[#allocation16 + $0x48] sm:$0xf]
        %v2295 = vld [vmem:[#allocation16 + $0x4c] sm:$0xf]
        %v2296 = vld [vmem:[#allocation16 + $0x50] sm:$0xf]
        %v2297 = vld [vmem:[#allocation16 + $0x54] sm:$0xf]
        %v2298 = vld [vmem:[#allocation16 + $0x58] sm:$0xf]
        %v2299 = vld [vmem:[#allocation16 + $0x5c] sm:$0xf]
        %v2300 = vld [vmem:[#allocation16 + $0x60] sm:$0xf]
        %v2301 = vld [vmem:[#allocation16 + $0x64] sm:$0xf]
        %v2302 = vld [vmem:[#allocation16 + $0x68] sm:$0xf]
        %v2303 = vld [vmem:[#allocation16 + $0x6c] sm:$0xf]
        %v2304 = vld [vmem:[#allocation16 + $0x70] sm:$0xf]
        %v2305 = vld [vmem:[#allocation16 + $0x74] sm:$0xf]
        %v2306 = vld [vmem:[#allocation16 + $0x78] sm:$0xf]
        %v2307 = vld [vmem:[#allocation16 + $0x7c] sm:$0xf]
        %v2308 = vld [vmem:[#allocation17] sm:$0x1]
        %v2309 = vpack.c.bf16 %v2274, %v2274
        %v2310 = vpack.c.bf16 %v2275, %v2275
        %v2312 = vlaneseq
        %v2313 = vshrl.u32 %v2312, 7
        %v2314 = vsub.s32 0, %v2313
        %v2315 = vrot.slane %v2308, %v2314
        %v2349 = vunpack.c.l.b16 %v2276
        %v2350 = vunpack.c.l.b16 %v2277
        %v2351 = vunpack.c.l.b16 %v2278
        %v2352 = vunpack.c.l.b16 %v2279
        %v2353 = vunpack.c.l.b16 %v2280
        %v2354 = vunpack.c.l.b16 %v2281
        %v2355 = vunpack.c.l.b16 %v2282
        %v2356 = vunpack.c.l.b16 %v2283
        %v2357 = vunpack.c.l.b16 %v2284
        %v2358 = vunpack.c.l.b16 %v2285
        %v2359 = vunpack.c.l.b16 %v2286
        %v2360 = vunpack.c.l.b16 %v2287
        %v2361 = vunpack.c.l.b16 %v2288
        %v2362 = vunpack.c.l.b16 %v2289
        %v2363 = vunpack.c.l.b16 %v2290
        %v2364 = vunpack.c.l.b16 %v2291
        %v2365 = vunpack.c.l.b16 %v2292
        %v2366 = vunpack.c.l.b16 %v2293
        %v2367 = vunpack.c.l.b16 %v2294
        %v2368 = vunpack.c.l.b16 %v2295
        %v2369 = vunpack.c.l.b16 %v2296
        %v2370 = vunpack.c.l.b16 %v2297
        %v2371 = vunpack.c.l.b16 %v2298
        %v2372 = vunpack.c.l.b16 %v2299
        %v2373 = vunpack.c.l.b16 %v2300
        %v2374 = vunpack.c.l.b16 %v2301
        %v2375 = vunpack.c.l.b16 %v2302
        %v2376 = vunpack.c.l.b16 %v2303
        %v2377 = vunpack.c.l.b16 %v2304
        %v2378 = vunpack.c.l.b16 %v2305
        %v2379 = vunpack.c.l.b16 %v2306
        %v2380 = vunpack.c.l.b16 %v2307
        %v2381 = vpack.c.b16 %v2350, %v2349
        %v2382 = vpack.c.b16 %v2352, %v2351
        %v2383 = vpack.c.b16 %v2354, %v2353
        %v2384 = vpack.c.b16 %v2356, %v2355
        %v2385 = vpack.c.b16 %v2358, %v2357
        %v2386 = vpack.c.b16 %v2360, %v2359
        %v2387 = vpack.c.b16 %v2362, %v2361
        %v2388 = vpack.c.b16 %v2364, %v2363
        %v2389 = vpack.c.b16 %v2366, %v2365
        %v2390 = vpack.c.b16 %v2368, %v2367
        %v2391 = vpack.c.b16 %v2370, %v2369
        %v2392 = vpack.c.b16 %v2372, %v2371
        %v2393 = vpack.c.b16 %v2374, %v2373
        %v2394 = vpack.c.b16 %v2376, %v2375
        %v2395 = vpack.c.b16 %v2378, %v2377
        %v2396 = vpack.c.b16 %v2380, %v2379
        %2413 = vmatprep.subr.bf16.mxu0 0
        %2414 = vmatpush1.bf16.msra.mxu0 %v2388
        %2415 = vmatprep.subr.bf16.mxu0 0
        %2416 = vmatpush1.bf16.msra.mxu0 %v2387
        %2417 = vmatprep.subr.bf16.mxu0 0
        %2418 = vmatpush1.bf16.msra.mxu0 %v2386
        %2419 = vmatprep.subr.bf16.mxu0 0
        %2420 = vmatpush1.bf16.msra.mxu0 %v2385
        %2421 = vmatprep.subr.bf16.mxu0 0
        %2422 = vmatpush1.bf16.msra.mxu0 %v2384
        %2423 = vmatprep.subr.bf16.mxu0 0
        %2424 = vmatpush1.bf16.msra.mxu0 %v2383
        %2425 = vmatprep.subr.bf16.mxu0 0
        %2426 = vmatpush1.bf16.msra.mxu0 %v2382
        %2427 = vmatprep.subr.bf16.mxu0 0
        %2428 = vmatpush1.bf16.msra.mxu0 %v2381
        %2429 = vmatprep.subr.bf16.mxu0 0
        %2430 = vmatpush2.bf16.msra.mxu0 %v2396
        %2431 = vmatprep.subr.bf16.mxu0 0
        %2432 = vmatpush2.bf16.msra.mxu0 %v2395
        %2433 = vmatprep.subr.bf16.mxu0 0
        %2434 = vmatpush2.bf16.msra.mxu0 %v2394
        %2435 = vmatprep.subr.bf16.mxu0 0
        %2436 = vmatpush2.bf16.msra.mxu0 %v2393
        %2437 = vmatprep.subr.bf16.mxu0 0
        %2438 = vmatpush2.bf16.msra.mxu0 %v2392
        %2439 = vmatprep.subr.bf16.mxu0 0
        %2440 = vmatpush2.bf16.msra.mxu0 %v2391
        %2441 = vmatprep.subr.bf16.mxu0 0
        %2442 = vmatpush2.bf16.msra.mxu0 %v2390
        %2443 = vmatprep.subr.bf16.mxu0 0
        %2444 = vmatpush2.bf16.msra.mxu0 %v2389
        %2445 = vmatprep.mubr.bf16.mxu0 %v2310
        %2446 = vmatmul.mubr.bf16.gmra.mxu0 %v2309
        %v2447 = vpop.f32.mrf.mxu0
        %v2448 = vadd.f32 %v2315, %v2447
        %v2449 = vpop.f32.mrf.mxu0
        %v2450 = vpop.f32.mrf.mxu0
        %v2451 = vpop.f32.mrf.mxu0
        %2452 = vdwg.mxu0
        %v2453 = vadd.f32 %v2107, %v2448
        %v2454 = vld [vmem:[#allocation19] sm:$0x1]
        %v2455 = vld [vmem:[#allocation20] sm:$0x1]
        %2456 = vadd.xlane.f32.xlu0 %v2453
        %v2457 = vpop.xlane.xlu0 %2456
        %v2458 = vmul.f32 %v2457, %v993
        %v2459 = vsub.f32 %v2453, %v2458
        %v2460 = vmul.f32 %v2459, %v2459
        %2461 = vadd.xlane.f32.xlu0 %v2460
        %v2462 = vpop.xlane.xlu0 %2461
        %v2463 = vmul.f32 %v2462, %v993
        %v2464 = vadd.f32 %v2463, 1e-12
        %v2465 = vrsqrt.pop %v2464
        %v2466 = vmul.f32 %v2459, %v2465
        %v2468 = vlaneseq
        %v2469 = vshrl.u32 %v2468, 7
        %v2470 = vsub.s32 0, %v2469
        %v2471 = vrot.slane %v2454, %v2470
        %v2473 = vmul.f32 %v2466, %v2471
        %v2475 = vlaneseq
        %v2476 = vshrl.u32 %v2475, 7
        %v2477 = vsub.s32 0, %v2476
        %v2478 = vrot.slane %v2455, %v2477
        %v2480 = vadd.f32 %v2473, %v2478
        %s2481 = scalar_lea.vmem [#allocation7], 192
        %v2482 = vld [vmem:[%s2481] sm:$0xff]
        %v2483 = vld [vmem:[%s2481 + $0x8] sm:$0xf]
        %v2484 = vld [vmem:[%s2481 + $0xc] sm:$0xff]
        %v2485 = vld [vmem:[%s2481 + $0x14] sm:$0xf]
        %v2486 = vld [vmem:[%s2481 + $0x18] sm:$0xff]
        %v2487 = vld [vmem:[%s2481 + $0x20] sm:$0xf]
        %v2488 = vld [vmem:[%s2481 + $0x24] sm:$0xff]
        %v2489 = vld [vmem:[%s2481 + $0x2c] sm:$0xf]
        %v2490 = vld [vmem:[%s2481 + $0x30] sm:$0xff]
        %v2491 = vld [vmem:[%s2481 + $0x38] sm:$0xf]
        %v2492 = vld [vmem:[%s2481 + $0x3c] sm:$0xff]
        %v2493 = vld [vmem:[%s2481 + $0x44] sm:$0xf]
        %v2494 = vld [vmem:[%s2481 + $0x48] sm:$0xff]
        %v2495 = vld [vmem:[%s2481 + $0x50] sm:$0xf]
        %v2496 = vld [vmem:[%s2481 + $0x54] sm:$0xff]
        %v2497 = vld [vmem:[%s2481 + $0x5c] sm:$0xf]
        %v2498 = vld [vmem:[%s2481 + $0x60] sm:$0xff]
        %v2499 = vld [vmem:[%s2481 + $0x68] sm:$0xf]
        %v2500 = vld [vmem:[%s2481 + $0x6c] sm:$0xff]
        %v2501 = vld [vmem:[%s2481 + $0x74] sm:$0xf]
        %v2502 = vld [vmem:[%s2481 + $0x78] sm:$0xff]
        %v2503 = vld [vmem:[%s2481 + $0x80] sm:$0xf]
        %v2504 = vld [vmem:[%s2481 + $0x84] sm:$0xff]
        %v2505 = vld [vmem:[%s2481 + $0x8c] sm:$0xf]
        %v2506 = vld [vmem:[%s2481 + $0x90] sm:$0xff]
        %v2507 = vld [vmem:[%s2481 + $0x98] sm:$0xf]
        %v2508 = vld [vmem:[%s2481 + $0x9c] sm:$0xff]
        %v2509 = vld [vmem:[%s2481 + $0xa4] sm:$0xf]
        %v2510 = vld [vmem:[%s2481 + $0xa8] sm:$0xff]
        %v2511 = vld [vmem:[%s2481 + $0xb0] sm:$0xf]
        %v2512 = vld [vmem:[%s2481 + $0xb4] sm:$0xff]
        %v2513 = vld [vmem:[%s2481 + $0xbc] sm:$0xf]
        %s2514 = scalar_lea.vmem [#allocation8], 3
        %v2515 = vld [vmem:[%s2514] sm:$0x7]
        %v2516 = vpack.c.bf16 %v2480, %v2480
        %v2518 = vlaneseq
        %v2519 = vshrl.u32 %v2518, 7
        %v2520 = vsub.s32 0, %v2519
        %v2521 = vrot.slane %v2515, %v2520
        %v2522 = vlaneseq
        %v2523 = vshrl.u32 %v2522, 7
        %v2524 = vsub.s32 1, %v2523
        %v2525 = vrot.slane %v2515, %v2524
        %v2526 = vlaneseq
        %v2527 = vshrl.u32 %v2526, 7
        %v2528 = vsub.s32 2, %v2527
        %v2529 = vrot.slane %v2515, %v2528
        %v2565 = vunpack.c.l.b16 %v2482
        %v2566 = vunpack.c.h.b16 %v2482
        %v2567 = vunpack.c.l.b16 %v2483
        %v2568 = vunpack.c.l.b16 %v2484
        %v2569 = vunpack.c.h.b16 %v2484
        %v2570 = vunpack.c.l.b16 %v2485
        %v2571 = vunpack.c.l.b16 %v2486
        %v2572 = vunpack.c.h.b16 %v2486
        %v2573 = vunpack.c.l.b16 %v2487
        %v2574 = vunpack.c.l.b16 %v2488
        %v2575 = vunpack.c.h.b16 %v2488
        %v2576 = vunpack.c.l.b16 %v2489
        %v2577 = vunpack.c.l.b16 %v2490
        %v2578 = vunpack.c.h.b16 %v2490
        %v2579 = vunpack.c.l.b16 %v2491
        %v2580 = vunpack.c.l.b16 %v2492
        %v2581 = vunpack.c.h.b16 %v2492
        %v2582 = vunpack.c.l.b16 %v2493
        %v2583 = vunpack.c.l.b16 %v2494
        %v2584 = vunpack.c.h.b16 %v2494
        %v2585 = vunpack.c.l.b16 %v2495
        %v2586 = vunpack.c.l.b16 %v2496
        %v2587 = vunpack.c.h.b16 %v2496
        %v2588 = vunpack.c.l.b16 %v2497
        %v2589 = vunpack.c.l.b16 %v2498
        %v2590 = vunpack.c.h.b16 %v2498
        %v2591 = vunpack.c.l.b16 %v2499
        %v2592 = vunpack.c.l.b16 %v2500
        %v2593 = vunpack.c.h.b16 %v2500
        %v2594 = vunpack.c.l.b16 %v2501
        %v2595 = vunpack.c.l.b16 %v2502
        %v2596 = vunpack.c.h.b16 %v2502
        %v2597 = vunpack.c.l.b16 %v2503
        %v2598 = vunpack.c.l.b16 %v2504
        %v2599 = vunpack.c.h.b16 %v2504
        %v2600 = vunpack.c.l.b16 %v2505
        %v2601 = vunpack.c.l.b16 %v2506
        %v2602 = vunpack.c.h.b16 %v2506
        %v2603 = vunpack.c.l.b16 %v2507
        %v2604 = vunpack.c.l.b16 %v2508
        %v2605 = vunpack.c.h.b16 %v2508
        %v2606 = vunpack.c.l.b16 %v2509
        %v2607 = vunpack.c.l.b16 %v2510
        %v2608 = vunpack.c.h.b16 %v2510
        %v2609 = vunpack.c.l.b16 %v2511
        %v2610 = vunpack.c.l.b16 %v2512
        %v2611 = vunpack.c.h.b16 %v2512
        %v2612 = vunpack.c.l.b16 %v2513
        %v2613 = vpack.c.b16 %v2568, %v2565
        %v2614 = vpack.c.b16 %v2569, %v2566
        %v2615 = vpack.c.b16 %v2570, %v2567
        %v2616 = vpack.c.b16 %v2574, %v2571
        %v2617 = vpack.c.b16 %v2575, %v2572
        %v2618 = vpack.c.b16 %v2576, %v2573
        %v2619 = vpack.c.b16 %v2580, %v2577
        %v2620 = vpack.c.b16 %v2581, %v2578
        %v2621 = vpack.c.b16 %v2582, %v2579
        %v2622 = vpack.c.b16 %v2586, %v2583
        %v2623 = vpack.c.b16 %v2587, %v2584
        %v2624 = vpack.c.b16 %v2588, %v2585
        %v2625 = vpack.c.b16 %v2592, %v2589
        %v2626 = vpack.c.b16 %v2593, %v2590
        %v2627 = vpack.c.b16 %v2594, %v2591
        %v2628 = vpack.c.b16 %v2598, %v2595
        %v2629 = vpack.c.b16 %v2599, %v2596
        %v2630 = vpack.c.b16 %v2600, %v2597
        %v2631 = vpack.c.b16 %v2604, %v2601
        %v2632 = vpack.c.b16 %v2605, %v2602
        %v2633 = vpack.c.b16 %v2606, %v2603
        %v2634 = vpack.c.b16 %v2610, %v2607
        %v2635 = vpack.c.b16 %v2611, %v2608
        %v2636 = vpack.c.b16 %v2612, %v2609
        %2661 = vmatprep.subr.bf16.mxu0 %v2635
        %2662 = vmatpush1.bf16.msra.mxu0 %v2634
        %2663 = vmatprep.subr.bf16.mxu0 %v2632
        %2664 = vmatpush1.bf16.msra.mxu0 %v2631
        %2665 = vmatprep.subr.bf16.mxu0 %v2629
        %2666 = vmatpush1.bf16.msra.mxu0 %v2628
        %2667 = vmatprep.subr.bf16.mxu0 %v2626
        %2668 = vmatpush1.bf16.msra.mxu0 %v2625
        %2669 = vmatprep.subr.bf16.mxu0 %v2623
        %2670 = vmatpush1.bf16.msra.mxu0 %v2622
        %2671 = vmatprep.subr.bf16.mxu0 %v2620
        %2672 = vmatpush1.bf16.msra.mxu0 %v2619
        %2673 = vmatprep.subr.bf16.mxu0 %v2617
        %2674 = vmatpush1.bf16.msra.mxu0 %v2616
        %2675 = vmatprep.subr.bf16.mxu0 %v2614
        %2676 = vmatpush1.bf16.msra.mxu0 %v2613
        %2677 = vmatprep.subr.bf16.mxu0 0
        %2678 = vmatpush2.bf16.msra.mxu0 0
        %2679 = vmatprep.subr.bf16.mxu0 0
        %2680 = vmatpush2.bf16.msra.mxu0 0
        %2681 = vmatprep.subr.bf16.mxu0 0
        %2682 = vmatpush2.bf16.msra.mxu0 0
        %2683 = vmatprep.subr.bf16.mxu0 0
        %2684 = vmatpush2.bf16.msra.mxu0 0
        %2685 = vmatprep.subr.bf16.mxu0 0
        %2686 = vmatpush2.bf16.msra.mxu0 0
        %2687 = vmatprep.subr.bf16.mxu0 0
        %2688 = vmatpush2.bf16.msra.mxu0 0
        %2689 = vmatprep.subr.bf16.mxu0 0
        %2690 = vmatpush2.bf16.msra.mxu0 0
        %2691 = vmatprep.subr.bf16.mxu0 0
        %2692 = vmatpush2.bf16.msra.mxu0 0
        %2693 = vmatprep.mubr.bf16.mxu0 0
        %2694 = vmatmul.mubr.bf16.gmra.mxu0 %v2516
        %v2695 = vpop.f32.mrf.mxu0
        %v2696 = vadd.f32 %v2521, %v2695
        %v2697 = vpop.f32.mrf.mxu0
        %v2698 = vadd.f32 %v2525, %v2697
        %v2699 = vpop.f32.mrf.mxu0
        %v2700 = vpop.f32.mrf.mxu0
        %2701 = vdwg.mxu0
        %2702 = vmatprep.subr.bf16.mxu0 0
        %2703 = vmatpush1.bf16.msra.mxu0 %v2636
        %2704 = vmatprep.subr.bf16.mxu0 0
        %2705 = vmatpush1.bf16.msra.mxu0 %v2633
        %2706 = vmatprep.subr.bf16.mxu0 0
        %2707 = vmatpush1.bf16.msra.mxu0 %v2630
        %2708 = vmatprep.subr.bf16.mxu0 0
        %2709 = vmatpush1.bf16.msra.mxu0 %v2627
        %2710 = vmatprep.subr.bf16.mxu0 0
        %2711 = vmatpush1.bf16.msra.mxu0 %v2624
        %2712 = vmatprep.subr.bf16.mxu0 0
        %2713 = vmatpush1.bf16.msra.mxu0 %v2621
        %2714 = vmatprep.subr.bf16.mxu0 0
        %2715 = vmatpush1.bf16.msra.mxu0 %v2618
        %2716 = vmatprep.subr.bf16.mxu0 0
        %2717 = vmatpush1.bf16.msra.mxu0 %v2615
        %2718 = vmatprep.subr.bf16.mxu0 0
        %2719 = vmatpush2.bf16.msra.mxu0 0
        %2720 = vmatprep.subr.bf16.mxu0 0
        %2721 = vmatpush2.bf16.msra.mxu0 0
        %2722 = vmatprep.subr.bf16.mxu0 0
        %2723 = vmatpush2.bf16.msra.mxu0 0
        %2724 = vmatprep.subr.bf16.mxu0 0
        %2725 = vmatpush2.bf16.msra.mxu0 0
        %2726 = vmatprep.subr.bf16.mxu0 0
        %2727 = vmatpush2.bf16.msra.mxu0 0
        %2728 = vmatprep.subr.bf16.mxu0 0
        %2729 = vmatpush2.bf16.msra.mxu0 0
        %2730 = vmatprep.subr.bf16.mxu0 0
        %2731 = vmatpush2.bf16.msra.mxu0 0
        %2732 = vmatprep.subr.bf16.mxu0 0
        %2733 = vmatpush2.bf16.msra.mxu0 0
        %2734 = vmatprep.mubr.bf16.mxu0 0
        %2735 = vmatmul.mubr.bf16.gmra.mxu0 %v2516
        %v2736 = vpop.f32.mrf.mxu0
        %v2737 = vadd.f32 %v2529, %v2736
        %v2738 = vpop.f32.mrf.mxu0
        %v2739 = vpop.f32.mrf.mxu0
        %v2740 = vpop.f32.mrf.mxu0
        %2741 = vdwg.mxu0
        %v2743 = vsel %vm1279, %v2696, 0
        %v2746 = vsel %vm1279, %v2698, 0
        %2748 = vmatprep.subr.mxu0 0.0
        %2749 = vmatpush1.xpose.msra.mxu0 0.0
        %2750 = vmatprep.subr.mxu0 0.0
        %2751 = vmatpush1.xpose.msra.mxu0 0.0
        %2752 = vmatprep.subr.mxu0 0.0
        %2753 = vmatpush1.xpose.msra.mxu0 0.0
        %2754 = vmatprep.subr.mxu0 0.0
        %2755 = vmatpush1.xpose.msra.mxu0 0.0
        %2756 = vmatprep.subr.mxu0 0.0
        %2757 = vmatpush1.xpose.msra.mxu0 0.0
        %2758 = vmatprep.subr.mxu0 0.0
        %2759 = vmatpush1.xpose.msra.mxu0 0.0
        %2760 = vmatprep.subr.mxu0 0.0
        %2761 = vmatpush1.xpose.msra.mxu0 0.0
        %2762 = vmatprep.subr.mxu0 0.0
        %2763 = vmatpush1.xpose.msra.mxu0 0.0
        %2764 = vmatprep.subr.mxu0 0.0
        %2765 = vmatpush1.xpose.msra.mxu0 0.0
        %2766 = vmatprep.subr.mxu0 0.0
        %2767 = vmatpush1.xpose.msra.mxu0 0.0
        %2768 = vmatprep.subr.mxu0 0.0
        %2769 = vmatpush1.xpose.msra.mxu0 0.0
        %2770 = vmatprep.subr.mxu0 0.0
        %2771 = vmatpush1.xpose.msra.mxu0 0.0
        %2772 = vmatprep.subr.mxu0 0.0
        %2773 = vmatpush1.xpose.msra.mxu0 0.0
        %2774 = vmatprep.subr.mxu0 0.0
        %2775 = vmatpush1.xpose.msra.mxu0 0.0
        %2776 = vmatprep.subr.mxu0 0.0
        %2777 = vmatpush1.xpose.msra.mxu0 0.0
        %2778 = vmatprep.subr.mxu0 0.0
        %2779 = vmatpush1.xpose.msra.mxu0 %v2746
        %2780 = vmatprep.subr.mxu0 0.0
        %2781 = vmatpush2.xpose.msra.mxu0 0.0
        %2782 = vmatprep.subr.mxu0 0.0
        %2783 = vmatpush2.xpose.msra.mxu0 0.0
        %2784 = vmatprep.subr.mxu0 0.0
        %2785 = vmatpush2.xpose.msra.mxu0 0.0
        %2786 = vmatprep.subr.mxu0 0.0
        %2787 = vmatpush2.xpose.msra.mxu0 0.0
        %2788 = vmatprep.subr.mxu0 0.0
        %2789 = vmatpush2.xpose.msra.mxu0 0.0
        %2790 = vmatprep.subr.mxu0 0.0
        %2791 = vmatpush2.xpose.msra.mxu0 0.0
        %2792 = vmatprep.subr.mxu0 0.0
        %2793 = vmatpush2.xpose.msra.mxu0 0.0
        %2794 = vmatprep.subr.mxu0 0.0
        %2795 = vmatpush2.xpose.msra.mxu0 0.0
        %2796 = vmatprep.subr.mxu0 0.0
        %2797 = vmatpush2.xpose.msra.mxu0 0.0
        %2798 = vmatprep.subr.mxu0 0.0
        %2799 = vmatpush2.xpose.msra.mxu0 0.0
        %2800 = vmatprep.subr.mxu0 0.0
        %2801 = vmatpush2.xpose.msra.mxu0 0.0
        %2802 = vmatprep.subr.mxu0 0.0
        %2803 = vmatpush2.xpose.msra.mxu0 0.0
        %2804 = vmatprep.subr.mxu0 0.0
        %2805 = vmatpush2.xpose.msra.mxu0 0.0
        %2806 = vmatprep.subr.mxu0 0.0
        %2807 = vmatpush2.xpose.msra.mxu0 0.0
        %2808 = vmatprep.subr.mxu0 0.0
        %2809 = vmatpush2.xpose.msra.mxu0 0.0
        %2810 = vmatprep.subr.mxu0 0.0
        %2811 = vmatpush2.xpose.msra.mxu0 0.0
        %2812 = vmatprep.mubr.f32.mxu0 0.0
        %2813 = vmatmul.mubr.f32.gmra.mxu0 %v2743
        %v2814 = vpop.f32.mrf.mxu0
        %v2815 = vadd.f32 0.0, %v2814
        %v2816 = vpop.f32.mrf.mxu0
        %2817 = vdwg.mxu0
        %v2818 = vmul.f32 %v2815, 0.17677669
        %v2819 = vadd.f32 %v2818, %v1361
        %v2820 = vsel %vm1364, %v2819, -inf
        %2821 = vmax.xlane.f32.xlu0 %v2820
        %v2822 = vpop.xlane.xlu0 %2821
        %v2823 = vsub.f32 %v2819, %v2822
        %v2824 = vmul.f32 %v2823, 1.442695
        %v2825 = vpow.pop %v2824
        %v2826 = vsel %vm1364, %v2825, 0.0
        %2827 = vadd.xlane.f32.xlu0 %v2826
        %v2828 = vpop.xlane.xlu0 %2827
        %v2829 = vrcp.pop %v2828
        %v2830 = vmul.f32 %v2825, %v2829
        %v2832 = vsel %vm1364, %v2830, 0
        %2834 = vmatprep.subr.mxu0 0.0
        %2835 = vmatpush1.msra.mxu0 0.0
        %2836 = vmatprep.subr.mxu0 0.0
        %2837 = vmatpush1.msra.mxu0 0.0
        %2838 = vmatprep.subr.mxu0 0.0
        %2839 = vmatpush1.msra.mxu0 0.0
        %2840 = vmatprep.subr.mxu0 0.0
        %2841 = vmatpush1.msra.mxu0 0.0
        %2842 = vmatprep.subr.mxu0 0.0
        %2843 = vmatpush1.msra.mxu0 0.0
        %2844 = vmatprep.subr.mxu0 0.0
        %2845 = vmatpush1.msra.mxu0 0.0
        %2846 = vmatprep.subr.mxu0 0.0
        %2847 = vmatpush1.msra.mxu0 0.0
        %2848 = vmatprep.subr.mxu0 0.0
        %2849 = vmatpush1.msra.mxu0 0.0
        %2850 = vmatprep.subr.mxu0 0.0
        %2851 = vmatpush1.msra.mxu0 0.0
        %2852 = vmatprep.subr.mxu0 0.0
        %2853 = vmatpush1.msra.mxu0 0.0
        %2854 = vmatprep.subr.mxu0 0.0
        %2855 = vmatpush1.msra.mxu0 0.0
        %2856 = vmatprep.subr.mxu0 0.0
        %2857 = vmatpush1.msra.mxu0 0.0
        %2858 = vmatprep.subr.mxu0 0.0
        %2859 = vmatpush1.msra.mxu0 0.0
        %2860 = vmatprep.subr.mxu0 0.0
        %2861 = vmatpush1.msra.mxu0 0.0
        %2862 = vmatprep.subr.mxu0 0.0
        %2863 = vmatpush1.msra.mxu0 0.0
        %2864 = vmatprep.subr.mxu0 0.0
        %2865 = vmatpush1.msra.mxu0 %v2737
        %2866 = vmatprep.subr.mxu0 0.0
        %2867 = vmatpush2.msra.mxu0 0.0
        %2868 = vmatprep.subr.mxu0 0.0
        %2869 = vmatpush2.msra.mxu0 0.0
        %2870 = vmatprep.subr.mxu0 0.0
        %2871 = vmatpush2.msra.mxu0 0.0
        %2872 = vmatprep.subr.mxu0 0.0
        %2873 = vmatpush2.msra.mxu0 0.0
        %2874 = vmatprep.subr.mxu0 0.0
        %2875 = vmatpush2.msra.mxu0 0.0
        %2876 = vmatprep.subr.mxu0 0.0
        %2877 = vmatpush2.msra.mxu0 0.0
        %2878 = vmatprep.subr.mxu0 0.0
        %2879 = vmatpush2.msra.mxu0 0.0
        %2880 = vmatprep.subr.mxu0 0.0
        %2881 = vmatpush2.msra.mxu0 0.0
        %2882 = vmatprep.subr.mxu0 0.0
        %2883 = vmatpush2.msra.mxu0 0.0
        %2884 = vmatprep.subr.mxu0 0.0
        %2885 = vmatpush2.msra.mxu0 0.0
        %2886 = vmatprep.subr.mxu0 0.0
        %2887 = vmatpush2.msra.mxu0 0.0
        %2888 = vmatprep.subr.mxu0 0.0
        %2889 = vmatpush2.msra.mxu0 0.0
        %2890 = vmatprep.subr.mxu0 0.0
        %2891 = vmatpush2.msra.mxu0 0.0
        %2892 = vmatprep.subr.mxu0 0.0
        %2893 = vmatpush2.msra.mxu0 0.0
        %2894 = vmatprep.subr.mxu0 0.0
        %2895 = vmatpush2.msra.mxu0 0.0
        %2896 = vmatprep.subr.mxu0 0.0
        %2897 = vmatpush2.msra.mxu0 0.0
        %2898 = vmatprep.mubr.f32.mxu0 0.0
        %2899 = vmatmul.mubr.f32.gmra.mxu0 %v2832
        %v2900 = vpop.f32.mrf.mxu0
        %v2901 = vadd.f32 0.0, %v2900
        %v2902 = vpop.f32.mrf.mxu0
        %2903 = vdwg.mxu0
        %2904 = vrot.lane.b32.xlu0 %v2696, 96
        %v2905 = vpop.permute.xlu0 %2904
        %2906 = vrot.lane.b32.xlu0 %v2698, 96
        %v2907 = vpop.permute.xlu0 %2906
        %v2908 = vsel %vm1279, %v2905, 0
        %v2910 = vsel %vm1279, %v2907, 0
        %2912 = vmatprep.subr.mxu0 0.0
        %2913 = vmatpush1.xpose.msra.mxu0 0.0
        %2914 = vmatprep.subr.mxu0 0.0
        %2915 = vmatpush1.xpose.msra.mxu0 0.0
        %2916 = vmatprep.subr.mxu0 0.0
        %2917 = vmatpush1.xpose.msra.mxu0 0.0
        %2918 = vmatprep.subr.mxu0 0.0
        %2919 = vmatpush1.xpose.msra.mxu0 0.0
        %2920 = vmatprep.subr.mxu0 0.0
        %2921 = vmatpush1.xpose.msra.mxu0 0.0
        %2922 = vmatprep.subr.mxu0 0.0
        %2923 = vmatpush1.xpose.msra.mxu0 0.0
        %2924 = vmatprep.subr.mxu0 0.0
        %2925 = vmatpush1.xpose.msra.mxu0 0.0
        %2926 = vmatprep.subr.mxu0 0.0
        %2927 = vmatpush1.xpose.msra.mxu0 0.0
        %2928 = vmatprep.subr.mxu0 0.0
        %2929 = vmatpush1.xpose.msra.mxu0 0.0
        %2930 = vmatprep.subr.mxu0 0.0
        %2931 = vmatpush1.xpose.msra.mxu0 0.0
        %2932 = vmatprep.subr.mxu0 0.0
        %2933 = vmatpush1.xpose.msra.mxu0 0.0
        %2934 = vmatprep.subr.mxu0 0.0
        %2935 = vmatpush1.xpose.msra.mxu0 0.0
        %2936 = vmatprep.subr.mxu0 0.0
        %2937 = vmatpush1.xpose.msra.mxu0 0.0
        %2938 = vmatprep.subr.mxu0 0.0
        %2939 = vmatpush1.xpose.msra.mxu0 0.0
        %2940 = vmatprep.subr.mxu0 0.0
        %2941 = vmatpush1.xpose.msra.mxu0 0.0
        %2942 = vmatprep.subr.mxu0 0.0
        %2943 = vmatpush1.xpose.msra.mxu0 %v2910
        %2944 = vmatprep.subr.mxu0 0.0
        %2945 = vmatpush2.xpose.msra.mxu0 0.0
        %2946 = vmatprep.subr.mxu0 0.0
        %2947 = vmatpush2.xpose.msra.mxu0 0.0
        %2948 = vmatprep.subr.mxu0 0.0
        %2949 = vmatpush2.xpose.msra.mxu0 0.0
        %2950 = vmatprep.subr.mxu0 0.0
        %2951 = vmatpush2.xpose.msra.mxu0 0.0
        %2952 = vmatprep.subr.mxu0 0.0
        %2953 = vmatpush2.xpose.msra.mxu0 0.0
        %2954 = vmatprep.subr.mxu0 0.0
        %2955 = vmatpush2.xpose.msra.mxu0 0.0
        %2956 = vmatprep.subr.mxu0 0.0
        %2957 = vmatpush2.xpose.msra.mxu0 0.0
        %2958 = vmatprep.subr.mxu0 0.0
        %2959 = vmatpush2.xpose.msra.mxu0 0.0
        %2960 = vmatprep.subr.mxu0 0.0
        %2961 = vmatpush2.xpose.msra.mxu0 0.0
        %2962 = vmatprep.subr.mxu0 0.0
        %2963 = vmatpush2.xpose.msra.mxu0 0.0
        %2964 = vmatprep.subr.mxu0 0.0
        %2965 = vmatpush2.xpose.msra.mxu0 0.0
        %2966 = vmatprep.subr.mxu0 0.0
        %2967 = vmatpush2.xpose.msra.mxu0 0.0
        %2968 = vmatprep.subr.mxu0 0.0
        %2969 = vmatpush2.xpose.msra.mxu0 0.0
        %2970 = vmatprep.subr.mxu0 0.0
        %2971 = vmatpush2.xpose.msra.mxu0 0.0
        %2972 = vmatprep.subr.mxu0 0.0
        %2973 = vmatpush2.xpose.msra.mxu0 0.0
        %2974 = vmatprep.subr.mxu0 0.0
        %2975 = vmatpush2.xpose.msra.mxu0 0.0
        %2976 = vmatprep.mubr.f32.mxu0 0.0
        %2977 = vmatmul.mubr.f32.gmra.mxu0 %v2908
        %v2978 = vpop.f32.mrf.mxu0
        %v2979 = vadd.f32 0.0, %v2978
        %v2980 = vpop.f32.mrf.mxu0
        %2981 = vdwg.mxu0
        %v2982 = vmul.f32 %v2979, 0.17677669
        %v2983 = vadd.f32 %v2982, %v1361
        %v2984 = vsel %vm1364, %v2983, -inf
        %2985 = vmax.xlane.f32.xlu0 %v2984
        %v2986 = vpop.xlane.xlu0 %2985
        %v2987 = vsub.f32 %v2983, %v2986
        %v2988 = vmul.f32 %v2987, 1.442695
        %v2989 = vpow.pop %v2988
        %v2990 = vsel %vm1364, %v2989, 0.0
        %2991 = vadd.xlane.f32.xlu0 %v2990
        %v2992 = vpop.xlane.xlu0 %2991
        %v2993 = vrcp.pop %v2992
        %v2994 = vmul.f32 %v2989, %v2993
        %2996 = vrot.lane.b32.xlu0 %v2737, 96
        %v2997 = vpop.permute.xlu0 %2996
        %v3000 = vsel %vm1364, %v2994, 0
        %3002 = vmatprep.subr.mxu0 0.0
        %3003 = vmatpush1.msra.mxu0 0.0
        %3004 = vmatprep.subr.mxu0 0.0
        %3005 = vmatpush1.msra.mxu0 0.0
        %3006 = vmatprep.subr.mxu0 0.0
        %3007 = vmatpush1.msra.mxu0 0.0
        %3008 = vmatprep.subr.mxu0 0.0
        %3009 = vmatpush1.msra.mxu0 0.0
        %3010 = vmatprep.subr.mxu0 0.0
        %3011 = vmatpush1.msra.mxu0 0.0
        %3012 = vmatprep.subr.mxu0 0.0
        %3013 = vmatpush1.msra.mxu0 0.0
        %3014 = vmatprep.subr.mxu0 0.0
        %3015 = vmatpush1.msra.mxu0 0.0
        %3016 = vmatprep.subr.mxu0 0.0
        %3017 = vmatpush1.msra.mxu0 0.0
        %3018 = vmatprep.subr.mxu0 0.0
        %3019 = vmatpush1.msra.mxu0 0.0
        %3020 = vmatprep.subr.mxu0 0.0
        %3021 = vmatpush1.msra.mxu0 0.0
        %3022 = vmatprep.subr.mxu0 0.0
        %3023 = vmatpush1.msra.mxu0 0.0
        %3024 = vmatprep.subr.mxu0 0.0
        %3025 = vmatpush1.msra.mxu0 0.0
        %3026 = vmatprep.subr.mxu0 0.0
        %3027 = vmatpush1.msra.mxu0 0.0
        %3028 = vmatprep.subr.mxu0 0.0
        %3029 = vmatpush1.msra.mxu0 0.0
        %3030 = vmatprep.subr.mxu0 0.0
        %3031 = vmatpush1.msra.mxu0 0.0
        %3032 = vmatprep.subr.mxu0 0.0
        %3033 = vmatpush1.msra.mxu0 %v2997
        %3034 = vmatprep.subr.mxu0 0.0
        %3035 = vmatpush2.msra.mxu0 0.0
        %3036 = vmatprep.subr.mxu0 0.0
        %3037 = vmatpush2.msra.mxu0 0.0
        %3038 = vmatprep.subr.mxu0 0.0
        %3039 = vmatpush2.msra.mxu0 0.0
        %3040 = vmatprep.subr.mxu0 0.0
        %3041 = vmatpush2.msra.mxu0 0.0
        %3042 = vmatprep.subr.mxu0 0.0
        %3043 = vmatpush2.msra.mxu0 0.0
        %3044 = vmatprep.subr.mxu0 0.0
        %3045 = vmatpush2.msra.mxu0 0.0
        %3046 = vmatprep.subr.mxu0 0.0
        %3047 = vmatpush2.msra.mxu0 0.0
        %3048 = vmatprep.subr.mxu0 0.0
        %3049 = vmatpush2.msra.mxu0 0.0
        %3050 = vmatprep.subr.mxu0 0.0
        %3051 = vmatpush2.msra.mxu0 0.0
        %3052 = vmatprep.subr.mxu0 0.0
        %3053 = vmatpush2.msra.mxu0 0.0
        %3054 = vmatprep.subr.mxu0 0.0
        %3055 = vmatpush2.msra.mxu0 0.0
        %3056 = vmatprep.subr.mxu0 0.0
        %3057 = vmatpush2.msra.mxu0 0.0
        %3058 = vmatprep.subr.mxu0 0.0
        %3059 = vmatpush2.msra.mxu0 0.0
        %3060 = vmatprep.subr.mxu0 0.0
        %3061 = vmatpush2.msra.mxu0 0.0
        %3062 = vmatprep.subr.mxu0 0.0
        %3063 = vmatpush2.msra.mxu0 0.0
        %3064 = vmatprep.subr.mxu0 0.0
        %3065 = vmatpush2.msra.mxu0 0.0
        %3066 = vmatprep.mubr.f32.mxu0 0.0
        %3067 = vmatmul.mubr.f32.gmra.mxu0 %v3000
        %v3068 = vpop.f32.mrf.mxu0
        %v3069 = vadd.f32 0.0, %v3068
        %v3070 = vpop.f32.mrf.mxu0
        %3071 = vdwg.mxu0
        %3072 = vrot.lane.b32.xlu0 %v2696, 64
        %v3073 = vpop.permute.xlu0 %3072
        %3074 = vrot.lane.b32.xlu0 %v2698, 64
        %v3075 = vpop.permute.xlu0 %3074
        %v3076 = vsel %vm1279, %v3073, 0
        %v3078 = vsel %vm1279, %v3075, 0
        %3080 = vmatprep.subr.mxu0 0.0
        %3081 = vmatpush1.xpose.msra.mxu0 0.0
        %3082 = vmatprep.subr.mxu0 0.0
        %3083 = vmatpush1.xpose.msra.mxu0 0.0
        %3084 = vmatprep.subr.mxu0 0.0
        %3085 = vmatpush1.xpose.msra.mxu0 0.0
        %3086 = vmatprep.subr.mxu0 0.0
        %3087 = vmatpush1.xpose.msra.mxu0 0.0
        %3088 = vmatprep.subr.mxu0 0.0
        %3089 = vmatpush1.xpose.msra.mxu0 0.0
        %3090 = vmatprep.subr.mxu0 0.0
        %3091 = vmatpush1.xpose.msra.mxu0 0.0
        %3092 = vmatprep.subr.mxu0 0.0
        %3093 = vmatpush1.xpose.msra.mxu0 0.0
        %3094 = vmatprep.subr.mxu0 0.0
        %3095 = vmatpush1.xpose.msra.mxu0 0.0
        %3096 = vmatprep.subr.mxu0 0.0
        %3097 = vmatpush1.xpose.msra.mxu0 0.0
        %3098 = vmatprep.subr.mxu0 0.0
        %3099 = vmatpush1.xpose.msra.mxu0 0.0
        %3100 = vmatprep.subr.mxu0 0.0
        %3101 = vmatpush1.xpose.msra.mxu0 0.0
        %3102 = vmatprep.subr.mxu0 0.0
        %3103 = vmatpush1.xpose.msra.mxu0 0.0
        %3104 = vmatprep.subr.mxu0 0.0
        %3105 = vmatpush1.xpose.msra.mxu0 0.0
        %3106 = vmatprep.subr.mxu0 0.0
        %3107 = vmatpush1.xpose.msra.mxu0 0.0
        %3108 = vmatprep.subr.mxu0 0.0
        %3109 = vmatpush1.xpose.msra.mxu0 0.0
        %3110 = vmatprep.subr.mxu0 0.0
        %3111 = vmatpush1.xpose.msra.mxu0 %v3078
        %3112 = vmatprep.subr.mxu0 0.0
        %3113 = vmatpush2.xpose.msra.mxu0 0.0
        %3114 = vmatprep.subr.mxu0 0.0
        %3115 = vmatpush2.xpose.msra.mxu0 0.0
        %3116 = vmatprep.subr.mxu0 0.0
        %3117 = vmatpush2.xpose.msra.mxu0 0.0
        %3118 = vmatprep.subr.mxu0 0.0
        %3119 = vmatpush2.xpose.msra.mxu0 0.0
        %3120 = vmatprep.subr.mxu0 0.0
        %3121 = vmatpush2.xpose.msra.mxu0 0.0
        %3122 = vmatprep.subr.mxu0 0.0
        %3123 = vmatpush2.xpose.msra.mxu0 0.0
        %3124 = vmatprep.subr.mxu0 0.0
        %3125 = vmatpush2.xpose.msra.mxu0 0.0
        %3126 = vmatprep.subr.mxu0 0.0
        %3127 = vmatpush2.xpose.msra.mxu0 0.0
        %3128 = vmatprep.subr.mxu0 0.0
        %3129 = vmatpush2.xpose.msra.mxu0 0.0
        %3130 = vmatprep.subr.mxu0 0.0
        %3131 = vmatpush2.xpose.msra.mxu0 0.0
        %3132 = vmatprep.subr.mxu0 0.0
        %3133 = vmatpush2.xpose.msra.mxu0 0.0
        %3134 = vmatprep.subr.mxu0 0.0
        %3135 = vmatpush2.xpose.msra.mxu0 0.0
        %3136 = vmatprep.subr.mxu0 0.0
        %3137 = vmatpush2.xpose.msra.mxu0 0.0
        %3138 = vmatprep.subr.mxu0 0.0
        %3139 = vmatpush2.xpose.msra.mxu0 0.0
        %3140 = vmatprep.subr.mxu0 0.0
        %3141 = vmatpush2.xpose.msra.mxu0 0.0
        %3142 = vmatprep.subr.mxu0 0.0
        %3143 = vmatpush2.xpose.msra.mxu0 0.0
        %3144 = vmatprep.mubr.f32.mxu0 0.0
        %3145 = vmatmul.mubr.f32.gmra.mxu0 %v3076
        %v3146 = vpop.f32.mrf.mxu0
        %v3147 = vadd.f32 0.0, %v3146
        %v3148 = vpop.f32.mrf.mxu0
        %3149 = vdwg.mxu0
        %v3150 = vmul.f32 %v3147, 0.17677669
        %v3151 = vadd.f32 %v3150, %v1361
        %v3152 = vsel %vm1364, %v3151, -inf
        %3153 = vmax.xlane.f32.xlu0 %v3152
        %v3154 = vpop.xlane.xlu0 %3153
        %v3155 = vsub.f32 %v3151, %v3154
        %v3156 = vmul.f32 %v3155, 1.442695
        %v3157 = vpow.pop %v3156
        %v3158 = vsel %vm1364, %v3157, 0.0
        %3159 = vadd.xlane.f32.xlu0 %v3158
        %v3160 = vpop.xlane.xlu0 %3159
        %v3161 = vrcp.pop %v3160
        %v3162 = vmul.f32 %v3157, %v3161
        %3163 = vrot.lane.b32.xlu0 %v2737, 64
        %v3164 = vpop.permute.xlu0 %3163
        %v3167 = vsel %vm1364, %v3162, 0
        %3169 = vmatprep.subr.mxu0 0.0
        %3170 = vmatpush1.msra.mxu0 0.0
        %3171 = vmatprep.subr.mxu0 0.0
        %3172 = vmatpush1.msra.mxu0 0.0
        %3173 = vmatprep.subr.mxu0 0.0
        %3174 = vmatpush1.msra.mxu0 0.0
        %3175 = vmatprep.subr.mxu0 0.0
        %3176 = vmatpush1.msra.mxu0 0.0
        %3177 = vmatprep.subr.mxu0 0.0
        %3178 = vmatpush1.msra.mxu0 0.0
        %3179 = vmatprep.subr.mxu0 0.0
        %3180 = vmatpush1.msra.mxu0 0.0
        %3181 = vmatprep.subr.mxu0 0.0
        %3182 = vmatpush1.msra.mxu0 0.0
        %3183 = vmatprep.subr.mxu0 0.0
        %3184 = vmatpush1.msra.mxu0 0.0
        %3185 = vmatprep.subr.mxu0 0.0
        %3186 = vmatpush1.msra.mxu0 0.0
        %3187 = vmatprep.subr.mxu0 0.0
        %3188 = vmatpush1.msra.mxu0 0.0
        %3189 = vmatprep.subr.mxu0 0.0
        %3190 = vmatpush1.msra.mxu0 0.0
        %3191 = vmatprep.subr.mxu0 0.0
        %3192 = vmatpush1.msra.mxu0 0.0
        %3193 = vmatprep.subr.mxu0 0.0
        %3194 = vmatpush1.msra.mxu0 0.0
        %3195 = vmatprep.subr.mxu0 0.0
        %3196 = vmatpush1.msra.mxu0 0.0
        %3197 = vmatprep.subr.mxu0 0.0
        %3198 = vmatpush1.msra.mxu0 0.0
        %3199 = vmatprep.subr.mxu0 0.0
        %3200 = vmatpush1.msra.mxu0 %v3164
        %3201 = vmatprep.subr.mxu0 0.0
        %3202 = vmatpush2.msra.mxu0 0.0
        %3203 = vmatprep.subr.mxu0 0.0
        %3204 = vmatpush2.msra.mxu0 0.0
        %3205 = vmatprep.subr.mxu0 0.0
        %3206 = vmatpush2.msra.mxu0 0.0
        %3207 = vmatprep.subr.mxu0 0.0
        %3208 = vmatpush2.msra.mxu0 0.0
        %3209 = vmatprep.subr.mxu0 0.0
        %3210 = vmatpush2.msra.mxu0 0.0
        %3211 = vmatprep.subr.mxu0 0.0
        %3212 = vmatpush2.msra.mxu0 0.0
        %3213 = vmatprep.subr.mxu0 0.0
        %3214 = vmatpush2.msra.mxu0 0.0
        %3215 = vmatprep.subr.mxu0 0.0
        %3216 = vmatpush2.msra.mxu0 0.0
        %3217 = vmatprep.subr.mxu0 0.0
        %3218 = vmatpush2.msra.mxu0 0.0
        %3219 = vmatprep.subr.mxu0 0.0
        %3220 = vmatpush2.msra.mxu0 0.0
        %3221 = vmatprep.subr.mxu0 0.0
        %3222 = vmatpush2.msra.mxu0 0.0
        %3223 = vmatprep.subr.mxu0 0.0
        %3224 = vmatpush2.msra.mxu0 0.0
        %3225 = vmatprep.subr.mxu0 0.0
        %3226 = vmatpush2.msra.mxu0 0.0
        %3227 = vmatprep.subr.mxu0 0.0
        %3228 = vmatpush2.msra.mxu0 0.0
        %3229 = vmatprep.subr.mxu0 0.0
        %3230 = vmatpush2.msra.mxu0 0.0
        %3231 = vmatprep.subr.mxu0 0.0
        %3232 = vmatpush2.msra.mxu0 0.0
        %3233 = vmatprep.mubr.f32.mxu0 0.0
        %3234 = vmatmul.mubr.f32.gmra.mxu0 %v3167
        %v3235 = vpop.f32.mrf.mxu0
        %v3236 = vadd.f32 0.0, %v3235
        %v3237 = vpop.f32.mrf.mxu0
        %3238 = vdwg.mxu0
        %3239 = vrot.lane.b32.xlu0 %v2696, 32
        %v3240 = vpop.permute.xlu0 %3239
        %3241 = vrot.lane.b32.xlu0 %v2698, 32
        %v3242 = vpop.permute.xlu0 %3241
        %v3243 = vsel %vm1279, %v3240, 0
        %v3245 = vsel %vm1279, %v3242, 0
        %3247 = vmatprep.subr.mxu0 0.0
        %3248 = vmatpush1.xpose.msra.mxu0 0.0
        %3249 = vmatprep.subr.mxu0 0.0
        %3250 = vmatpush1.xpose.msra.mxu0 0.0
        %3251 = vmatprep.subr.mxu0 0.0
        %3252 = vmatpush1.xpose.msra.mxu0 0.0
        %3253 = vmatprep.subr.mxu0 0.0
        %3254 = vmatpush1.xpose.msra.mxu0 0.0
        %3255 = vmatprep.subr.mxu0 0.0
        %3256 = vmatpush1.xpose.msra.mxu0 0.0
        %3257 = vmatprep.subr.mxu0 0.0
        %3258 = vmatpush1.xpose.msra.mxu0 0.0
        %3259 = vmatprep.subr.mxu0 0.0
        %3260 = vmatpush1.xpose.msra.mxu0 0.0
        %3261 = vmatprep.subr.mxu0 0.0
        %3262 = vmatpush1.xpose.msra.mxu0 0.0
        %3263 = vmatprep.subr.mxu0 0.0
        %3264 = vmatpush1.xpose.msra.mxu0 0.0
        %3265 = vmatprep.subr.mxu0 0.0
        %3266 = vmatpush1.xpose.msra.mxu0 0.0
        %3267 = vmatprep.subr.mxu0 0.0
        %3268 = vmatpush1.xpose.msra.mxu0 0.0
        %3269 = vmatprep.subr.mxu0 0.0
        %3270 = vmatpush1.xpose.msra.mxu0 0.0
        %3271 = vmatprep.subr.mxu0 0.0
        %3272 = vmatpush1.xpose.msra.mxu0 0.0
        %3273 = vmatprep.subr.mxu0 0.0
        %3274 = vmatpush1.xpose.msra.mxu0 0.0
        %3275 = vmatprep.subr.mxu0 0.0
        %3276 = vmatpush1.xpose.msra.mxu0 0.0
        %3277 = vmatprep.subr.mxu0 0.0
        %3278 = vmatpush1.xpose.msra.mxu0 %v3245
        %3279 = vmatprep.subr.mxu0 0.0
        %3280 = vmatpush2.xpose.msra.mxu0 0.0
        %3281 = vmatprep.subr.mxu0 0.0
        %3282 = vmatpush2.xpose.msra.mxu0 0.0
        %3283 = vmatprep.subr.mxu0 0.0
        %3284 = vmatpush2.xpose.msra.mxu0 0.0
        %3285 = vmatprep.subr.mxu0 0.0
        %3286 = vmatpush2.xpose.msra.mxu0 0.0
        %3287 = vmatprep.subr.mxu0 0.0
        %3288 = vmatpush2.xpose.msra.mxu0 0.0
        %3289 = vmatprep.subr.mxu0 0.0
        %3290 = vmatpush2.xpose.msra.mxu0 0.0
        %3291 = vmatprep.subr.mxu0 0.0
        %3292 = vmatpush2.xpose.msra.mxu0 0.0
        %3293 = vmatprep.subr.mxu0 0.0
        %3294 = vmatpush2.xpose.msra.mxu0 0.0
        %3295 = vmatprep.subr.mxu0 0.0
        %3296 = vmatpush2.xpose.msra.mxu0 0.0
        %3297 = vmatprep.subr.mxu0 0.0
        %3298 = vmatpush2.xpose.msra.mxu0 0.0
        %3299 = vmatprep.subr.mxu0 0.0
        %3300 = vmatpush2.xpose.msra.mxu0 0.0
        %3301 = vmatprep.subr.mxu0 0.0
        %3302 = vmatpush2.xpose.msra.mxu0 0.0
        %3303 = vmatprep.subr.mxu0 0.0
        %3304 = vmatpush2.xpose.msra.mxu0 0.0
        %3305 = vmatprep.subr.mxu0 0.0
        %3306 = vmatpush2.xpose.msra.mxu0 0.0
        %3307 = vmatprep.subr.mxu0 0.0
        %3308 = vmatpush2.xpose.msra.mxu0 0.0
        %3309 = vmatprep.subr.mxu0 0.0
        %3310 = vmatpush2.xpose.msra.mxu0 0.0
        %3311 = vmatprep.mubr.f32.mxu0 0.0
        %3312 = vmatmul.mubr.f32.gmra.mxu0 %v3243
        %v3313 = vpop.f32.mrf.mxu0
        %v3314 = vadd.f32 0.0, %v3313
        %v3315 = vpop.f32.mrf.mxu0
        %3316 = vdwg.mxu0
        %v3317 = vmul.f32 %v3314, 0.17677669
        %v3318 = vadd.f32 %v3317, %v1361
        %v3319 = vsel %vm1364, %v3318, -inf
        %3320 = vmax.xlane.f32.xlu0 %v3319
        %v3321 = vpop.xlane.xlu0 %3320
        %v3322 = vsub.f32 %v3318, %v3321
        %v3323 = vmul.f32 %v3322, 1.442695
        %v3324 = vpow.pop %v3323
        %v3325 = vsel %vm1364, %v3324, 0.0
        %3326 = vadd.xlane.f32.xlu0 %v3325
        %v3327 = vpop.xlane.xlu0 %3326
        %v3328 = vrcp.pop %v3327
        %v3329 = vmul.f32 %v3324, %v3328
        %3330 = vrot.lane.b32.xlu0 %v2737, 32
        %v3331 = vpop.permute.xlu0 %3330
        %v3334 = vsel %vm1364, %v3329, 0
        %3336 = vmatprep.subr.mxu0 0.0
        %3337 = vmatpush1.msra.mxu0 0.0
        %3338 = vmatprep.subr.mxu0 0.0
        %3339 = vmatpush1.msra.mxu0 0.0
        %3340 = vmatprep.subr.mxu0 0.0
        %3341 = vmatpush1.msra.mxu0 0.0
        %3342 = vmatprep.subr.mxu0 0.0
        %3343 = vmatpush1.msra.mxu0 0.0
        %3344 = vmatprep.subr.mxu0 0.0
        %3345 = vmatpush1.msra.mxu0 0.0
        %3346 = vmatprep.subr.mxu0 0.0
        %3347 = vmatpush1.msra.mxu0 0.0
        %3348 = vmatprep.subr.mxu0 0.0
        %3349 = vmatpush1.msra.mxu0 0.0
        %3350 = vmatprep.subr.mxu0 0.0
        %3351 = vmatpush1.msra.mxu0 0.0
        %3352 = vmatprep.subr.mxu0 0.0
        %3353 = vmatpush1.msra.mxu0 0.0
        %3354 = vmatprep.subr.mxu0 0.0
        %3355 = vmatpush1.msra.mxu0 0.0
        %3356 = vmatprep.subr.mxu0 0.0
        %3357 = vmatpush1.msra.mxu0 0.0
        %3358 = vmatprep.subr.mxu0 0.0
        %3359 = vmatpush1.msra.mxu0 0.0
        %3360 = vmatprep.subr.mxu0 0.0
        %3361 = vmatpush1.msra.mxu0 0.0
        %3362 = vmatprep.subr.mxu0 0.0
        %3363 = vmatpush1.msra.mxu0 0.0
        %3364 = vmatprep.subr.mxu0 0.0
        %3365 = vmatpush1.msra.mxu0 0.0
        %3366 = vmatprep.subr.mxu0 0.0
        %3367 = vmatpush1.msra.mxu0 %v3331
        %3368 = vmatprep.subr.mxu0 0.0
        %3369 = vmatpush2.msra.mxu0 0.0
        %3370 = vmatprep.subr.mxu0 0.0
        %3371 = vmatpush2.msra.mxu0 0.0
        %3372 = vmatprep.subr.mxu0 0.0
        %3373 = vmatpush2.msra.mxu0 0.0
        %3374 = vmatprep.subr.mxu0 0.0
        %3375 = vmatpush2.msra.mxu0 0.0
        %3376 = vmatprep.subr.mxu0 0.0
        %3377 = vmatpush2.msra.mxu0 0.0
        %3378 = vmatprep.subr.mxu0 0.0
        %3379 = vmatpush2.msra.mxu0 0.0
        %3380 = vmatprep.subr.mxu0 0.0
        %3381 = vmatpush2.msra.mxu0 0.0
        %3382 = vmatprep.subr.mxu0 0.0
        %3383 = vmatpush2.msra.mxu0 0.0
        %3384 = vmatprep.subr.mxu0 0.0
        %3385 = vmatpush2.msra.mxu0 0.0
        %3386 = vmatprep.subr.mxu0 0.0
        %3387 = vmatpush2.msra.mxu0 0.0
        %3388 = vmatprep.subr.mxu0 0.0
        %3389 = vmatpush2.msra.mxu0 0.0
        %3390 = vmatprep.subr.mxu0 0.0
        %3391 = vmatpush2.msra.mxu0 0.0
        %3392 = vmatprep.subr.mxu0 0.0
        %3393 = vmatpush2.msra.mxu0 0.0
        %3394 = vmatprep.subr.mxu0 0.0
        %3395 = vmatpush2.msra.mxu0 0.0
        %3396 = vmatprep.subr.mxu0 0.0
        %3397 = vmatpush2.msra.mxu0 0.0
        %3398 = vmatprep.subr.mxu0 0.0
        %3399 = vmatpush2.msra.mxu0 0.0
        %3400 = vmatprep.mubr.f32.mxu0 0.0
        %3401 = vmatmul.mubr.f32.gmra.mxu0 %v3334
        %v3402 = vpop.f32.mrf.mxu0
        %v3403 = vadd.f32 0.0, %v3402
        %v3404 = vpop.f32.mrf.mxu0
        %3405 = vdwg.mxu0
        %3407 = vrot.lane.b32.xlu0 %v3069, 32
        %v3408 = vpop.permute.xlu0 %3407
        %3411 = vrot.lane.b32.xlu0 %v3236, 64
        %v3412 = vpop.permute.xlu0 %3411
        %3415 = vrot.lane.b32.xlu0 %v3403, 96
        %v3416 = vpop.permute.xlu0 %3415
        %v3418 = vsel %vm1279, %v2901, %v3408
        %v3419 = vsel %vm1964, %v3418, %v3412
        %v3420 = vsel %vm1966, %v3419, %v3416
        %s3421 = scalar_lea.vmem %s8, 64
        %v3422 = vld [vmem:[%s3421] sm:$0xf]
        %v3423 = vld [vmem:[%s3421 + $0x4] sm:$0xf]
        %v3424 = vld [vmem:[%s3421 + $0x8] sm:$0xf]
        %v3425 = vld [vmem:[%s3421 + $0xc] sm:$0xf]
        %v3426 = vld [vmem:[%s3421 + $0x10] sm:$0xf]
        %v3427 = vld [vmem:[%s3421 + $0x14] sm:$0xf]
        %v3428 = vld [vmem:[%s3421 + $0x18] sm:$0xf]
        %v3429 = vld [vmem:[%s3421 + $0x1c] sm:$0xf]
        %v3430 = vld [vmem:[%s3421 + $0x20] sm:$0xf]
        %v3431 = vld [vmem:[%s3421 + $0x24] sm:$0xf]
        %v3432 = vld [vmem:[%s3421 + $0x28] sm:$0xf]
        %v3433 = vld [vmem:[%s3421 + $0x2c] sm:$0xf]
        %v3434 = vld [vmem:[%s3421 + $0x30] sm:$0xf]
        %v3435 = vld [vmem:[%s3421 + $0x34] sm:$0xf]
        %v3436 = vld [vmem:[%s3421 + $0x38] sm:$0xf]
        %v3437 = vld [vmem:[%s3421 + $0x3c] sm:$0xf]
        %s3438 = scalar_lea.vmem [#allocation10], 1
        %v3439 = vld [vmem:[%s3438] sm:$0x1]
        %v3440 = vpack.c.bf16 %v3420, %v3420
        %v3442 = vlaneseq
        %v3443 = vshrl.u32 %v3442, 7
        %v3444 = vsub.s32 0, %v3443
        %v3445 = vrot.slane %v3439, %v3444
        %v3463 = vunpack.c.l.b16 %v3422
        %v3464 = vunpack.c.l.b16 %v3423
        %v3465 = vunpack.c.l.b16 %v3424
        %v3466 = vunpack.c.l.b16 %v3425
        %v3467 = vunpack.c.l.b16 %v3426
        %v3468 = vunpack.c.l.b16 %v3427
        %v3469 = vunpack.c.l.b16 %v3428
        %v3470 = vunpack.c.l.b16 %v3429
        %v3471 = vunpack.c.l.b16 %v3430
        %v3472 = vunpack.c.l.b16 %v3431
        %v3473 = vunpack.c.l.b16 %v3432
        %v3474 = vunpack.c.l.b16 %v3433
        %v3475 = vunpack.c.l.b16 %v3434
        %v3476 = vunpack.c.l.b16 %v3435
        %v3477 = vunpack.c.l.b16 %v3436
        %v3478 = vunpack.c.l.b16 %v3437
        %v3479 = vpack.c.b16 %v3464, %v3463
        %v3480 = vpack.c.b16 %v3466, %v3465
        %v3481 = vpack.c.b16 %v3468, %v3467
        %v3482 = vpack.c.b16 %v3470, %v3469
        %v3483 = vpack.c.b16 %v3472, %v3471
        %v3484 = vpack.c.b16 %v3474, %v3473
        %v3485 = vpack.c.b16 %v3476, %v3475
        %v3486 = vpack.c.b16 %v3478, %v3477
        %3495 = vmatprep.subr.bf16.mxu0 0
        %3496 = vmatpush1.bf16.msra.mxu0 %v3486
        %3497 = vmatprep.subr.bf16.mxu0 0
        %3498 = vmatpush1.bf16.msra.mxu0 %v3485
        %3499 = vmatprep.subr.bf16.mxu0 0
        %3500 = vmatpush1.bf16.msra.mxu0 %v3484
        %3501 = vmatprep.subr.bf16.mxu0 0
        %3502 = vmatpush1.bf16.msra.mxu0 %v3483
        %3503 = vmatprep.subr.bf16.mxu0 0
        %3504 = vmatpush1.bf16.msra.mxu0 %v3482
        %3505 = vmatprep.subr.bf16.mxu0 0
        %3506 = vmatpush1.bf16.msra.mxu0 %v3481
        %3507 = vmatprep.subr.bf16.mxu0 0
        %3508 = vmatpush1.bf16.msra.mxu0 %v3480
        %3509 = vmatprep.subr.bf16.mxu0 0
        %3510 = vmatpush1.bf16.msra.mxu0 %v3479
        %3511 = vmatprep.subr.bf16.mxu0 0
        %3512 = vmatpush2.bf16.msra.mxu0 0
        %3513 = vmatprep.subr.bf16.mxu0 0
        %3514 = vmatpush2.bf16.msra.mxu0 0
        %3515 = vmatprep.subr.bf16.mxu0 0
        %3516 = vmatpush2.bf16.msra.mxu0 0
        %3517 = vmatprep.subr.bf16.mxu0 0
        %3518 = vmatpush2.bf16.msra.mxu0 0
        %3519 = vmatprep.subr.bf16.mxu0 0
        %3520 = vmatpush2.bf16.msra.mxu0 0
        %3521 = vmatprep.subr.bf16.mxu0 0
        %3522 = vmatpush2.bf16.msra.mxu0 0
        %3523 = vmatprep.subr.bf16.mxu0 0
        %3524 = vmatpush2.bf16.msra.mxu0 0
        %3525 = vmatprep.subr.bf16.mxu0 0
        %3526 = vmatpush2.bf16.msra.mxu0 0
        %3527 = vmatprep.mubr.bf16.mxu0 0
        %3528 = vmatmul.mubr.bf16.gmra.mxu0 %v3440
        %v3529 = vpop.f32.mrf.mxu0
        %v3530 = vadd.f32 %v3445, %v3529
        %v3531 = vpop.f32.mrf.mxu0
        %v3532 = vpop.f32.mrf.mxu0
        %v3533 = vpop.f32.mrf.mxu0
        %3534 = vdwg.mxu0
        %v3535 = vadd.f32 %v2480, %v3530
        %s3536 = scalar_lea.vmem [#allocation11], 1
        %v3537 = vld [vmem:[%s3536] sm:$0x1]
        %s3538 = scalar_lea.vmem [#allocation13], 1
        %v3539 = vld [vmem:[%s3538] sm:$0x1]
        %3540 = vadd.xlane.f32.xlu0 %v3535
        %v3541 = vpop.xlane.xlu0 %3540
        %v3542 = vmul.f32 %v3541, %v993
        %v3543 = vsub.f32 %v3535, %v3542
        %v3544 = vmul.f32 %v3543, %v3543
        %3545 = vadd.xlane.f32.xlu0 %v3544
        %v3546 = vpop.xlane.xlu0 %3545
        %v3547 = vmul.f32 %v3546, %v993
        %v3548 = vadd.f32 %v3547, 1e-12
        %v3549 = vrsqrt.pop %v3548
        %v3550 = vmul.f32 %v3543, %v3549
        %v3552 = vlaneseq
        %v3553 = vshrl.u32 %v3552, 7
        %v3554 = vsub.s32 0, %v3553
        %v3555 = vrot.slane %v3537, %v3554
        %v3557 = vmul.f32 %v3550, %v3555
        %v3559 = vlaneseq
        %v3560 = vshrl.u32 %v3559, 7
        %v3561 = vsub.s32 0, %v3560
        %v3562 = vrot.slane %v3539, %v3561
        %v3564 = vadd.f32 %v3557, %v3562
        %s3565 = scalar_lea.vmem [#allocation14], 128
        %v3566 = vld [vmem:[%s3565] sm:$0xff]
        %v3567 = vld [vmem:[%s3565 + $0x8] sm:$0xff]
        %v3568 = vld [vmem:[%s3565 + $0x10] sm:$0xff]
        %v3569 = vld [vmem:[%s3565 + $0x18] sm:$0xff]
        %v3570 = vld [vmem:[%s3565 + $0x20] sm:$0xff]
        %v3571 = vld [vmem:[%s3565 + $0x28] sm:$0xff]
        %v3572 = vld [vmem:[%s3565 + $0x30] sm:$0xff]
        %v3573 = vld [vmem:[%s3565 + $0x38] sm:$0xff]
        %v3574 = vld [vmem:[%s3565 + $0x40] sm:$0xff]
        %v3575 = vld [vmem:[%s3565 + $0x48] sm:$0xff]
        %v3576 = vld [vmem:[%s3565 + $0x50] sm:$0xff]
        %v3577 = vld [vmem:[%s3565 + $0x58] sm:$0xff]
        %v3578 = vld [vmem:[%s3565 + $0x60] sm:$0xff]
        %v3579 = vld [vmem:[%s3565 + $0x68] sm:$0xff]
        %v3580 = vld [vmem:[%s3565 + $0x70] sm:$0xff]
        %v3581 = vld [vmem:[%s3565 + $0x78] sm:$0xff]
        %s3582 = scalar_lea.vmem %s13, 2
        %v3583 = vld [vmem:[%s3582] sm:$0x3]
        %v3584 = vpack.c.bf16 %v3564, %v3564
        %v3586 = vlaneseq
        %v3587 = vshrl.u32 %v3586, 7
        %v3588 = vsub.s32 0, %v3587
        %v3589 = vrot.slane %v3583, %v3588
        %v3590 = vlaneseq
        %v3591 = vshrl.u32 %v3590, 7
        %v3592 = vsub.s32 1, %v3591
        %v3593 = vrot.slane %v3583, %v3592
        %v3612 = vunpack.c.l.b16 %v3566
        %v3613 = vunpack.c.h.b16 %v3566
        %v3614 = vunpack.c.l.b16 %v3567
        %v3615 = vunpack.c.h.b16 %v3567
        %v3616 = vunpack.c.l.b16 %v3568
        %v3617 = vunpack.c.h.b16 %v3568
        %v3618 = vunpack.c.l.b16 %v3569
        %v3619 = vunpack.c.h.b16 %v3569
        %v3620 = vunpack.c.l.b16 %v3570
        %v3621 = vunpack.c.h.b16 %v3570
        %v3622 = vunpack.c.l.b16 %v3571
        %v3623 = vunpack.c.h.b16 %v3571
        %v3624 = vunpack.c.l.b16 %v3572
        %v3625 = vunpack.c.h.b16 %v3572
        %v3626 = vunpack.c.l.b16 %v3573
        %v3627 = vunpack.c.h.b16 %v3573
        %v3628 = vunpack.c.l.b16 %v3574
        %v3629 = vunpack.c.h.b16 %v3574
        %v3630 = vunpack.c.l.b16 %v3575
        %v3631 = vunpack.c.h.b16 %v3575
        %v3632 = vunpack.c.l.b16 %v3576
        %v3633 = vunpack.c.h.b16 %v3576
        %v3634 = vunpack.c.l.b16 %v3577
        %v3635 = vunpack.c.h.b16 %v3577
        %v3636 = vunpack.c.l.b16 %v3578
        %v3637 = vunpack.c.h.b16 %v3578
        %v3638 = vunpack.c.l.b16 %v3579
        %v3639 = vunpack.c.h.b16 %v3579
        %v3640 = vunpack.c.l.b16 %v3580
        %v3641 = vunpack.c.h.b16 %v3580
        %v3642 = vunpack.c.l.b16 %v3581
        %v3643 = vunpack.c.h.b16 %v3581
        %v3644 = vpack.c.b16 %v3614, %v3612
        %v3645 = vpack.c.b16 %v3615, %v3613
        %v3646 = vpack.c.b16 %v3618, %v3616
        %v3647 = vpack.c.b16 %v3619, %v3617
        %v3648 = vpack.c.b16 %v3622, %v3620
        %v3649 = vpack.c.b16 %v3623, %v3621
        %v3650 = vpack.c.b16 %v3626, %v3624
        %v3651 = vpack.c.b16 %v3627, %v3625
        %v3652 = vpack.c.b16 %v3630, %v3628
        %v3653 = vpack.c.b16 %v3631, %v3629
        %v3654 = vpack.c.b16 %v3634, %v3632
        %v3655 = vpack.c.b16 %v3635, %v3633
        %v3656 = vpack.c.b16 %v3638, %v3636
        %v3657 = vpack.c.b16 %v3639, %v3637
        %v3658 = vpack.c.b16 %v3642, %v3640
        %v3659 = vpack.c.b16 %v3643, %v3641
        %3676 = vmatprep.subr.bf16.mxu0 %v3659
        %3677 = vmatpush1.bf16.msra.mxu0 %v3658
        %3678 = vmatprep.subr.bf16.mxu0 %v3657
        %3679 = vmatpush1.bf16.msra.mxu0 %v3656
        %3680 = vmatprep.subr.bf16.mxu0 %v3655
        %3681 = vmatpush1.bf16.msra.mxu0 %v3654
        %3682 = vmatprep.subr.bf16.mxu0 %v3653
        %3683 = vmatpush1.bf16.msra.mxu0 %v3652
        %3684 = vmatprep.subr.bf16.mxu0 %v3651
        %3685 = vmatpush1.bf16.msra.mxu0 %v3650
        %3686 = vmatprep.subr.bf16.mxu0 %v3649
        %3687 = vmatpush1.bf16.msra.mxu0 %v3648
        %3688 = vmatprep.subr.bf16.mxu0 %v3647
        %3689 = vmatpush1.bf16.msra.mxu0 %v3646
        %3690 = vmatprep.subr.bf16.mxu0 %v3645
        %3691 = vmatpush1.bf16.msra.mxu0 %v3644
        %3692 = vmatprep.subr.bf16.mxu0 0
        %3693 = vmatpush2.bf16.msra.mxu0 0
        %3694 = vmatprep.subr.bf16.mxu0 0
        %3695 = vmatpush2.bf16.msra.mxu0 0
        %3696 = vmatprep.subr.bf16.mxu0 0
        %3697 = vmatpush2.bf16.msra.mxu0 0
        %3698 = vmatprep.subr.bf16.mxu0 0
        %3699 = vmatpush2.bf16.msra.mxu0 0
        %3700 = vmatprep.subr.bf16.mxu0 0
        %3701 = vmatpush2.bf16.msra.mxu0 0
        %3702 = vmatprep.subr.bf16.mxu0 0
        %3703 = vmatpush2.bf16.msra.mxu0 0
        %3704 = vmatprep.subr.bf16.mxu0 0
        %3705 = vmatpush2.bf16.msra.mxu0 0
        %3706 = vmatprep.subr.bf16.mxu0 0
        %3707 = vmatpush2.bf16.msra.mxu0 0
        %3708 = vmatprep.mubr.bf16.mxu0 0
        %3709 = vmatmul.mubr.bf16.gmra.mxu0 %v3584
        %v3710 = vpop.f32.mrf.mxu0
        %v3711 = vadd.f32 %v3589, %v3710
        %v3712 = vpop.f32.mrf.mxu0
        %v3713 = vadd.f32 %v3593, %v3712
        %v3714 = vpop.f32.mrf.mxu0
        %v3715 = vpop.f32.mrf.mxu0
        %3716 = vdwg.mxu0
        %v3717 = vmul.f32 %v3711, 0.5
        %v3718 = vmul.f32 %v3713, 0.5
        %v3719 = vmul.f32 %v3711, 0.044715
        %v3720 = vmul.f32 %v3713, 0.044715
        %v3721 = vmul.f32 %v3719, %v3711
        %v3722 = vmul.f32 %v3720, %v3713
        %v3723 = vmul.f32 %v3721, %v3711
        %v3724 = vmul.f32 %v3722, %v3713
        %v3725 = vadd.f32 %v3711, %v3723
        %v3726 = vadd.f32 %v3713, %v3724
        %v3727 = vmul.f32 %v3725, 0.7978846
        %v3728 = vmul.f32 %v3726, 0.7978846
        %v3729 = vtanh.pop %v3727
        %v3730 = vtanh.pop %v3728
        %v3731 = vadd.f32 %v3729, 1.0
        %v3732 = vadd.f32 %v3730, 1.0
        %v3733 = vmul.f32 %v3717, %v3731
        %v3734 = vmul.f32 %v3718, %v3732
        %s3735 = scalar_lea.vmem [#allocation16], 128
        %v3736 = vld [vmem:[%s3735] sm:$0xf]
        %v3737 = vld [vmem:[%s3735 + $0x4] sm:$0xf]
        %v3738 = vld [vmem:[%s3735 + $0x8] sm:$0xf]
        %v3739 = vld [vmem:[%s3735 + $0xc] sm:$0xf]
        %v3740 = vld [vmem:[%s3735 + $0x10] sm:$0xf]
        %v3741 = vld [vmem:[%s3735 + $0x14] sm:$0xf]
        %v3742 = vld [vmem:[%s3735 + $0x18] sm:$0xf]
        %v3743 = vld [vmem:[%s3735 + $0x1c] sm:$0xf]
        %v3744 = vld [vmem:[%s3735 + $0x20] sm:$0xf]
        %v3745 = vld [vmem:[%s3735 + $0x24] sm:$0xf]
        %v3746 = vld [vmem:[%s3735 + $0x28] sm:$0xf]
        %v3747 = vld [vmem:[%s3735 + $0x2c] sm:$0xf]
        %v3748 = vld [vmem:[%s3735 + $0x30] sm:$0xf]
        %v3749 = vld [vmem:[%s3735 + $0x34] sm:$0xf]
        %v3750 = vld [vmem:[%s3735 + $0x38] sm:$0xf]
        %v3751 = vld [vmem:[%s3735 + $0x3c] sm:$0xf]
        %v3752 = vld [vmem:[%s3735 + $0x40] sm:$0xf]
        %v3753 = vld [vmem:[%s3735 + $0x44] sm:$0xf]
        %v3754 = vld [vmem:[%s3735 + $0x48] sm:$0xf]
        %v3755 = vld [vmem:[%s3735 + $0x4c] sm:$0xf]
        %v3756 = vld [vmem:[%s3735 + $0x50] sm:$0xf]
        %v3757 = vld [vmem:[%s3735 + $0x54] sm:$0xf]
        %v3758 = vld [vmem:[%s3735 + $0x58] sm:$0xf]
        %v3759 = vld [vmem:[%s3735 + $0x5c] sm:$0xf]
        %v3760 = vld [vmem:[%s3735 + $0x60] sm:$0xf]
        %v3761 = vld [vmem:[%s3735 + $0x64] sm:$0xf]
        %v3762 = vld [vmem:[%s3735 + $0x68] sm:$0xf]
        %v3763 = vld [vmem:[%s3735 + $0x6c] sm:$0xf]
        %v3764 = vld [vmem:[%s3735 + $0x70] sm:$0xf]
        %v3765 = vld [vmem:[%s3735 + $0x74] sm:$0xf]
        %v3766 = vld [vmem:[%s3735 + $0x78] sm:$0xf]
        %v3767 = vld [vmem:[%s3735 + $0x7c] sm:$0xf]
        %s3768 = scalar_lea.vmem [#allocation17], 1
        %v3769 = vld [vmem:[%s3768] sm:$0x1]
        %v3770 = vpack.c.bf16 %v3733, %v3733
        %v3771 = vpack.c.bf16 %v3734, %v3734
        %v3773 = vlaneseq
        %v3774 = vshrl.u32 %v3773, 7
        %v3775 = vsub.s32 0, %v3774
        %v3776 = vrot.slane %v3769, %v3775
        %v3810 = vunpack.c.l.b16 %v3736
        %v3811 = vunpack.c.l.b16 %v3737
        %v3812 = vunpack.c.l.b16 %v3738
        %v3813 = vunpack.c.l.b16 %v3739
        %v3814 = vunpack.c.l.b16 %v3740
        %v3815 = vunpack.c.l.b16 %v3741
        %v3816 = vunpack.c.l.b16 %v3742
        %v3817 = vunpack.c.l.b16 %v3743
        %v3818 = vunpack.c.l.b16 %v3744
        %v3819 = vunpack.c.l.b16 %v3745
        %v3820 = vunpack.c.l.b16 %v3746
        %v3821 = vunpack.c.l.b16 %v3747
        %v3822 = vunpack.c.l.b16 %v3748
        %v3823 = vunpack.c.l.b16 %v3749
        %v3824 = vunpack.c.l.b16 %v3750
        %v3825 = vunpack.c.l.b16 %v3751
        %v3826 = vunpack.c.l.b16 %v3752
        %v3827 = vunpack.c.l.b16 %v3753
        %v3828 = vunpack.c.l.b16 %v3754
        %v3829 = vunpack.c.l.b16 %v3755
        %v3830 = vunpack.c.l.b16 %v3756
        %v3831 = vunpack.c.l.b16 %v3757
        %v3832 = vunpack.c.l.b16 %v3758
        %v3833 = vunpack.c.l.b16 %v3759
        %v3834 = vunpack.c.l.b16 %v3760
        %v3835 = vunpack.c.l.b16 %v3761
        %v3836 = vunpack.c.l.b16 %v3762
        %v3837 = vunpack.c.l.b16 %v3763
        %v3838 = vunpack.c.l.b16 %v3764
        %v3839 = vunpack.c.l.b16 %v3765
        %v3840 = vunpack.c.l.b16 %v3766
        %v3841 = vunpack.c.l.b16 %v3767
        %v3842 = vpack.c.b16 %v3811, %v3810
        %v3843 = vpack.c.b16 %v3813, %v3812
        %v3844 = vpack.c.b16 %v3815, %v3814
        %v3845 = vpack.c.b16 %v3817, %v3816
        %v3846 = vpack.c.b16 %v3819, %v3818
        %v3847 = vpack.c.b16 %v3821, %v3820
        %v3848 = vpack.c.b16 %v3823, %v3822
        %v3849 = vpack.c.b16 %v3825, %v3824
        %v3850 = vpack.c.b16 %v3827, %v3826
        %v3851 = vpack.c.b16 %v3829, %v3828
        %v3852 = vpack.c.b16 %v3831, %v3830
        %v3853 = vpack.c.b16 %v3833, %v3832
        %v3854 = vpack.c.b16 %v3835, %v3834
        %v3855 = vpack.c.b16 %v3837, %v3836
        %v3856 = vpack.c.b16 %v3839, %v3838
        %v3857 = vpack.c.b16 %v3841, %v3840
        %3874 = vmatprep.subr.bf16.mxu0 0
        %3875 = vmatpush1.bf16.msra.mxu0 %v3849
        %3876 = vmatprep.subr.bf16.mxu0 0
        %3877 = vmatpush1.bf16.msra.mxu0 %v3848
        %3878 = vmatprep.subr.bf16.mxu0 0
        %3879 = vmatpush1.bf16.msra.mxu0 %v3847
        %3880 = vmatprep.subr.bf16.mxu0 0
        %3881 = vmatpush1.bf16.msra.mxu0 %v3846
        %3882 = vmatprep.subr.bf16.mxu0 0
        %3883 = vmatpush1.bf16.msra.mxu0 %v3845
        %3884 = vmatprep.subr.bf16.mxu0 0
        %3885 = vmatpush1.bf16.msra.mxu0 %v3844
        %3886 = vmatprep.subr.bf16.mxu0 0
        %3887 = vmatpush1.bf16.msra.mxu0 %v3843
        %3888 = vmatprep.subr.bf16.mxu0 0
        %3889 = vmatpush1.bf16.msra.mxu0 %v3842
        %3890 = vmatprep.subr.bf16.mxu0 0
        %3891 = vmatpush2.bf16.msra.mxu0 %v3857
        %3892 = vmatprep.subr.bf16.mxu0 0
        %3893 = vmatpush2.bf16.msra.mxu0 %v3856
        %3894 = vmatprep.subr.bf16.mxu0 0
        %3895 = vmatpush2.bf16.msra.mxu0 %v3855
        %3896 = vmatprep.subr.bf16.mxu0 0
        %3897 = vmatpush2.bf16.msra.mxu0 %v3854
        %3898 = vmatprep.subr.bf16.mxu0 0
        %3899 = vmatpush2.bf16.msra.mxu0 %v3853
        %3900 = vmatprep.subr.bf16.mxu0 0
        %3901 = vmatpush2.bf16.msra.mxu0 %v3852
        %3902 = vmatprep.subr.bf16.mxu0 0
        %3903 = vmatpush2.bf16.msra.mxu0 %v3851
        %3904 = vmatprep.subr.bf16.mxu0 0
        %3905 = vmatpush2.bf16.msra.mxu0 %v3850
        %3906 = vmatprep.mubr.bf16.mxu0 %v3771
        %3907 = vmatmul.mubr.bf16.gmra.mxu0 %v3770
        %v3908 = vpop.f32.mrf.mxu0
        %v3909 = vadd.f32 %v3776, %v3908
        %v3910 = vpop.f32.mrf.mxu0
        %v3911 = vpop.f32.mrf.mxu0
        %v3912 = vpop.f32.mrf.mxu0
        %3913 = vdwg.mxu0
        %v3914 = vadd.f32 %v3564, %v3909
        %s3915 = scalar_lea.vmem [#allocation19], 1
        %v3916 = vld [vmem:[%s3915] sm:$0x1]
        %s3917 = scalar_lea.vmem [#allocation20], 1
        %v3918 = vld [vmem:[%s3917] sm:$0x1]
        %3919 = vadd.xlane.f32.xlu0 %v3914
        %v3920 = vpop.xlane.xlu0 %3919
        %v3921 = vmul.f32 %v3920, %v993
        %v3922 = vsub.f32 %v3914, %v3921
        %v3923 = vmul.f32 %v3922, %v3922
        %3924 = vadd.xlane.f32.xlu0 %v3923
        %v3925 = vpop.xlane.xlu0 %3924
        %v3926 = vmul.f32 %v3925, %v993
        %v3927 = vadd.f32 %v3926, 1e-12
        %v3928 = vrsqrt.pop %v3927
        %v3929 = vmul.f32 %v3922, %v3928
        %v3931 = vlaneseq
        %v3932 = vshrl.u32 %v3931, 7
        %v3933 = vsub.s32 0, %v3932
        %v3934 = vrot.slane %v3916, %v3933
        %v3936 = vmul.f32 %v3929, %v3934
        %v3938 = vlaneseq
        %v3939 = vshrl.u32 %v3938, 7
        %v3940 = vsub.s32 0, %v3939
        %v3941 = vrot.slane %v3918, %v3940
        %v3943 = vadd.f32 %v3936, %v3941
        %v3944 = vld [vmem:[%s18] sm:$0xf]
        %v3945 = vld [vmem:[%s18 + $0x4] sm:$0xf]
        %v3946 = vld [vmem:[%s18 + $0x8] sm:$0xf]
        %v3947 = vld [vmem:[%s18 + $0xc] sm:$0xf]
        %v3948 = vld [vmem:[%s18 + $0x10] sm:$0xf]
        %v3949 = vld [vmem:[%s18 + $0x14] sm:$0xf]
        %v3950 = vld [vmem:[%s18 + $0x18] sm:$0xf]
        %v3951 = vld [vmem:[%s18 + $0x1c] sm:$0xf]
        %v3952 = vld [vmem:[%s18 + $0x20] sm:$0xf]
        %v3953 = vld [vmem:[%s18 + $0x24] sm:$0xf]
        %v3954 = vld [vmem:[%s18 + $0x28] sm:$0xf]
        %v3955 = vld [vmem:[%s18 + $0x2c] sm:$0xf]
        %v3956 = vld [vmem:[%s18 + $0x30] sm:$0xf]
        %v3957 = vld [vmem:[%s18 + $0x34] sm:$0xf]
        %v3958 = vld [vmem:[%s18 + $0x38] sm:$0xf]
        %v3959 = vld [vmem:[%s18 + $0x3c] sm:$0xf]
        %v3960 = vld [vmem:[#allocation22] sm:$0x1]
        %v3961 = vpack.c.bf16 %v3943, %v3943
        %v3978 = vunpack.c.l.b16 %v3944
        %v3979 = vunpack.c.l.b16 %v3945
        %v3980 = vunpack.c.l.b16 %v3946
        %v3981 = vunpack.c.l.b16 %v3947
        %v3982 = vunpack.c.l.b16 %v3948
        %v3983 = vunpack.c.l.b16 %v3949
        %v3984 = vunpack.c.l.b16 %v3950
        %v3985 = vunpack.c.l.b16 %v3951
        %v3986 = vunpack.c.l.b16 %v3952
        %v3987 = vunpack.c.l.b16 %v3953
        %v3988 = vunpack.c.l.b16 %v3954
        %v3989 = vunpack.c.l.b16 %v3955
        %v3990 = vunpack.c.l.b16 %v3956
        %v3991 = vunpack.c.l.b16 %v3957
        %v3992 = vunpack.c.l.b16 %v3958
        %v3993 = vunpack.c.l.b16 %v3959
        %v3994 = vpack.c.b16 %v3979, %v3978
        %v3995 = vpack.c.b16 %v3981, %v3980
        %v3996 = vpack.c.b16 %v3983, %v3982
        %v3997 = vpack.c.b16 %v3985, %v3984
        %v3998 = vpack.c.b16 %v3987, %v3986
        %v3999 = vpack.c.b16 %v3989, %v3988
        %v4000 = vpack.c.b16 %v3991, %v3990
        %v4001 = vpack.c.b16 %v3993, %v3992
        %4010 = vmatprep.subr.bf16.mxu0 0
        %4011 = vmatpush1.bf16.msra.mxu0 %v4001
        %4012 = vmatprep.subr.bf16.mxu0 0
        %4013 = vmatpush1.bf16.msra.mxu0 %v4000
        %4014 = vmatprep.subr.bf16.mxu0 0
        %4015 = vmatpush1.bf16.msra.mxu0 %v3999
        %4016 = vmatprep.subr.bf16.mxu0 0
        %4017 = vmatpush1.bf16.msra.mxu0 %v3998
        %4018 = vmatprep.subr.bf16.mxu0 0
        %4019 = vmatpush1.bf16.msra.mxu0 %v3997
        %4020 = vmatprep.subr.bf16.mxu0 0
        %4021 = vmatpush1.bf16.msra.mxu0 %v3996
        %4022 = vmatprep.subr.bf16.mxu0 0
        %4023 = vmatpush1.bf16.msra.mxu0 %v3995
        %4024 = vmatprep.subr.bf16.mxu0 0
        %4025 = vmatpush1.bf16.msra.mxu0 %v3994
        %4026 = vmatprep.subr.bf16.mxu0 0
        %4027 = vmatpush2.bf16.msra.mxu0 0
        %4028 = vmatprep.subr.bf16.mxu0 0
        %4029 = vmatpush2.bf16.msra.mxu0 0
        %4030 = vmatprep.subr.bf16.mxu0 0
        %4031 = vmatpush2.bf16.msra.mxu0 0
        %4032 = vmatprep.subr.bf16.mxu0 0
        %4033 = vmatpush2.bf16.msra.mxu0 0
        %4034 = vmatprep.subr.bf16.mxu0 0
        %4035 = vmatpush2.bf16.msra.mxu0 0
        %4036 = vmatprep.subr.bf16.mxu0 0
        %4037 = vmatpush2.bf16.msra.mxu0 0
        %4038 = vmatprep.subr.bf16.mxu0 0
        %4039 = vmatpush2.bf16.msra.mxu0 0
        %4040 = vmatprep.subr.bf16.mxu0 0
        %4041 = vmatpush2.bf16.msra.mxu0 0
        %4042 = vmatprep.mubr.bf16.mxu0 0
        %4043 = vmatmul.mubr.bf16.gmra.mxu0 %v3961
        %v4044 = vpop.f32.mrf.mxu0
        %v4045 = vadd.f32 %v3960, %v4044
        %v4046 = vpop.f32.mrf.mxu0
        %v4047 = vpop.f32.mrf.mxu0
        %v4048 = vpop.f32.mrf.mxu0
        %4049 = vdwg.mxu0
        %v4050 = vmax.f32 %v4045, 0.0
        %v4051 = vld [vmem:[%s20] sm:$0xf]
        %v4052 = vld [vmem:[%s20 + $0x4] sm:$0xf]
        %v4053 = vld [vmem:[%s20 + $0x8] sm:$0xf]
        %v4054 = vld [vmem:[%s20 + $0xc] sm:$0xf]
        %v4055 = vld [vmem:[%s20 + $0x10] sm:$0xf]
        %v4056 = vld [vmem:[%s20 + $0x14] sm:$0xf]
        %v4057 = vld [vmem:[%s20 + $0x18] sm:$0xf]
        %v4058 = vld [vmem:[%s20 + $0x1c] sm:$0xf]
        %v4059 = vld [vmem:[#allocation2] sm:$0x1]
        %v4060 = vpack.c.bf16 %v4050, %v4050
        %v4069 = vunpack.c.l.b16 %v4051
        %v4070 = vunpack.c.l.b16 %v4052
        %v4071 = vunpack.c.l.b16 %v4053
        %v4072 = vunpack.c.l.b16 %v4054
        %v4073 = vunpack.c.l.b16 %v4055
        %v4074 = vunpack.c.l.b16 %v4056
        %v4075 = vunpack.c.l.b16 %v4057
        %v4076 = vunpack.c.l.b16 %v4058
        %v4077 = vpack.c.b16 %v4070, %v4069
        %v4078 = vpack.c.b16 %v4072, %v4071
        %v4079 = vpack.c.b16 %v4074, %v4073
        %v4080 = vpack.c.b16 %v4076, %v4075
        %v4086 = vsel %vm1964, %v4060, 0
        %4088 = vmatprep.subr.bf16.mxu0 0
        %4089 = vmatpush1.bf16.msra.mxu0 0
        %4090 = vmatprep.subr.bf16.mxu0 0
        %4091 = vmatpush1.bf16.msra.mxu0 0
        %4092 = vmatprep.subr.bf16.mxu0 0
        %4093 = vmatpush1.bf16.msra.mxu0 0
        %4094 = vmatprep.subr.bf16.mxu0 0
        %4095 = vmatpush1.bf16.msra.mxu0 0
        %4096 = vmatprep.subr.bf16.mxu0 0
        %4097 = vmatpush1.bf16.msra.mxu0 %v4080
        %4098 = vmatprep.subr.bf16.mxu0 0
        %4099 = vmatpush1.bf16.msra.mxu0 %v4079
        %4100 = vmatprep.subr.bf16.mxu0 0
        %4101 = vmatpush1.bf16.msra.mxu0 %v4078
        %4102 = vmatprep.subr.bf16.mxu0 0
        %4103 = vmatpush1.bf16.msra.mxu0 %v4077
        %4104 = vmatprep.subr.bf16.mxu0 0
        %4105 = vmatpush2.bf16.msra.mxu0 0
        %4106 = vmatprep.subr.bf16.mxu0 0
        %4107 = vmatpush2.bf16.msra.mxu0 0
        %4108 = vmatprep.subr.bf16.mxu0 0
        %4109 = vmatpush2.bf16.msra.mxu0 0
        %4110 = vmatprep.subr.bf16.mxu0 0
        %4111 = vmatpush2.bf16.msra.mxu0 0
        %4112 = vmatprep.subr.bf16.mxu0 0
        %4113 = vmatpush2.bf16.msra.mxu0 0
        %4114 = vmatprep.subr.bf16.mxu0 0
        %4115 = vmatpush2.bf16.msra.mxu0 0
        %4116 = vmatprep.subr.bf16.mxu0 0
        %4117 = vmatpush2.bf16.msra.mxu0 0
        %4118 = vmatprep.subr.bf16.mxu0 0
        %4119 = vmatpush2.bf16.msra.mxu0 0
        %4120 = vmatprep.mubr.bf16.mxu0 0
        %4121 = vmatmul.mubr.bf16.gmra.mxu0 %v4086
        %v4122 = vpop.f32.mrf.mxu0
        %v4123 = vadd.f32 %v4059, %v4122
        %v4124 = vpop.f32.mrf.mxu0
        %v4125 = vpop.f32.mrf.mxu0
        %v4126 = vpop.f32.mrf.mxu0
        %4127 = vdwg.mxu0
        %v4128 = vsub.f32 0.0, %v4123
        %v4129 = vmul.f32 %v4128, 1.442695
        %v4130 = vpow.pop %v4129
        %v4131 = vadd.f32 %v4130, 1.0
        %v4132 = vrcp.pop %v4131
        %v4133 = vmul.f32 1.0, %v4132
        %vm4134 = vcmask 0
        %4135 = vst.msk [vmem:[%s877] sm:$0x1] %vm4134, %v4133
        %p4136 = scmp.lt.s32.totalorder %s42, 1
        %s4137 = scalar_select %p4136, %s42, 1
        %s4138 = scalar_lea.vmem %s22, %s4137
        // Predicated region
        $region161: #{bert_classification_forward.1} parent=107 // pred_check
          %p4139 = pneg %p532
        $region162: #{bert_classification_forward.1} parent=107 // pred_check_branch
          %4141 = sbr.rel (%p4139) target = $region164
        $region163: #{bert_classification_forward.1} parent=107 // pred_region
          _
        $region164: #{bert_classification_forward.1} parent=107 // pred_fallthru
          _
      $region108: #{bert_classification_forward.1} parent=5 // pred_fallthru
        _
      %p4142 = scmp.le.s32.totalorder 2, %s37
      // Predicated region
      $region165: #{bert_classification_forward.1} parent=5 // pred_check
        %p4143 = pneg %p4142
      $region166: #{bert_classification_forward.1} parent=5 // pred_check_branch
        %4145 = sbr.rel (%p4143) target = $region168
      $region167: #{bert_classification_forward.1} parent=5 // pred_region
        %s4146 = ssub.s32 %s37, 2
        // Predicated region
        $region169: #{bert_classification_forward.1} parent=167 // pred_check
          %p4147 = pneg %p538
        $region170: #{bert_classification_forward.1} parent=167 // pred_check_branch
          %4149 = sbr.rel (%p4147) target = $region172
        $region171: #{bert_classification_forward.1} parent=167 // pred_region
          %p4150 = scmp.lt.s32.totalorder %s43, 1
          %s4151 = scalar_select %p4150, %s43, 1
          %s4152 = scalar_lea.vmem %s22, %s4151
        $region172: #{bert_classification_forward.1} parent=167 // pred_fallthru
          _
      $region168: #{bert_classification_forward.1} parent=5 // pred_fallthru
        _
    $region6: #{bert_classification_forward.1} parent=1 // loop_footer
      %s41 = sadd.s32 1, %s37
    $region7: #{bert_classification_forward.1} parent=1 // loop_footer_branch
      %36 = sbr.rel target = $region3
    $region8: #{bert_classification_forward.1} parent=1 // loop_exit
      _
    %4153 = vsyncpa [#allocation4], 1
    %s4154 = scalar_lea.sflag [#allocation4], 1
    %4155 = vsyncpa %s4154, 1
    %4156 = vsyncpa [#allocation6], 1
    %4157 = vsyncpa [#allocation9], 1
    %4158 = vsyncpa [#allocation12], 1
    %4159 = vsyncpa [#allocation15], 1
    %4160 = vsyncpa [#allocation18], 1
    %4161 = vsyncpa [#allocation21], 1

</llo_original>
